<compile_context>
chip_gen: v7x
topology: tpu7x:2x2x1
jax: 0.10.0
libtpu: 0.0.40
codegen_flags: <defaults>
</compile_context>

<pallas_src>
import functools

import jax
import jax.numpy as jnp
from jax.experimental import pallas as pl
from jax.experimental.pallas import tpu as pltpu

# ----------------------------- model config --------------------------------
HIDDEN = 32          # args.hidden_size
HEADS = 4            # args.num_heads
HEAD_DIM = 8         # args.head_dim
LAYERS = 2           # args.hidden_layers
CODEBOOK = 64        # args.codebook_size
NUM_Q = 2            # args.num_quantizers
MAX_POS = 64         # args.max_position_embeddings
EPS = 1e-6           # args.rms_norm_eps

MATMUL_DTYPE = jnp.bfloat16   # weights / matmul operands; accumulation stays f32


def _rmsnorm(x, w, eps):
    ms = jnp.mean(x * x, axis=-1, keepdims=True)
    return x * jax.lax.rsqrt(ms + eps) * w


# ------------------------- fused forward kernel -----------------------------
def fused_forward_kernel(tok_ref, pos_ref, embed_ref,
                         wqkv_ref, wo_ref, w1_ref, w2_ref,
                         anorm_ref, mnorm_ref, fnorm_ref, lm_ref,
                         tokens_out_ref, hidden_out_ref,
                         *, batch, seq, num_layers, num_heads, head_dim,
                         num_q, codebook, eps):
    f32 = jnp.float32
    bf16 = MATMUL_DTYPE
    B, L = batch, seq
    hd = head_dim
    HD = num_heads * head_dim

    def mm(a, w):
        # Flat [N, K] @ [K, M]: one MXU matmul, bf16 operands, f32 accumulation.
        return jnp.dot(a.astype(w.dtype), w, preferred_element_type=f32)

    # shared iota over the codebook lanes (used by one-hot lookup AND argmax)
    N = B * L
    iota_c = jax.lax.broadcasted_iota(jnp.int32, (N, codebook), 1)        # [N, C]

    # ---- embedding lookup as a one-hot bf16 MXU matmul (0/1 exact in bf16) ----
    ids = tok_ref[...]                                                    # [N, 1] int32
    onehot = jnp.where(ids == iota_c, 1.0, 0.0).astype(embed_ref.dtype)   # [N, C] bf16
    x = mm(onehot, embed_ref[...])                                        # [N, D] f32

    # positional table ADD (as in reference); tile [L, D] over batch (sublane concat)
    pos = pos_ref[...]                                                    # [L, D] f32
    x = x + jnp.concatenate([pos] * B, axis=0)                            # [N, D]

    # ---- transformer blocks (static unroll, LAYERS=2) ----
    for li in range(num_layers):
        wqkv = wqkv_ref[li]                                               # [D, 3*HD]  bf16 (Q cols pre-scaled)
        wo = wo_ref[li]                                                   # [HD, D]    bf16
        w1 = w1_ref[li]                                                   # [D, 4D]    bf16
        w2 = w2_ref[li]                                                   # [4D, D]    bf16
        anorm = anorm_ref[li]                                             # [1, D]     f32
        mnorm = mnorm_ref[li]                                             # [1, D]     f32

        # -- attention --
        h = _rmsnorm(x, anorm, eps)                                       # [N, D] f32
        qkv = mm(h, wqkv)                                                 # [N, 3*HD] f32 (fused QKV)
        q = qkv[:, 0 * HD:1 * HD]
        k = qkv[:, 1 * HD:2 * HD]
        v = qkv[:, 2 * HD:3 * HD]

        ctx_batches = []
        for b in range(B):                       # static; row slices are sublane-tile aligned (L == 8)
            rows = slice(b * L, (b + 1) * L)
            qb = q[rows, :].astype(bf16)                                  # [L, HD]
            kb = k[rows, :].astype(bf16)
            vb = v[rows, :].astype(bf16)
            head_ctx = []
            for hi in range(num_heads):          # static; attention scale folded into wqkv at init
                sl = slice(hi * hd, (hi + 1) * hd)
                s = jnp.einsum('ld,md->lm', qb[:, sl], kb[:, sl],
                               preferred_element_type=f32)                # [L, L] f32
                s = s - jnp.max(s, axis=-1, keepdims=True)
                p = jnp.exp(s)
                p = p * pl.reciprocal(jnp.sum(p, axis=-1, keepdims=True), approx=True)
                head_ctx.append(jnp.einsum('lm,md->ld', p.astype(bf16), vb[:, sl],
                                           preferred_element_type=f32))   # [L, hd]
            ctx_batches.append(jnp.concatenate(head_ctx, axis=-1))        # [L, HD] lane concat
        ctx_all = jnp.concatenate(ctx_batches, axis=0)                    # [N, HD] sublane concat
        x = x + mm(ctx_all, wo)                                           # one Wo matmul + residual

        # -- MLP (SiLU) --
        h2 = _rmsnorm(x, mnorm, eps)
        m = mm(h2, w1)                                                    # [N, 4D] f32
        m = m * jax.nn.sigmoid(m)                                         # SiLU in f32 (VPU/EUP)
        x = x + mm(m, w2)                                                 # residual

    # ---- final norm + lm_head + per-quantizer argmax ----
    h = _rmsnorm(x, fnorm_ref[...], eps)
    hidden_out_ref[...] = h.astype(hidden_out_ref.dtype)

    logits = mm(h, lm_ref[...])                                           # [N, Q*C] f32
    toks = []
    for qi in range(num_q):                                               # static (NUM_Q=2)
        lq = logits[:, qi * codebook:(qi + 1) * codebook]                 # [N, C]
        mx = jnp.max(lq, axis=-1, keepdims=True)
        toks.append(jnp.min(jnp.where(lq == mx, iota_c, codebook),
                            axis=-1, keepdims=True))                      # first-occurrence argmax
    tokens_out_ref[...] = jnp.concatenate(toks, axis=-1).astype(jnp.int32)  # single store


# ------------------------------ parameters ----------------------------------
def make_sinusoid_table(max_seq, hidden):
    inv_freq = 1.0 / (10000.0 ** (jnp.arange(0, hidden, 2, dtype=jnp.float32) / hidden))
    pos = jnp.arange(max_seq, dtype=jnp.float32)
    sincos = jnp.einsum('i,j->ij', pos, inv_freq)
    return jnp.concatenate([jnp.sin(sincos), jnp.cos(sincos)], axis=-1)   # [max, hidden]


def init_params(key):
    keys = jax.random.split(key, 2 + LAYERS * 6)
    ki = iter(keys)
    scale = HEAD_DIM ** (-0.5)

    def lin(k, i, o):
        return jax.random.normal(k, (i, o), jnp.float32) * 0.02           # [in, out] (pre-transposed)

    embed = jax.random.normal(next(ki), (CODEBOOK, HIDDEN), jnp.float32) * 0.02
    lm_head = lin(next(ki), HIDDEN, CODEBOOK * NUM_Q)

    wqkv, wo, w1, w2, an, mn = [], [], [], [], [], []
    for _ in range(LAYERS):
        wq = lin(next(ki), HIDDEN, HEADS * HEAD_DIM) * scale               # fold attention scale into Q
        wk = lin(next(ki), HIDDEN, HEADS * HEAD_DIM)
        wv = lin(next(ki), HIDDEN, HEADS * HEAD_DIM)
        wqkv.append(jnp.concatenate([wq, wk, wv], axis=1))                 # fused QKV [D, 3*HD]
        wo.append(lin(next(ki), HEADS * HEAD_DIM, HIDDEN))
        w1.append(lin(next(ki), HIDDEN, 4 * HIDDEN))
        w2.append(lin(next(ki), 4 * HIDDEN, HIDDEN))
        an.append(jnp.ones((1, HIDDEN), jnp.float32))
        mn.append(jnp.ones((1, HIDDEN), jnp.float32))

    return {
        'embed': embed.astype(MATMUL_DTYPE),             # bf16: one-hot lookup stays exact (0/1)
        'pos': make_sinusoid_table(MAX_POS, HIDDEN),     # [MAX_POS, D] f32
        'wqkv': jnp.stack(wqkv).astype(MATMUL_DTYPE),    # [LAYERS, D, 3*HD]
        'wo': jnp.stack(wo).astype(MATMUL_DTYPE),        # [LAYERS, HD, D]
        'w1': jnp.stack(w1).astype(MATMUL_DTYPE),        # [LAYERS, D, 4D]
        'w2': jnp.stack(w2).astype(MATMUL_DTYPE),        # [LAYERS, 4D, D]
        'attn_norm': jnp.stack(an),                      # [LAYERS, 1, D] f32
        'mlp_norm': jnp.stack(mn),                       # [LAYERS, 1, D] f32
        'final_norm': jnp.ones((1, HIDDEN), jnp.float32),
        'lm_head': lm_head.astype(MATMUL_DTYPE),         # [D, Q*C]
    }


# ------------------------------ full forward --------------------------------
def streaming_transformer_forward(tokens, params):
    # shape normalization exactly as in the PyTorch module
    if tokens.ndim == 3:
        tokens = tokens[0]
    elif tokens.ndim == 1:
        tokens = tokens[None]
    B, L = tokens.shape
    assert L <= MAX_POS, "sequence length exceeds max_position_embeddings"
    D = HIDDEN
    N = B * L

    kern = functools.partial(
        fused_forward_kernel, batch=B, seq=L, num_layers=LAYERS,
        num_heads=HEADS, head_dim=HEAD_DIM, num_q=NUM_Q,
        codebook=CODEBOOK, eps=EPS)

    inputs = (tokens.reshape(N, 1).astype(jnp.int32),    # [N, 1] flat token ids
              params['pos'][:L],                         # only the rows actually used
              params['embed'],
              params['wqkv'], params['wo'], params['w1'], params['w2'],
              params['attn_norm'], params['mlp_norm'],
              params['final_norm'], params['lm_head'])

    tokens_flat, hidden_flat = pl.pallas_call(
        kern,
        out_shape=(jax.ShapeDtypeStruct((N, NUM_Q), jnp.int32),
                   jax.ShapeDtypeStruct((N, D), jnp.float32)),
        # single invocation (no grid): whole model + activations live in VMEM
        in_specs=[pl.BlockSpec(memory_space=pltpu.MemorySpace.VMEM) for _ in inputs],
        out_specs=(pl.BlockSpec(memory_space=pltpu.MemorySpace.VMEM),
                   pl.BlockSpec(memory_space=pltpu.MemorySpace.VMEM)),
    )(*inputs)
    return tokens_flat.reshape(B, L, NUM_Q), hidden_flat.reshape(B, L, D)
    # TODO(synk): streaming path (forward_streaming: python deque KV-cache /
    # position state) is stateful host-side bookkeeping, not expressed here.


# --------------------------------- main --------------------------------------
if __name__ == "__main__":
    key = jax.random.PRNGKey(0)
    pkey, tkey = jax.random.split(key)
    params = init_params(pkey)

    B, L = 2, 8
    tokens_in = jax.random.randint(tkey, (B, L), 0, CODEBOOK, dtype=jnp.int32)

    fwd = jax.jit(streaming_transformer_forward)
    toks, hidden = fwd(tokens_in, params)
    jax.block_until_ready((toks, hidden))

    assert toks.shape == (B, L, NUM_Q)
    assert toks.dtype == jnp.int32
    assert hidden.shape == (B, L, HIDDEN)
    print("KERNEL_OK")
</pallas_src>

<mosaic_0001>
module attributes {stable_mosaic.version = 11 : i64} {
  func.func @fused_forward_kernel(%arg0: memref<16x1xi32, #tpu.memory_space<vmem>>, %arg1: memref<8x32xf32, #tpu.memory_space<vmem>>, %arg2: memref<64x32xbf16, #tpu.memory_space<vmem>>, %arg3: memref<2x32x96xbf16, #tpu.memory_space<vmem>>, %arg4: memref<2x32x32xbf16, #tpu.memory_space<vmem>>, %arg5: memref<2x32x128xbf16, #tpu.memory_space<vmem>>, %arg6: memref<2x128x32xbf16, #tpu.memory_space<vmem>>, %arg7: memref<2x1x32xf32, #tpu.memory_space<vmem>>, %arg8: memref<2x1x32xf32, #tpu.memory_space<vmem>>, %arg9: memref<1x32xf32, #tpu.memory_space<vmem>>, %arg10: memref<32x128xbf16, #tpu.memory_space<vmem>>, %arg11: memref<16x2xi32, #tpu.memory_space<vmem>>, %arg12: memref<16x32xf32, #tpu.memory_space<vmem>>) attributes {dimension_semantics = [], scalar_prefetch = 0 : i64, scratch_operands = 0 : i64, tpu.core_type = #tpu.core_type<tc>} {
    %0 = tpu.iota {dimensions = array<i32: 1>} : vector<16x64xi32>
    %c0 = arith.constant 0 : index
    %c0_0 = arith.constant 0 : index
    %1 = vector.load %arg0[%c0, %c0_0] : memref<16x1xi32, #tpu.memory_space<vmem>>, vector<16x1xi32>
    %2 = vector.broadcast %1 : vector<16x1xi32> to vector<16x64xi32>
    %3 = arith.cmpi eq, %2, %0 : vector<16x64xi32>
    %cst = arith.constant 1.000000e+00 : f32
    %cst_1 = arith.constant 0.000000e+00 : f32
    %4 = vector.broadcast %cst : f32 to vector<16x64xf32>
    %5 = vector.broadcast %cst_1 : f32 to vector<16x64xf32>
    %6 = arith.select %3, %4, %5 : vector<16x64xi1>, vector<16x64xf32>
    %7 = arith.truncf %6 : vector<16x64xf32> to vector<16x64xbf16>
    %c0_2 = arith.constant 0 : index
    %c0_3 = arith.constant 0 : index
    %8 = vector.load %arg2[%c0_2, %c0_3] : memref<64x32xbf16, #tpu.memory_space<vmem>>, vector<64x32xbf16>
    %cst_4 = arith.constant dense<0.000000e+00> : vector<16x32xf32>
    %9 = tpu.matmul %7, %8, %cst_4 {dimension_numbers = #tpu.dot_dimension_numbers<[1], [0], [0], [1], [0, 0, 1, 1], [], []>} : vector<16x64xbf16>, vector<64x32xbf16>, vector<16x32xf32> -> vector<16x32xf32>
    %c0_5 = arith.constant 0 : index
    %c0_6 = arith.constant 0 : index
    %10 = vector.load %arg1[%c0_5, %c0_6] : memref<8x32xf32, #tpu.memory_space<vmem>>, vector<8x32xf32>
    %11 = tpu.concatenate %10, %10 in 0 : vector<8x32xf32>, vector<8x32xf32> -> vector<16x32xf32>
    %12 = arith.addf %9, %11 : vector<16x32xf32>
    %c0_7 = arith.constant 0 : index
    %c0_8 = arith.constant 0 : index
    %c0_9 = arith.constant 0 : index
    %13 = vector.load %arg3[%c0_7, %c0_8, %c0_9] : memref<2x32x96xbf16, #tpu.memory_space<vmem>>, vector<1x32x96xbf16>
    %14 = vector.shape_cast %13 : vector<1x32x96xbf16> to vector<32x96xbf16>
    %c0_10 = arith.constant 0 : index
    %c0_11 = arith.constant 0 : index
    %c0_12 = arith.constant 0 : index
    %15 = vector.load %arg4[%c0_10, %c0_11, %c0_12] : memref<2x32x32xbf16, #tpu.memory_space<vmem>>, vector<1x32x32xbf16>
    %16 = vector.shape_cast %15 : vector<1x32x32xbf16> to vector<32x32xbf16>
    %c0_13 = arith.constant 0 : index
    %c0_14 = arith.constant 0 : index
    %c0_15 = arith.constant 0 : index
    %17 = vector.load %arg5[%c0_13, %c0_14, %c0_15] : memref<2x32x128xbf16, #tpu.memory_space<vmem>>, vector<1x32x128xbf16>
    %18 = vector.shape_cast %17 : vector<1x32x128xbf16> to vector<32x128xbf16>
    %c0_16 = arith.constant 0 : index
    %c0_17 = arith.constant 0 : index
    %c0_18 = arith.constant 0 : index
    %19 = vector.load %arg6[%c0_16, %c0_17, %c0_18] : memref<2x128x32xbf16, #tpu.memory_space<vmem>>, vector<1x128x32xbf16>
    %20 = vector.shape_cast %19 : vector<1x128x32xbf16> to vector<128x32xbf16>
    %c0_19 = arith.constant 0 : index
    %c0_20 = arith.constant 0 : index
    %c0_21 = arith.constant 0 : index
    %21 = vector.load %arg7[%c0_19, %c0_20, %c0_21] : memref<2x1x32xf32, #tpu.memory_space<vmem>>, vector<1x1x32xf32>
    %22 = vector.shape_cast %21 : vector<1x1x32xf32> to vector<1x32xf32>
    %c0_22 = arith.constant 0 : index
    %c0_23 = arith.constant 0 : index
    %c0_24 = arith.constant 0 : index
    %23 = vector.load %arg8[%c0_22, %c0_23, %c0_24] : memref<2x1x32xf32, #tpu.memory_space<vmem>>, vector<1x1x32xf32>
    %24 = vector.shape_cast %23 : vector<1x1x32xf32> to vector<1x32xf32>
    %25 = arith.mulf %12, %12 : vector<16x32xf32>
    %cst_25 = arith.constant dense<0.000000e+00> : vector<16xf32>
    %26 = vector.multi_reduction <add>, %25, %cst_25 [1] : vector<16x32xf32> to vector<16xf32>
    %27 = vector.shape_cast %26 : vector<16xf32> to vector<16x1xf32>
    %cst_26 = arith.constant 3.200000e+01 : f32
    %28 = vector.broadcast %cst_26 : f32 to vector<16x1xf32>
    %29 = arith.divf %27, %28 : vector<16x1xf32>
    %cst_27 = arith.constant 9.99999997E-7 : f32
    %30 = vector.broadcast %cst_27 : f32 to vector<16x1xf32>
    %31 = arith.addf %29, %30 : vector<16x1xf32>
    %32 = math.rsqrt %31 : vector<16x1xf32>
    %33 = vector.broadcast %32 : vector<16x1xf32> to vector<16x32xf32>
    %34 = arith.mulf %12, %33 : vector<16x32xf32>
    %35 = vector.broadcast %22 : vector<1x32xf32> to vector<16x32xf32>
    %36 = arith.mulf %34, %35 : vector<16x32xf32>
    %37 = arith.truncf %36 : vector<16x32xf32> to vector<16x32xbf16>
    %cst_28 = arith.constant dense<0.000000e+00> : vector<16x96xf32>
    %38 = tpu.matmul %37, %14, %cst_28 {dimension_numbers = #tpu.dot_dimension_numbers<[1], [0], [0], [1], [0, 0, 1, 1], [], []>} : vector<16x32xbf16>, vector<32x96xbf16>, vector<16x96xf32> -> vector<16x96xf32>
    %39 = vector.extract_strided_slice %38 {offsets = [0, 0], sizes = [16, 32], strides = [1, 1]} : vector<16x96xf32> to vector<16x32xf32>
    %40 = vector.extract_strided_slice %38 {offsets = [0, 32], sizes = [16, 32], strides = [1, 1]} : vector<16x96xf32> to vector<16x32xf32>
    %41 = vector.extract_strided_slice %38 {offsets = [0, 64], sizes = [16, 32], strides = [1, 1]} : vector<16x96xf32> to vector<16x32xf32>
    %42 = vector.extract_strided_slice %39 {offsets = [0, 0], sizes = [8, 32], strides = [1, 1]} : vector<16x32xf32> to vector<8x32xf32>
    %43 = arith.truncf %42 : vector<8x32xf32> to vector<8x32xbf16>
    %44 = vector.extract_strided_slice %40 {offsets = [0, 0], sizes = [8, 32], strides = [1, 1]} : vector<16x32xf32> to vector<8x32xf32>
    %45 = arith.truncf %44 : vector<8x32xf32> to vector<8x32xbf16>
    %46 = vector.extract_strided_slice %41 {offsets = [0, 0], sizes = [8, 32], strides = [1, 1]} : vector<16x32xf32> to vector<8x32xf32>
    %47 = arith.truncf %46 : vector<8x32xf32> to vector<8x32xbf16>
    %48 = vector.extract_strided_slice %43 {offsets = [0, 0], sizes = [8, 8], strides = [1, 1]} : vector<8x32xbf16> to vector<8x8xbf16>
    %49 = vector.extract_strided_slice %45 {offsets = [0, 0], sizes = [8, 8], strides = [1, 1]} : vector<8x32xbf16> to vector<8x8xbf16>
    "tpu.trace_start"() <{level = 10 : i32, message = "ld,md->lm"}> : () -> ()
    %cst_29 = arith.constant dense<0.000000e+00> : vector<8x8xf32>
    %50 = tpu.matmul %48, %49, %cst_29 {dimension_numbers = #tpu.dot_dimension_numbers<[1], [1], [0], [0], [0, 0, 1, 0], [], []>} : vector<8x8xbf16>, vector<8x8xbf16>, vector<8x8xf32> -> vector<8x8xf32>
    "tpu.trace_stop"() : () -> ()
    %cst_30 = arith.constant dense<0xFF800000> : vector<8xf32>
    %51 = vector.multi_reduction <maximumf>, %50, %cst_30 [1] : vector<8x8xf32> to vector<8xf32>
    %52 = vector.shape_cast %51 : vector<8xf32> to vector<8x1xf32>
    %53 = vector.broadcast %52 : vector<8x1xf32> to vector<8x8xf32>
    %54 = arith.subf %50, %53 : vector<8x8xf32>
    %55 = math.exp %54 : vector<8x8xf32>
    %cst_31 = arith.constant dense<0.000000e+00> : vector<8xf32>
    %56 = vector.multi_reduction <add>, %55, %cst_31 [1] : vector<8x8xf32> to vector<8xf32>
    %57 = vector.shape_cast %56 : vector<8xf32> to vector<8x1xf32>
    %58 = tpu.reciprocal %57 {approx = true} : vector<8x1xf32> -> vector<8x1xf32>
    %59 = vector.broadcast %58 : vector<8x1xf32> to vector<8x8xf32>
    %60 = arith.mulf %55, %59 : vector<8x8xf32>
    %61 = arith.truncf %60 : vector<8x8xf32> to vector<8x8xbf16>
    %62 = vector.extract_strided_slice %47 {offsets = [0, 0], sizes = [8, 8], strides = [1, 1]} : vector<8x32xbf16> to vector<8x8xbf16>
    "tpu.trace_start"() <{level = 10 : i32, message = "lm,md->ld"}> : () -> ()
    %cst_32 = arith.constant dense<0.000000e+00> : vector<8x8xf32>
    %63 = tpu.matmul %61, %62, %cst_32 {dimension_numbers = #tpu.dot_dimension_numbers<[1], [0], [0], [1], [0, 0, 1, 1], [], []>} : vector<8x8xbf16>, vector<8x8xbf16>, vector<8x8xf32> -> vector<8x8xf32>
    "tpu.trace_stop"() : () -> ()
    %64 = vector.extract_strided_slice %43 {offsets = [0, 8], sizes = [8, 8], strides = [1, 1]} : vector<8x32xbf16> to vector<8x8xbf16>
    %65 = vector.extract_strided_slice %45 {offsets = [0, 8], sizes = [8, 8], strides = [1, 1]} : vector<8x32xbf16> to vector<8x8xbf16>
    "tpu.trace_start"() <{level = 10 : i32, message = "ld,md->lm"}> : () -> ()
    %cst_33 = arith.constant dense<0.000000e+00> : vector<8x8xf32>
    %66 = tpu.matmul %64, %65, %cst_33 {dimension_numbers = #tpu.dot_dimension_numbers<[1], [1], [0], [0], [0, 0, 1, 0], [], []>} : vector<8x8xbf16>, vector<8x8xbf16>, vector<8x8xf32> -> vector<8x8xf32>
    "tpu.trace_stop"() : () -> ()
    %cst_34 = arith.constant dense<0xFF800000> : vector<8xf32>
    %67 = vector.multi_reduction <maximumf>, %66, %cst_34 [1] : vector<8x8xf32> to vector<8xf32>
    %68 = vector.shape_cast %67 : vector<8xf32> to vector<8x1xf32>
    %69 = vector.broadcast %68 : vector<8x1xf32> to vector<8x8xf32>
    %70 = arith.subf %66, %69 : vector<8x8xf32>
    %71 = math.exp %70 : vector<8x8xf32>
    %cst_35 = arith.constant dense<0.000000e+00> : vector<8xf32>
    %72 = vector.multi_reduction <add>, %71, %cst_35 [1] : vector<8x8xf32> to vector<8xf32>
    %73 = vector.shape_cast %72 : vector<8xf32> to vector<8x1xf32>
    %74 = tpu.reciprocal %73 {approx = true} : vector<8x1xf32> -> vector<8x1xf32>
    %75 = vector.broadcast %74 : vector<8x1xf32> to vector<8x8xf32>
    %76 = arith.mulf %71, %75 : vector<8x8xf32>
    %77 = arith.truncf %76 : vector<8x8xf32> to vector<8x8xbf16>
    %78 = vector.extract_strided_slice %47 {offsets = [0, 8], sizes = [8, 8], strides = [1, 1]} : vector<8x32xbf16> to vector<8x8xbf16>
    "tpu.trace_start"() <{level = 10 : i32, message = "lm,md->ld"}> : () -> ()
    %cst_36 = arith.constant dense<0.000000e+00> : vector<8x8xf32>
    %79 = tpu.matmul %77, %78, %cst_36 {dimension_numbers = #tpu.dot_dimension_numbers<[1], [0], [0], [1], [0, 0, 1, 1], [], []>} : vector<8x8xbf16>, vector<8x8xbf16>, vector<8x8xf32> -> vector<8x8xf32>
    "tpu.trace_stop"() : () -> ()
    %80 = vector.extract_strided_slice %43 {offsets = [0, 16], sizes = [8, 8], strides = [1, 1]} : vector<8x32xbf16> to vector<8x8xbf16>
    %81 = vector.extract_strided_slice %45 {offsets = [0, 16], sizes = [8, 8], strides = [1, 1]} : vector<8x32xbf16> to vector<8x8xbf16>
    "tpu.trace_start"() <{level = 10 : i32, message = "ld,md->lm"}> : () -> ()
    %cst_37 = arith.constant dense<0.000000e+00> : vector<8x8xf32>
    %82 = tpu.matmul %80, %81, %cst_37 {dimension_numbers = #tpu.dot_dimension_numbers<[1], [1], [0], [0], [0, 0, 1, 0], [], []>} : vector<8x8xbf16>, vector<8x8xbf16>, vector<8x8xf32> -> vector<8x8xf32>
    "tpu.trace_stop"() : () -> ()
    %cst_38 = arith.constant dense<0xFF800000> : vector<8xf32>
    %83 = vector.multi_reduction <maximumf>, %82, %cst_38 [1] : vector<8x8xf32> to vector<8xf32>
    %84 = vector.shape_cast %83 : vector<8xf32> to vector<8x1xf32>
    %85 = vector.broadcast %84 : vector<8x1xf32> to vector<8x8xf32>
    %86 = arith.subf %82, %85 : vector<8x8xf32>
    %87 = math.exp %86 : vector<8x8xf32>
    %cst_39 = arith.constant dense<0.000000e+00> : vector<8xf32>
    %88 = vector.multi_reduction <add>, %87, %cst_39 [1] : vector<8x8xf32> to vector<8xf32>
    %89 = vector.shape_cast %88 : vector<8xf32> to vector<8x1xf32>
    %90 = tpu.reciprocal %89 {approx = true} : vector<8x1xf32> -> vector<8x1xf32>
    %91 = vector.broadcast %90 : vector<8x1xf32> to vector<8x8xf32>
    %92 = arith.mulf %87, %91 : vector<8x8xf32>
    %93 = arith.truncf %92 : vector<8x8xf32> to vector<8x8xbf16>
    %94 = vector.extract_strided_slice %47 {offsets = [0, 16], sizes = [8, 8], strides = [1, 1]} : vector<8x32xbf16> to vector<8x8xbf16>
    "tpu.trace_start"() <{level = 10 : i32, message = "lm,md->ld"}> : () -> ()
    %cst_40 = arith.constant dense<0.000000e+00> : vector<8x8xf32>
    %95 = tpu.matmul %93, %94, %cst_40 {dimension_numbers = #tpu.dot_dimension_numbers<[1], [0], [0], [1], [0, 0, 1, 1], [], []>} : vector<8x8xbf16>, vector<8x8xbf16>, vector<8x8xf32> -> vector<8x8xf32>
    "tpu.trace_stop"() : () -> ()
    %96 = vector.extract_strided_slice %43 {offsets = [0, 24], sizes = [8, 8], strides = [1, 1]} : vector<8x32xbf16> to vector<8x8xbf16>
    %97 = vector.extract_strided_slice %45 {offsets = [0, 24], sizes = [8, 8], strides = [1, 1]} : vector<8x32xbf16> to vector<8x8xbf16>
    "tpu.trace_start"() <{level = 10 : i32, message = "ld,md->lm"}> : () -> ()
    %cst_41 = arith.constant dense<0.000000e+00> : vector<8x8xf32>
    %98 = tpu.matmul %96, %97, %cst_41 {dimension_numbers = #tpu.dot_dimension_numbers<[1], [1], [0], [0], [0, 0, 1, 0], [], []>} : vector<8x8xbf16>, vector<8x8xbf16>, vector<8x8xf32> -> vector<8x8xf32>
    "tpu.trace_stop"() : () -> ()
    %cst_42 = arith.constant dense<0xFF800000> : vector<8xf32>
    %99 = vector.multi_reduction <maximumf>, %98, %cst_42 [1] : vector<8x8xf32> to vector<8xf32>
    %100 = vector.shape_cast %99 : vector<8xf32> to vector<8x1xf32>
    %101 = vector.broadcast %100 : vector<8x1xf32> to vector<8x8xf32>
    %102 = arith.subf %98, %101 : vector<8x8xf32>
    %103 = math.exp %102 : vector<8x8xf32>
    %cst_43 = arith.constant dense<0.000000e+00> : vector<8xf32>
    %104 = vector.multi_reduction <add>, %103, %cst_43 [1] : vector<8x8xf32> to vector<8xf32>
    %105 = vector.shape_cast %104 : vector<8xf32> to vector<8x1xf32>
    %106 = tpu.reciprocal %105 {approx = true} : vector<8x1xf32> -> vector<8x1xf32>
    %107 = vector.broadcast %106 : vector<8x1xf32> to vector<8x8xf32>
    %108 = arith.mulf %103, %107 : vector<8x8xf32>
    %109 = arith.truncf %108 : vector<8x8xf32> to vector<8x8xbf16>
    %110 = vector.extract_strided_slice %47 {offsets = [0, 24], sizes = [8, 8], strides = [1, 1]} : vector<8x32xbf16> to vector<8x8xbf16>
    "tpu.trace_start"() <{level = 10 : i32, message = "lm,md->ld"}> : () -> ()
    %cst_44 = arith.constant dense<0.000000e+00> : vector<8x8xf32>
    %111 = tpu.matmul %109, %110, %cst_44 {dimension_numbers = #tpu.dot_dimension_numbers<[1], [0], [0], [1], [0, 0, 1, 1], [], []>} : vector<8x8xbf16>, vector<8x8xbf16>, vector<8x8xf32> -> vector<8x8xf32>
    "tpu.trace_stop"() : () -> ()
    %112 = tpu.concatenate %63, %79, %95, %111 in 1 : vector<8x8xf32>, vector<8x8xf32>, vector<8x8xf32>, vector<8x8xf32> -> vector<8x32xf32>
    %113 = vector.extract_strided_slice %39 {offsets = [8, 0], sizes = [8, 32], strides = [1, 1]} : vector<16x32xf32> to vector<8x32xf32>
    %114 = arith.truncf %113 : vector<8x32xf32> to vector<8x32xbf16>
    %115 = vector.extract_strided_slice %40 {offsets = [8, 0], sizes = [8, 32], strides = [1, 1]} : vector<16x32xf32> to vector<8x32xf32>
    %116 = arith.truncf %115 : vector<8x32xf32> to vector<8x32xbf16>
    %117 = vector.extract_strided_slice %41 {offsets = [8, 0], sizes = [8, 32], strides = [1, 1]} : vector<16x32xf32> to vector<8x32xf32>
    %118 = arith.truncf %117 : vector<8x32xf32> to vector<8x32xbf16>
    %119 = vector.extract_strided_slice %114 {offsets = [0, 0], sizes = [8, 8], strides = [1, 1]} : vector<8x32xbf16> to vector<8x8xbf16>
    %120 = vector.extract_strided_slice %116 {offsets = [0, 0], sizes = [8, 8], strides = [1, 1]} : vector<8x32xbf16> to vector<8x8xbf16>
    "tpu.trace_start"() <{level = 10 : i32, message = "ld,md->lm"}> : () -> ()
    %cst_45 = arith.constant dense<0.000000e+00> : vector<8x8xf32>
    %121 = tpu.matmul %119, %120, %cst_45 {dimension_numbers = #tpu.dot_dimension_numbers<[1], [1], [0], [0], [0, 0, 1, 0], [], []>} : vector<8x8xbf16>, vector<8x8xbf16>, vector<8x8xf32> -> vector<8x8xf32>
    "tpu.trace_stop"() : () -> ()
    %cst_46 = arith.constant dense<0xFF800000> : vector<8xf32>
    %122 = vector.multi_reduction <maximumf>, %121, %cst_46 [1] : vector<8x8xf32> to vector<8xf32>
    %123 = vector.shape_cast %122 : vector<8xf32> to vector<8x1xf32>
    %124 = vector.broadcast %123 : vector<8x1xf32> to vector<8x8xf32>
    %125 = arith.subf %121, %124 : vector<8x8xf32>
    %126 = math.exp %125 : vector<8x8xf32>
    %cst_47 = arith.constant dense<0.000000e+00> : vector<8xf32>
    %127 = vector.multi_reduction <add>, %126, %cst_47 [1] : vector<8x8xf32> to vector<8xf32>
    %128 = vector.shape_cast %127 : vector<8xf32> to vector<8x1xf32>
    %129 = tpu.reciprocal %128 {approx = true} : vector<8x1xf32> -> vector<8x1xf32>
    %130 = vector.broadcast %129 : vector<8x1xf32> to vector<8x8xf32>
    %131 = arith.mulf %126, %130 : vector<8x8xf32>
    %132 = arith.truncf %131 : vector<8x8xf32> to vector<8x8xbf16>
    %133 = vector.extract_strided_slice %118 {offsets = [0, 0], sizes = [8, 8], strides = [1, 1]} : vector<8x32xbf16> to vector<8x8xbf16>
    "tpu.trace_start"() <{level = 10 : i32, message = "lm,md->ld"}> : () -> ()
    %cst_48 = arith.constant dense<0.000000e+00> : vector<8x8xf32>
    %134 = tpu.matmul %132, %133, %cst_48 {dimension_numbers = #tpu.dot_dimension_numbers<[1], [0], [0], [1], [0, 0, 1, 1], [], []>} : vector<8x8xbf16>, vector<8x8xbf16>, vector<8x8xf32> -> vector<8x8xf32>
    "tpu.trace_stop"() : () -> ()
    %135 = vector.extract_strided_slice %114 {offsets = [0, 8], sizes = [8, 8], strides = [1, 1]} : vector<8x32xbf16> to vector<8x8xbf16>
    %136 = vector.extract_strided_slice %116 {offsets = [0, 8], sizes = [8, 8], strides = [1, 1]} : vector<8x32xbf16> to vector<8x8xbf16>
    "tpu.trace_start"() <{level = 10 : i32, message = "ld,md->lm"}> : () -> ()
    %cst_49 = arith.constant dense<0.000000e+00> : vector<8x8xf32>
    %137 = tpu.matmul %135, %136, %cst_49 {dimension_numbers = #tpu.dot_dimension_numbers<[1], [1], [0], [0], [0, 0, 1, 0], [], []>} : vector<8x8xbf16>, vector<8x8xbf16>, vector<8x8xf32> -> vector<8x8xf32>
    "tpu.trace_stop"() : () -> ()
    %cst_50 = arith.constant dense<0xFF800000> : vector<8xf32>
    %138 = vector.multi_reduction <maximumf>, %137, %cst_50 [1] : vector<8x8xf32> to vector<8xf32>
    %139 = vector.shape_cast %138 : vector<8xf32> to vector<8x1xf32>
    %140 = vector.broadcast %139 : vector<8x1xf32> to vector<8x8xf32>
    %141 = arith.subf %137, %140 : vector<8x8xf32>
    %142 = math.exp %141 : vector<8x8xf32>
    %cst_51 = arith.constant dense<0.000000e+00> : vector<8xf32>
    %143 = vector.multi_reduction <add>, %142, %cst_51 [1] : vector<8x8xf32> to vector<8xf32>
    %144 = vector.shape_cast %143 : vector<8xf32> to vector<8x1xf32>
    %145 = tpu.reciprocal %144 {approx = true} : vector<8x1xf32> -> vector<8x1xf32>
    %146 = vector.broadcast %145 : vector<8x1xf32> to vector<8x8xf32>
    %147 = arith.mulf %142, %146 : vector<8x8xf32>
    %148 = arith.truncf %147 : vector<8x8xf32> to vector<8x8xbf16>
    %149 = vector.extract_strided_slice %118 {offsets = [0, 8], sizes = [8, 8], strides = [1, 1]} : vector<8x32xbf16> to vector<8x8xbf16>
    "tpu.trace_start"() <{level = 10 : i32, message = "lm,md->ld"}> : () -> ()
    %cst_52 = arith.constant dense<0.000000e+00> : vector<8x8xf32>
    %150 = tpu.matmul %148, %149, %cst_52 {dimension_numbers = #tpu.dot_dimension_numbers<[1], [0], [0], [1], [0, 0, 1, 1], [], []>} : vector<8x8xbf16>, vector<8x8xbf16>, vector<8x8xf32> -> vector<8x8xf32>
    "tpu.trace_stop"() : () -> ()
    %151 = vector.extract_strided_slice %114 {offsets = [0, 16], sizes = [8, 8], strides = [1, 1]} : vector<8x32xbf16> to vector<8x8xbf16>
    %152 = vector.extract_strided_slice %116 {offsets = [0, 16], sizes = [8, 8], strides = [1, 1]} : vector<8x32xbf16> to vector<8x8xbf16>
    "tpu.trace_start"() <{level = 10 : i32, message = "ld,md->lm"}> : () -> ()
    %cst_53 = arith.constant dense<0.000000e+00> : vector<8x8xf32>
    %153 = tpu.matmul %151, %152, %cst_53 {dimension_numbers = #tpu.dot_dimension_numbers<[1], [1], [0], [0], [0, 0, 1, 0], [], []>} : vector<8x8xbf16>, vector<8x8xbf16>, vector<8x8xf32> -> vector<8x8xf32>
    "tpu.trace_stop"() : () -> ()
    %cst_54 = arith.constant dense<0xFF800000> : vector<8xf32>
    %154 = vector.multi_reduction <maximumf>, %153, %cst_54 [1] : vector<8x8xf32> to vector<8xf32>
    %155 = vector.shape_cast %154 : vector<8xf32> to vector<8x1xf32>
    %156 = vector.broadcast %155 : vector<8x1xf32> to vector<8x8xf32>
    %157 = arith.subf %153, %156 : vector<8x8xf32>
    %158 = math.exp %157 : vector<8x8xf32>
    %cst_55 = arith.constant dense<0.000000e+00> : vector<8xf32>
    %159 = vector.multi_reduction <add>, %158, %cst_55 [1] : vector<8x8xf32> to vector<8xf32>
    %160 = vector.shape_cast %159 : vector<8xf32> to vector<8x1xf32>
    %161 = tpu.reciprocal %160 {approx = true} : vector<8x1xf32> -> vector<8x1xf32>
    %162 = vector.broadcast %161 : vector<8x1xf32> to vector<8x8xf32>
    %163 = arith.mulf %158, %162 : vector<8x8xf32>
    %164 = arith.truncf %163 : vector<8x8xf32> to vector<8x8xbf16>
    %165 = vector.extract_strided_slice %118 {offsets = [0, 16], sizes = [8, 8], strides = [1, 1]} : vector<8x32xbf16> to vector<8x8xbf16>
    "tpu.trace_start"() <{level = 10 : i32, message = "lm,md->ld"}> : () -> ()
    %cst_56 = arith.constant dense<0.000000e+00> : vector<8x8xf32>
    %166 = tpu.matmul %164, %165, %cst_56 {dimension_numbers = #tpu.dot_dimension_numbers<[1], [0], [0], [1], [0, 0, 1, 1], [], []>} : vector<8x8xbf16>, vector<8x8xbf16>, vector<8x8xf32> -> vector<8x8xf32>
    "tpu.trace_stop"() : () -> ()
    %167 = vector.extract_strided_slice %114 {offsets = [0, 24], sizes = [8, 8], strides = [1, 1]} : vector<8x32xbf16> to vector<8x8xbf16>
    %168 = vector.extract_strided_slice %116 {offsets = [0, 24], sizes = [8, 8], strides = [1, 1]} : vector<8x32xbf16> to vector<8x8xbf16>
    "tpu.trace_start"() <{level = 10 : i32, message = "ld,md->lm"}> : () -> ()
    %cst_57 = arith.constant dense<0.000000e+00> : vector<8x8xf32>
    %169 = tpu.matmul %167, %168, %cst_57 {dimension_numbers = #tpu.dot_dimension_numbers<[1], [1], [0], [0], [0, 0, 1, 0], [], []>} : vector<8x8xbf16>, vector<8x8xbf16>, vector<8x8xf32> -> vector<8x8xf32>
    "tpu.trace_stop"() : () -> ()
    %cst_58 = arith.constant dense<0xFF800000> : vector<8xf32>
    %170 = vector.multi_reduction <maximumf>, %169, %cst_58 [1] : vector<8x8xf32> to vector<8xf32>
    %171 = vector.shape_cast %170 : vector<8xf32> to vector<8x1xf32>
    %172 = vector.broadcast %171 : vector<8x1xf32> to vector<8x8xf32>
    %173 = arith.subf %169, %172 : vector<8x8xf32>
    %174 = math.exp %173 : vector<8x8xf32>
    %cst_59 = arith.constant dense<0.000000e+00> : vector<8xf32>
    %175 = vector.multi_reduction <add>, %174, %cst_59 [1] : vector<8x8xf32> to vector<8xf32>
    %176 = vector.shape_cast %175 : vector<8xf32> to vector<8x1xf32>
    %177 = tpu.reciprocal %176 {approx = true} : vector<8x1xf32> -> vector<8x1xf32>
    %178 = vector.broadcast %177 : vector<8x1xf32> to vector<8x8xf32>
    %179 = arith.mulf %174, %178 : vector<8x8xf32>
    %180 = arith.truncf %179 : vector<8x8xf32> to vector<8x8xbf16>
    %181 = vector.extract_strided_slice %118 {offsets = [0, 24], sizes = [8, 8], strides = [1, 1]} : vector<8x32xbf16> to vector<8x8xbf16>
    "tpu.trace_start"() <{level = 10 : i32, message = "lm,md->ld"}> : () -> ()
    %cst_60 = arith.constant dense<0.000000e+00> : vector<8x8xf32>
    %182 = tpu.matmul %180, %181, %cst_60 {dimension_numbers = #tpu.dot_dimension_numbers<[1], [0], [0], [1], [0, 0, 1, 1], [], []>} : vector<8x8xbf16>, vector<8x8xbf16>, vector<8x8xf32> -> vector<8x8xf32>
    "tpu.trace_stop"() : () -> ()
    %183 = tpu.concatenate %134, %150, %166, %182 in 1 : vector<8x8xf32>, vector<8x8xf32>, vector<8x8xf32>, vector<8x8xf32> -> vector<8x32xf32>
    %184 = tpu.concatenate %112, %183 in 0 : vector<8x32xf32>, vector<8x32xf32> -> vector<16x32xf32>
    %185 = arith.truncf %184 : vector<16x32xf32> to vector<16x32xbf16>
    %cst_61 = arith.constant dense<0.000000e+00> : vector<16x32xf32>
    %186 = tpu.matmul %185, %16, %cst_61 {dimension_numbers = #tpu.dot_dimension_numbers<[1], [0], [0], [1], [0, 0, 1, 1], [], []>} : vector<16x32xbf16>, vector<32x32xbf16>, vector<16x32xf32> -> vector<16x32xf32>
    %187 = arith.addf %12, %186 : vector<16x32xf32>
    %188 = arith.mulf %187, %187 : vector<16x32xf32>
    %cst_62 = arith.constant dense<0.000000e+00> : vector<16xf32>
    %189 = vector.multi_reduction <add>, %188, %cst_62 [1] : vector<16x32xf32> to vector<16xf32>
    %190 = vector.shape_cast %189 : vector<16xf32> to vector<16x1xf32>
    %cst_63 = arith.constant 3.200000e+01 : f32
    %191 = vector.broadcast %cst_63 : f32 to vector<16x1xf32>
    %192 = arith.divf %190, %191 : vector<16x1xf32>
    %cst_64 = arith.constant 9.99999997E-7 : f32
    %193 = vector.broadcast %cst_64 : f32 to vector<16x1xf32>
    %194 = arith.addf %192, %193 : vector<16x1xf32>
    %195 = math.rsqrt %194 : vector<16x1xf32>
    %196 = vector.broadcast %195 : vector<16x1xf32> to vector<16x32xf32>
    %197 = arith.mulf %187, %196 : vector<16x32xf32>
    %198 = vector.broadcast %24 : vector<1x32xf32> to vector<16x32xf32>
    %199 = arith.mulf %197, %198 : vector<16x32xf32>
    %200 = arith.truncf %199 : vector<16x32xf32> to vector<16x32xbf16>
    %cst_65 = arith.constant dense<0.000000e+00> : vector<16x128xf32>
    %201 = tpu.matmul %200, %18, %cst_65 {dimension_numbers = #tpu.dot_dimension_numbers<[1], [0], [0], [1], [0, 0, 1, 1], [], []>} : vector<16x32xbf16>, vector<32x128xbf16>, vector<16x128xf32> -> vector<16x128xf32>
    %202 = arith.negf %201 : vector<16x128xf32>
    %203 = math.exp %202 : vector<16x128xf32>
    %cst_66 = arith.constant 1.000000e+00 : f32
    %204 = vector.broadcast %cst_66 : f32 to vector<16x128xf32>
    %205 = arith.addf %204, %203 : vector<16x128xf32>
    %206 = arith.divf %204, %205 : vector<16x128xf32>
    %207 = arith.mulf %201, %206 : vector<16x128xf32>
    %208 = arith.truncf %207 : vector<16x128xf32> to vector<16x128xbf16>
    %cst_67 = arith.constant dense<0.000000e+00> : vector<16x32xf32>
    %209 = tpu.matmul %208, %20, %cst_67 {dimension_numbers = #tpu.dot_dimension_numbers<[1], [0], [0], [1], [0, 0, 1, 1], [], []>} : vector<16x128xbf16>, vector<128x32xbf16>, vector<16x32xf32> -> vector<16x32xf32>
    %210 = arith.addf %187, %209 : vector<16x32xf32>
    %c1 = arith.constant 1 : index
    %c0_68 = arith.constant 0 : index
    %c0_69 = arith.constant 0 : index
    %211 = vector.load %arg3[%c1, %c0_68, %c0_69] : memref<2x32x96xbf16, #tpu.memory_space<vmem>>, vector<1x32x96xbf16>
    %212 = vector.shape_cast %211 : vector<1x32x96xbf16> to vector<32x96xbf16>
    %c1_70 = arith.constant 1 : index
    %c0_71 = arith.constant 0 : index
    %c0_72 = arith.constant 0 : index
    %213 = vector.load %arg4[%c1_70, %c0_71, %c0_72] : memref<2x32x32xbf16, #tpu.memory_space<vmem>>, vector<1x32x32xbf16>
    %214 = vector.shape_cast %213 : vector<1x32x32xbf16> to vector<32x32xbf16>
    %c1_73 = arith.constant 1 : index
    %c0_74 = arith.constant 0 : index
    %c0_75 = arith.constant 0 : index
    %215 = vector.load %arg5[%c1_73, %c0_74, %c0_75] : memref<2x32x128xbf16, #tpu.memory_space<vmem>>, vector<1x32x128xbf16>
    %216 = vector.shape_cast %215 : vector<1x32x128xbf16> to vector<32x128xbf16>
    %c1_76 = arith.constant 1 : index
    %c0_77 = arith.constant 0 : index
    %c0_78 = arith.constant 0 : index
    %217 = vector.load %arg6[%c1_76, %c0_77, %c0_78] : memref<2x128x32xbf16, #tpu.memory_space<vmem>>, vector<1x128x32xbf16>
    %218 = vector.shape_cast %217 : vector<1x128x32xbf16> to vector<128x32xbf16>
    %c1_79 = arith.constant 1 : index
    %c0_80 = arith.constant 0 : index
    %c0_81 = arith.constant 0 : index
    %219 = vector.load %arg7[%c1_79, %c0_80, %c0_81] : memref<2x1x32xf32, #tpu.memory_space<vmem>>, vector<1x1x32xf32>
    %220 = vector.shape_cast %219 : vector<1x1x32xf32> to vector<1x32xf32>
    %c1_82 = arith.constant 1 : index
    %c0_83 = arith.constant 0 : index
    %c0_84 = arith.constant 0 : index
    %221 = vector.load %arg8[%c1_82, %c0_83, %c0_84] : memref<2x1x32xf32, #tpu.memory_space<vmem>>, vector<1x1x32xf32>
    %222 = vector.shape_cast %221 : vector<1x1x32xf32> to vector<1x32xf32>
    %223 = arith.mulf %210, %210 : vector<16x32xf32>
    %cst_85 = arith.constant dense<0.000000e+00> : vector<16xf32>
    %224 = vector.multi_reduction <add>, %223, %cst_85 [1] : vector<16x32xf32> to vector<16xf32>
    %225 = vector.shape_cast %224 : vector<16xf32> to vector<16x1xf32>
    %cst_86 = arith.constant 3.200000e+01 : f32
    %226 = vector.broadcast %cst_86 : f32 to vector<16x1xf32>
    %227 = arith.divf %225, %226 : vector<16x1xf32>
    %cst_87 = arith.constant 9.99999997E-7 : f32
    %228 = vector.broadcast %cst_87 : f32 to vector<16x1xf32>
    %229 = arith.addf %227, %228 : vector<16x1xf32>
    %230 = math.rsqrt %229 : vector<16x1xf32>
    %231 = vector.broadcast %230 : vector<16x1xf32> to vector<16x32xf32>
    %232 = arith.mulf %210, %231 : vector<16x32xf32>
    %233 = vector.broadcast %220 : vector<1x32xf32> to vector<16x32xf32>
    %234 = arith.mulf %232, %233 : vector<16x32xf32>
    %235 = arith.truncf %234 : vector<16x32xf32> to vector<16x32xbf16>
    %cst_88 = arith.constant dense<0.000000e+00> : vector<16x96xf32>
    %236 = tpu.matmul %235, %212, %cst_88 {dimension_numbers = #tpu.dot_dimension_numbers<[1], [0], [0], [1], [0, 0, 1, 1], [], []>} : vector<16x32xbf16>, vector<32x96xbf16>, vector<16x96xf32> -> vector<16x96xf32>
    %237 = vector.extract_strided_slice %236 {offsets = [0, 0], sizes = [16, 32], strides = [1, 1]} : vector<16x96xf32> to vector<16x32xf32>
    %238 = vector.extract_strided_slice %236 {offsets = [0, 32], sizes = [16, 32], strides = [1, 1]} : vector<16x96xf32> to vector<16x32xf32>
    %239 = vector.extract_strided_slice %236 {offsets = [0, 64], sizes = [16, 32], strides = [1, 1]} : vector<16x96xf32> to vector<16x32xf32>
    %240 = vector.extract_strided_slice %237 {offsets = [0, 0], sizes = [8, 32], strides = [1, 1]} : vector<16x32xf32> to vector<8x32xf32>
    %241 = arith.truncf %240 : vector<8x32xf32> to vector<8x32xbf16>
    %242 = vector.extract_strided_slice %238 {offsets = [0, 0], sizes = [8, 32], strides = [1, 1]} : vector<16x32xf32> to vector<8x32xf32>
    %243 = arith.truncf %242 : vector<8x32xf32> to vector<8x32xbf16>
    %244 = vector.extract_strided_slice %239 {offsets = [0, 0], sizes = [8, 32], strides = [1, 1]} : vector<16x32xf32> to vector<8x32xf32>
    %245 = arith.truncf %244 : vector<8x32xf32> to vector<8x32xbf16>
    %246 = vector.extract_strided_slice %241 {offsets = [0, 0], sizes = [8, 8], strides = [1, 1]} : vector<8x32xbf16> to vector<8x8xbf16>
    %247 = vector.extract_strided_slice %243 {offsets = [0, 0], sizes = [8, 8], strides = [1, 1]} : vector<8x32xbf16> to vector<8x8xbf16>
    "tpu.trace_start"() <{level = 10 : i32, message = "ld,md->lm"}> : () -> ()
    %cst_89 = arith.constant dense<0.000000e+00> : vector<8x8xf32>
    %248 = tpu.matmul %246, %247, %cst_89 {dimension_numbers = #tpu.dot_dimension_numbers<[1], [1], [0], [0], [0, 0, 1, 0], [], []>} : vector<8x8xbf16>, vector<8x8xbf16>, vector<8x8xf32> -> vector<8x8xf32>
    "tpu.trace_stop"() : () -> ()
    %cst_90 = arith.constant dense<0xFF800000> : vector<8xf32>
    %249 = vector.multi_reduction <maximumf>, %248, %cst_90 [1] : vector<8x8xf32> to vector<8xf32>
    %250 = vector.shape_cast %249 : vector<8xf32> to vector<8x1xf32>
    %251 = vector.broadcast %250 : vector<8x1xf32> to vector<8x8xf32>
    %252 = arith.subf %248, %251 : vector<8x8xf32>
    %253 = math.exp %252 : vector<8x8xf32>
    %cst_91 = arith.constant dense<0.000000e+00> : vector<8xf32>
    %254 = vector.multi_reduction <add>, %253, %cst_91 [1] : vector<8x8xf32> to vector<8xf32>
    %255 = vector.shape_cast %254 : vector<8xf32> to vector<8x1xf32>
    %256 = tpu.reciprocal %255 {approx = true} : vector<8x1xf32> -> vector<8x1xf32>
    %257 = vector.broadcast %256 : vector<8x1xf32> to vector<8x8xf32>
    %258 = arith.mulf %253, %257 : vector<8x8xf32>
    %259 = arith.truncf %258 : vector<8x8xf32> to vector<8x8xbf16>
    %260 = vector.extract_strided_slice %245 {offsets = [0, 0], sizes = [8, 8], strides = [1, 1]} : vector<8x32xbf16> to vector<8x8xbf16>
    "tpu.trace_start"() <{level = 10 : i32, message = "lm,md->ld"}> : () -> ()
    %cst_92 = arith.constant dense<0.000000e+00> : vector<8x8xf32>
    %261 = tpu.matmul %259, %260, %cst_92 {dimension_numbers = #tpu.dot_dimension_numbers<[1], [0], [0], [1], [0, 0, 1, 1], [], []>} : vector<8x8xbf16>, vector<8x8xbf16>, vector<8x8xf32> -> vector<8x8xf32>
    "tpu.trace_stop"() : () -> ()
    %262 = vector.extract_strided_slice %241 {offsets = [0, 8], sizes = [8, 8], strides = [1, 1]} : vector<8x32xbf16> to vector<8x8xbf16>
    %263 = vector.extract_strided_slice %243 {offsets = [0, 8], sizes = [8, 8], strides = [1, 1]} : vector<8x32xbf16> to vector<8x8xbf16>
    "tpu.trace_start"() <{level = 10 : i32, message = "ld,md->lm"}> : () -> ()
    %cst_93 = arith.constant dense<0.000000e+00> : vector<8x8xf32>
    %264 = tpu.matmul %262, %263, %cst_93 {dimension_numbers = #tpu.dot_dimension_numbers<[1], [1], [0], [0], [0, 0, 1, 0], [], []>} : vector<8x8xbf16>, vector<8x8xbf16>, vector<8x8xf32> -> vector<8x8xf32>
    "tpu.trace_stop"() : () -> ()
    %cst_94 = arith.constant dense<0xFF800000> : vector<8xf32>
    %265 = vector.multi_reduction <maximumf>, %264, %cst_94 [1] : vector<8x8xf32> to vector<8xf32>
    %266 = vector.shape_cast %265 : vector<8xf32> to vector<8x1xf32>
    %267 = vector.broadcast %266 : vector<8x1xf32> to vector<8x8xf32>
    %268 = arith.subf %264, %267 : vector<8x8xf32>
    %269 = math.exp %268 : vector<8x8xf32>
    %cst_95 = arith.constant dense<0.000000e+00> : vector<8xf32>
    %270 = vector.multi_reduction <add>, %269, %cst_95 [1] : vector<8x8xf32> to vector<8xf32>
    %271 = vector.shape_cast %270 : vector<8xf32> to vector<8x1xf32>
    %272 = tpu.reciprocal %271 {approx = true} : vector<8x1xf32> -> vector<8x1xf32>
    %273 = vector.broadcast %272 : vector<8x1xf32> to vector<8x8xf32>
    %274 = arith.mulf %269, %273 : vector<8x8xf32>
    %275 = arith.truncf %274 : vector<8x8xf32> to vector<8x8xbf16>
    %276 = vector.extract_strided_slice %245 {offsets = [0, 8], sizes = [8, 8], strides = [1, 1]} : vector<8x32xbf16> to vector<8x8xbf16>
    "tpu.trace_start"() <{level = 10 : i32, message = "lm,md->ld"}> : () -> ()
    %cst_96 = arith.constant dense<0.000000e+00> : vector<8x8xf32>
    %277 = tpu.matmul %275, %276, %cst_96 {dimension_numbers = #tpu.dot_dimension_numbers<[1], [0], [0], [1], [0, 0, 1, 1], [], []>} : vector<8x8xbf16>, vector<8x8xbf16>, vector<8x8xf32> -> vector<8x8xf32>
    "tpu.trace_stop"() : () -> ()
    %278 = vector.extract_strided_slice %241 {offsets = [0, 16], sizes = [8, 8], strides = [1, 1]} : vector<8x32xbf16> to vector<8x8xbf16>
    %279 = vector.extract_strided_slice %243 {offsets = [0, 16], sizes = [8, 8], strides = [1, 1]} : vector<8x32xbf16> to vector<8x8xbf16>
    "tpu.trace_start"() <{level = 10 : i32, message = "ld,md->lm"}> : () -> ()
    %cst_97 = arith.constant dense<0.000000e+00> : vector<8x8xf32>
    %280 = tpu.matmul %278, %279, %cst_97 {dimension_numbers = #tpu.dot_dimension_numbers<[1], [1], [0], [0], [0, 0, 1, 0], [], []>} : vector<8x8xbf16>, vector<8x8xbf16>, vector<8x8xf32> -> vector<8x8xf32>
    "tpu.trace_stop"() : () -> ()
    %cst_98 = arith.constant dense<0xFF800000> : vector<8xf32>
    %281 = vector.multi_reduction <maximumf>, %280, %cst_98 [1] : vector<8x8xf32> to vector<8xf32>
    %282 = vector.shape_cast %281 : vector<8xf32> to vector<8x1xf32>
    %283 = vector.broadcast %282 : vector<8x1xf32> to vector<8x8xf32>
    %284 = arith.subf %280, %283 : vector<8x8xf32>
    %285 = math.exp %284 : vector<8x8xf32>
    %cst_99 = arith.constant dense<0.000000e+00> : vector<8xf32>
    %286 = vector.multi_reduction <add>, %285, %cst_99 [1] : vector<8x8xf32> to vector<8xf32>
    %287 = vector.shape_cast %286 : vector<8xf32> to vector<8x1xf32>
    %288 = tpu.reciprocal %287 {approx = true} : vector<8x1xf32> -> vector<8x1xf32>
    %289 = vector.broadcast %288 : vector<8x1xf32> to vector<8x8xf32>
    %290 = arith.mulf %285, %289 : vector<8x8xf32>
    %291 = arith.truncf %290 : vector<8x8xf32> to vector<8x8xbf16>
    %292 = vector.extract_strided_slice %245 {offsets = [0, 16], sizes = [8, 8], strides = [1, 1]} : vector<8x32xbf16> to vector<8x8xbf16>
    "tpu.trace_start"() <{level = 10 : i32, message = "lm,md->ld"}> : () -> ()
    %cst_100 = arith.constant dense<0.000000e+00> : vector<8x8xf32>
    %293 = tpu.matmul %291, %292, %cst_100 {dimension_numbers = #tpu.dot_dimension_numbers<[1], [0], [0], [1], [0, 0, 1, 1], [], []>} : vector<8x8xbf16>, vector<8x8xbf16>, vector<8x8xf32> -> vector<8x8xf32>
    "tpu.trace_stop"() : () -> ()
    %294 = vector.extract_strided_slice %241 {offsets = [0, 24], sizes = [8, 8], strides = [1, 1]} : vector<8x32xbf16> to vector<8x8xbf16>
    %295 = vector.extract_strided_slice %243 {offsets = [0, 24], sizes = [8, 8], strides = [1, 1]} : vector<8x32xbf16> to vector<8x8xbf16>
    "tpu.trace_start"() <{level = 10 : i32, message = "ld,md->lm"}> : () -> ()
    %cst_101 = arith.constant dense<0.000000e+00> : vector<8x8xf32>
    %296 = tpu.matmul %294, %295, %cst_101 {dimension_numbers = #tpu.dot_dimension_numbers<[1], [1], [0], [0], [0, 0, 1, 0], [], []>} : vector<8x8xbf16>, vector<8x8xbf16>, vector<8x8xf32> -> vector<8x8xf32>
    "tpu.trace_stop"() : () -> ()
    %cst_102 = arith.constant dense<0xFF800000> : vector<8xf32>
    %297 = vector.multi_reduction <maximumf>, %296, %cst_102 [1] : vector<8x8xf32> to vector<8xf32>
    %298 = vector.shape_cast %297 : vector<8xf32> to vector<8x1xf32>
    %299 = vector.broadcast %298 : vector<8x1xf32> to vector<8x8xf32>
    %300 = arith.subf %296, %299 : vector<8x8xf32>
    %301 = math.exp %300 : vector<8x8xf32>
    %cst_103 = arith.constant dense<0.000000e+00> : vector<8xf32>
    %302 = vector.multi_reduction <add>, %301, %cst_103 [1] : vector<8x8xf32> to vector<8xf32>
    %303 = vector.shape_cast %302 : vector<8xf32> to vector<8x1xf32>
    %304 = tpu.reciprocal %303 {approx = true} : vector<8x1xf32> -> vector<8x1xf32>
    %305 = vector.broadcast %304 : vector<8x1xf32> to vector<8x8xf32>
    %306 = arith.mulf %301, %305 : vector<8x8xf32>
    %307 = arith.truncf %306 : vector<8x8xf32> to vector<8x8xbf16>
    %308 = vector.extract_strided_slice %245 {offsets = [0, 24], sizes = [8, 8], strides = [1, 1]} : vector<8x32xbf16> to vector<8x8xbf16>
    "tpu.trace_start"() <{level = 10 : i32, message = "lm,md->ld"}> : () -> ()
    %cst_104 = arith.constant dense<0.000000e+00> : vector<8x8xf32>
    %309 = tpu.matmul %307, %308, %cst_104 {dimension_numbers = #tpu.dot_dimension_numbers<[1], [0], [0], [1], [0, 0, 1, 1], [], []>} : vector<8x8xbf16>, vector<8x8xbf16>, vector<8x8xf32> -> vector<8x8xf32>
    "tpu.trace_stop"() : () -> ()
    %310 = tpu.concatenate %261, %277, %293, %309 in 1 : vector<8x8xf32>, vector<8x8xf32>, vector<8x8xf32>, vector<8x8xf32> -> vector<8x32xf32>
    %311 = vector.extract_strided_slice %237 {offsets = [8, 0], sizes = [8, 32], strides = [1, 1]} : vector<16x32xf32> to vector<8x32xf32>
    %312 = arith.truncf %311 : vector<8x32xf32> to vector<8x32xbf16>
    %313 = vector.extract_strided_slice %238 {offsets = [8, 0], sizes = [8, 32], strides = [1, 1]} : vector<16x32xf32> to vector<8x32xf32>
    %314 = arith.truncf %313 : vector<8x32xf32> to vector<8x32xbf16>
    %315 = vector.extract_strided_slice %239 {offsets = [8, 0], sizes = [8, 32], strides = [1, 1]} : vector<16x32xf32> to vector<8x32xf32>
    %316 = arith.truncf %315 : vector<8x32xf32> to vector<8x32xbf16>
    %317 = vector.extract_strided_slice %312 {offsets = [0, 0], sizes = [8, 8], strides = [1, 1]} : vector<8x32xbf16> to vector<8x8xbf16>
    %318 = vector.extract_strided_slice %314 {offsets = [0, 0], sizes = [8, 8], strides = [1, 1]} : vector<8x32xbf16> to vector<8x8xbf16>
    "tpu.trace_start"() <{level = 10 : i32, message = "ld,md->lm"}> : () -> ()
    %cst_105 = arith.constant dense<0.000000e+00> : vector<8x8xf32>
    %319 = tpu.matmul %317, %318, %cst_105 {dimension_numbers = #tpu.dot_dimension_numbers<[1], [1], [0], [0], [0, 0, 1, 0], [], []>} : vector<8x8xbf16>, vector<8x8xbf16>, vector<8x8xf32> -> vector<8x8xf32>
    "tpu.trace_stop"() : () -> ()
    %cst_106 = arith.constant dense<0xFF800000> : vector<8xf32>
    %320 = vector.multi_reduction <maximumf>, %319, %cst_106 [1] : vector<8x8xf32> to vector<8xf32>
    %321 = vector.shape_cast %320 : vector<8xf32> to vector<8x1xf32>
    %322 = vector.broadcast %321 : vector<8x1xf32> to vector<8x8xf32>
    %323 = arith.subf %319, %322 : vector<8x8xf32>
    %324 = math.exp %323 : vector<8x8xf32>
    %cst_107 = arith.constant dense<0.000000e+00> : vector<8xf32>
    %325 = vector.multi_reduction <add>, %324, %cst_107 [1] : vector<8x8xf32> to vector<8xf32>
    %326 = vector.shape_cast %325 : vector<8xf32> to vector<8x1xf32>
    %327 = tpu.reciprocal %326 {approx = true} : vector<8x1xf32> -> vector<8x1xf32>
    %328 = vector.broadcast %327 : vector<8x1xf32> to vector<8x8xf32>
    %329 = arith.mulf %324, %328 : vector<8x8xf32>
    %330 = arith.truncf %329 : vector<8x8xf32> to vector<8x8xbf16>
    %331 = vector.extract_strided_slice %316 {offsets = [0, 0], sizes = [8, 8], strides = [1, 1]} : vector<8x32xbf16> to vector<8x8xbf16>
    "tpu.trace_start"() <{level = 10 : i32, message = "lm,md->ld"}> : () -> ()
    %cst_108 = arith.constant dense<0.000000e+00> : vector<8x8xf32>
    %332 = tpu.matmul %330, %331, %cst_108 {dimension_numbers = #tpu.dot_dimension_numbers<[1], [0], [0], [1], [0, 0, 1, 1], [], []>} : vector<8x8xbf16>, vector<8x8xbf16>, vector<8x8xf32> -> vector<8x8xf32>
    "tpu.trace_stop"() : () -> ()
    %333 = vector.extract_strided_slice %312 {offsets = [0, 8], sizes = [8, 8], strides = [1, 1]} : vector<8x32xbf16> to vector<8x8xbf16>
    %334 = vector.extract_strided_slice %314 {offsets = [0, 8], sizes = [8, 8], strides = [1, 1]} : vector<8x32xbf16> to vector<8x8xbf16>
    "tpu.trace_start"() <{level = 10 : i32, message = "ld,md->lm"}> : () -> ()
    %cst_109 = arith.constant dense<0.000000e+00> : vector<8x8xf32>
    %335 = tpu.matmul %333, %334, %cst_109 {dimension_numbers = #tpu.dot_dimension_numbers<[1], [1], [0], [0], [0, 0, 1, 0], [], []>} : vector<8x8xbf16>, vector<8x8xbf16>, vector<8x8xf32> -> vector<8x8xf32>
    "tpu.trace_stop"() : () -> ()
    %cst_110 = arith.constant dense<0xFF800000> : vector<8xf32>
    %336 = vector.multi_reduction <maximumf>, %335, %cst_110 [1] : vector<8x8xf32> to vector<8xf32>
    %337 = vector.shape_cast %336 : vector<8xf32> to vector<8x1xf32>
    %338 = vector.broadcast %337 : vector<8x1xf32> to vector<8x8xf32>
    %339 = arith.subf %335, %338 : vector<8x8xf32>
    %340 = math.exp %339 : vector<8x8xf32>
    %cst_111 = arith.constant dense<0.000000e+00> : vector<8xf32>
    %341 = vector.multi_reduction <add>, %340, %cst_111 [1] : vector<8x8xf32> to vector<8xf32>
    %342 = vector.shape_cast %341 : vector<8xf32> to vector<8x1xf32>
    %343 = tpu.reciprocal %342 {approx = true} : vector<8x1xf32> -> vector<8x1xf32>
    %344 = vector.broadcast %343 : vector<8x1xf32> to vector<8x8xf32>
    %345 = arith.mulf %340, %344 : vector<8x8xf32>
    %346 = arith.truncf %345 : vector<8x8xf32> to vector<8x8xbf16>
    %347 = vector.extract_strided_slice %316 {offsets = [0, 8], sizes = [8, 8], strides = [1, 1]} : vector<8x32xbf16> to vector<8x8xbf16>
    "tpu.trace_start"() <{level = 10 : i32, message = "lm,md->ld"}> : () -> ()
    %cst_112 = arith.constant dense<0.000000e+00> : vector<8x8xf32>
    %348 = tpu.matmul %346, %347, %cst_112 {dimension_numbers = #tpu.dot_dimension_numbers<[1], [0], [0], [1], [0, 0, 1, 1], [], []>} : vector<8x8xbf16>, vector<8x8xbf16>, vector<8x8xf32> -> vector<8x8xf32>
    "tpu.trace_stop"() : () -> ()
    %349 = vector.extract_strided_slice %312 {offsets = [0, 16], sizes = [8, 8], strides = [1, 1]} : vector<8x32xbf16> to vector<8x8xbf16>
    %350 = vector.extract_strided_slice %314 {offsets = [0, 16], sizes = [8, 8], strides = [1, 1]} : vector<8x32xbf16> to vector<8x8xbf16>
    "tpu.trace_start"() <{level = 10 : i32, message = "ld,md->lm"}> : () -> ()
    %cst_113 = arith.constant dense<0.000000e+00> : vector<8x8xf32>
    %351 = tpu.matmul %349, %350, %cst_113 {dimension_numbers = #tpu.dot_dimension_numbers<[1], [1], [0], [0], [0, 0, 1, 0], [], []>} : vector<8x8xbf16>, vector<8x8xbf16>, vector<8x8xf32> -> vector<8x8xf32>
    "tpu.trace_stop"() : () -> ()
    %cst_114 = arith.constant dense<0xFF800000> : vector<8xf32>
    %352 = vector.multi_reduction <maximumf>, %351, %cst_114 [1] : vector<8x8xf32> to vector<8xf32>
    %353 = vector.shape_cast %352 : vector<8xf32> to vector<8x1xf32>
    %354 = vector.broadcast %353 : vector<8x1xf32> to vector<8x8xf32>
    %355 = arith.subf %351, %354 : vector<8x8xf32>
    %356 = math.exp %355 : vector<8x8xf32>
    %cst_115 = arith.constant dense<0.000000e+00> : vector<8xf32>
    %357 = vector.multi_reduction <add>, %356, %cst_115 [1] : vector<8x8xf32> to vector<8xf32>
    %358 = vector.shape_cast %357 : vector<8xf32> to vector<8x1xf32>
    %359 = tpu.reciprocal %358 {approx = true} : vector<8x1xf32> -> vector<8x1xf32>
    %360 = vector.broadcast %359 : vector<8x1xf32> to vector<8x8xf32>
    %361 = arith.mulf %356, %360 : vector<8x8xf32>
    %362 = arith.truncf %361 : vector<8x8xf32> to vector<8x8xbf16>
    %363 = vector.extract_strided_slice %316 {offsets = [0, 16], sizes = [8, 8], strides = [1, 1]} : vector<8x32xbf16> to vector<8x8xbf16>
    "tpu.trace_start"() <{level = 10 : i32, message = "lm,md->ld"}> : () -> ()
    %cst_116 = arith.constant dense<0.000000e+00> : vector<8x8xf32>
    %364 = tpu.matmul %362, %363, %cst_116 {dimension_numbers = #tpu.dot_dimension_numbers<[1], [0], [0], [1], [0, 0, 1, 1], [], []>} : vector<8x8xbf16>, vector<8x8xbf16>, vector<8x8xf32> -> vector<8x8xf32>
    "tpu.trace_stop"() : () -> ()
    %365 = vector.extract_strided_slice %312 {offsets = [0, 24], sizes = [8, 8], strides = [1, 1]} : vector<8x32xbf16> to vector<8x8xbf16>
    %366 = vector.extract_strided_slice %314 {offsets = [0, 24], sizes = [8, 8], strides = [1, 1]} : vector<8x32xbf16> to vector<8x8xbf16>
    "tpu.trace_start"() <{level = 10 : i32, message = "ld,md->lm"}> : () -> ()
    %cst_117 = arith.constant dense<0.000000e+00> : vector<8x8xf32>
    %367 = tpu.matmul %365, %366, %cst_117 {dimension_numbers = #tpu.dot_dimension_numbers<[1], [1], [0], [0], [0, 0, 1, 0], [], []>} : vector<8x8xbf16>, vector<8x8xbf16>, vector<8x8xf32> -> vector<8x8xf32>
    "tpu.trace_stop"() : () -> ()
    %cst_118 = arith.constant dense<0xFF800000> : vector<8xf32>
    %368 = vector.multi_reduction <maximumf>, %367, %cst_118 [1] : vector<8x8xf32> to vector<8xf32>
    %369 = vector.shape_cast %368 : vector<8xf32> to vector<8x1xf32>
    %370 = vector.broadcast %369 : vector<8x1xf32> to vector<8x8xf32>
    %371 = arith.subf %367, %370 : vector<8x8xf32>
    %372 = math.exp %371 : vector<8x8xf32>
    %cst_119 = arith.constant dense<0.000000e+00> : vector<8xf32>
    %373 = vector.multi_reduction <add>, %372, %cst_119 [1] : vector<8x8xf32> to vector<8xf32>
    %374 = vector.shape_cast %373 : vector<8xf32> to vector<8x1xf32>
    %375 = tpu.reciprocal %374 {approx = true} : vector<8x1xf32> -> vector<8x1xf32>
    %376 = vector.broadcast %375 : vector<8x1xf32> to vector<8x8xf32>
    %377 = arith.mulf %372, %376 : vector<8x8xf32>
    %378 = arith.truncf %377 : vector<8x8xf32> to vector<8x8xbf16>
    %379 = vector.extract_strided_slice %316 {offsets = [0, 24], sizes = [8, 8], strides = [1, 1]} : vector<8x32xbf16> to vector<8x8xbf16>
    "tpu.trace_start"() <{level = 10 : i32, message = "lm,md->ld"}> : () -> ()
    %cst_120 = arith.constant dense<0.000000e+00> : vector<8x8xf32>
    %380 = tpu.matmul %378, %379, %cst_120 {dimension_numbers = #tpu.dot_dimension_numbers<[1], [0], [0], [1], [0, 0, 1, 1], [], []>} : vector<8x8xbf16>, vector<8x8xbf16>, vector<8x8xf32> -> vector<8x8xf32>
    "tpu.trace_stop"() : () -> ()
    %381 = tpu.concatenate %332, %348, %364, %380 in 1 : vector<8x8xf32>, vector<8x8xf32>, vector<8x8xf32>, vector<8x8xf32> -> vector<8x32xf32>
    %382 = tpu.concatenate %310, %381 in 0 : vector<8x32xf32>, vector<8x32xf32> -> vector<16x32xf32>
    %383 = arith.truncf %382 : vector<16x32xf32> to vector<16x32xbf16>
    %cst_121 = arith.constant dense<0.000000e+00> : vector<16x32xf32>
    %384 = tpu.matmul %383, %214, %cst_121 {dimension_numbers = #tpu.dot_dimension_numbers<[1], [0], [0], [1], [0, 0, 1, 1], [], []>} : vector<16x32xbf16>, vector<32x32xbf16>, vector<16x32xf32> -> vector<16x32xf32>
    %385 = arith.addf %210, %384 : vector<16x32xf32>
    %386 = arith.mulf %385, %385 : vector<16x32xf32>
    %cst_122 = arith.constant dense<0.000000e+00> : vector<16xf32>
    %387 = vector.multi_reduction <add>, %386, %cst_122 [1] : vector<16x32xf32> to vector<16xf32>
    %388 = vector.shape_cast %387 : vector<16xf32> to vector<16x1xf32>
    %cst_123 = arith.constant 3.200000e+01 : f32
    %389 = vector.broadcast %cst_123 : f32 to vector<16x1xf32>
    %390 = arith.divf %388, %389 : vector<16x1xf32>
    %cst_124 = arith.constant 9.99999997E-7 : f32
    %391 = vector.broadcast %cst_124 : f32 to vector<16x1xf32>
    %392 = arith.addf %390, %391 : vector<16x1xf32>
    %393 = math.rsqrt %392 : vector<16x1xf32>
    %394 = vector.broadcast %393 : vector<16x1xf32> to vector<16x32xf32>
    %395 = arith.mulf %385, %394 : vector<16x32xf32>
    %396 = vector.broadcast %222 : vector<1x32xf32> to vector<16x32xf32>
    %397 = arith.mulf %395, %396 : vector<16x32xf32>
    %398 = arith.truncf %397 : vector<16x32xf32> to vector<16x32xbf16>
    %cst_125 = arith.constant dense<0.000000e+00> : vector<16x128xf32>
    %399 = tpu.matmul %398, %216, %cst_125 {dimension_numbers = #tpu.dot_dimension_numbers<[1], [0], [0], [1], [0, 0, 1, 1], [], []>} : vector<16x32xbf16>, vector<32x128xbf16>, vector<16x128xf32> -> vector<16x128xf32>
    %400 = arith.negf %399 : vector<16x128xf32>
    %401 = math.exp %400 : vector<16x128xf32>
    %cst_126 = arith.constant 1.000000e+00 : f32
    %402 = vector.broadcast %cst_126 : f32 to vector<16x128xf32>
    %403 = arith.addf %402, %401 : vector<16x128xf32>
    %404 = arith.divf %402, %403 : vector<16x128xf32>
    %405 = arith.mulf %399, %404 : vector<16x128xf32>
    %406 = arith.truncf %405 : vector<16x128xf32> to vector<16x128xbf16>
    %cst_127 = arith.constant dense<0.000000e+00> : vector<16x32xf32>
    %407 = tpu.matmul %406, %218, %cst_127 {dimension_numbers = #tpu.dot_dimension_numbers<[1], [0], [0], [1], [0, 0, 1, 1], [], []>} : vector<16x128xbf16>, vector<128x32xbf16>, vector<16x32xf32> -> vector<16x32xf32>
    %408 = arith.addf %385, %407 : vector<16x32xf32>
    %c0_128 = arith.constant 0 : index
    %c0_129 = arith.constant 0 : index
    %409 = vector.load %arg9[%c0_128, %c0_129] : memref<1x32xf32, #tpu.memory_space<vmem>>, vector<1x32xf32>
    %410 = arith.mulf %408, %408 : vector<16x32xf32>
    %cst_130 = arith.constant dense<0.000000e+00> : vector<16xf32>
    %411 = vector.multi_reduction <add>, %410, %cst_130 [1] : vector<16x32xf32> to vector<16xf32>
    %412 = vector.shape_cast %411 : vector<16xf32> to vector<16x1xf32>
    %cst_131 = arith.constant 3.200000e+01 : f32
    %413 = vector.broadcast %cst_131 : f32 to vector<16x1xf32>
    %414 = arith.divf %412, %413 : vector<16x1xf32>
    %cst_132 = arith.constant 9.99999997E-7 : f32
    %415 = vector.broadcast %cst_132 : f32 to vector<16x1xf32>
    %416 = arith.addf %414, %415 : vector<16x1xf32>
    %417 = math.rsqrt %416 : vector<16x1xf32>
    %418 = vector.broadcast %417 : vector<16x1xf32> to vector<16x32xf32>
    %419 = arith.mulf %408, %418 : vector<16x32xf32>
    %420 = vector.broadcast %409 : vector<1x32xf32> to vector<16x32xf32>
    %421 = arith.mulf %419, %420 : vector<16x32xf32>
    %c0_133 = arith.constant 0 : index
    %c0_134 = arith.constant 0 : index
    %422 = vector.load %arg12[%c0_133, %c0_134] : memref<16x32xf32, #tpu.memory_space<vmem>>, vector<16x32xf32>
    tpu.vector_store %arg12[%c0_133, %c0_134], %421 {strides = array<i32>} : memref<16x32xf32, #tpu.memory_space<vmem>>, vector<16x32xf32>,
    %c0_135 = arith.constant 0 : index
    %c0_136 = arith.constant 0 : index
    %423 = vector.load %arg10[%c0_135, %c0_136] : memref<32x128xbf16, #tpu.memory_space<vmem>>, vector<32x128xbf16>
    %424 = arith.truncf %421 : vector<16x32xf32> to vector<16x32xbf16>
    %cst_137 = arith.constant dense<0.000000e+00> : vector<16x128xf32>
    %425 = tpu.matmul %424, %423, %cst_137 {dimension_numbers = #tpu.dot_dimension_numbers<[1], [0], [0], [1], [0, 0, 1, 1], [], []>} : vector<16x32xbf16>, vector<32x128xbf16>, vector<16x128xf32> -> vector<16x128xf32>
    %426 = vector.extract_strided_slice %425 {offsets = [0, 0], sizes = [16, 64], strides = [1, 1]} : vector<16x128xf32> to vector<16x64xf32>
    %cst_138 = arith.constant dense<0xFF800000> : vector<16xf32>
    %427 = vector.multi_reduction <maximumf>, %426, %cst_138 [1] : vector<16x64xf32> to vector<16xf32>
    %428 = vector.shape_cast %427 : vector<16xf32> to vector<16x1xf32>
    %429 = vector.broadcast %428 : vector<16x1xf32> to vector<16x64xf32>
    %430 = arith.cmpf oeq, %426, %429 : vector<16x64xf32>
    %c64_i32 = arith.constant 64 : i32
    %431 = vector.broadcast %c64_i32 : i32 to vector<16x64xi32>
    %432 = arith.select %430, %0, %431 : vector<16x64xi1>, vector<16x64xi32>
    %cst_139 = arith.constant dense<2147483647> : vector<16xi32>
    %433 = vector.multi_reduction <minsi>, %432, %cst_139 [1] : vector<16x64xi32> to vector<16xi32>
    %434 = vector.shape_cast %433 : vector<16xi32> to vector<16x1xi32>
    %435 = vector.extract_strided_slice %425 {offsets = [0, 64], sizes = [16, 64], strides = [1, 1]} : vector<16x128xf32> to vector<16x64xf32>
    %cst_140 = arith.constant dense<0xFF800000> : vector<16xf32>
    %436 = vector.multi_reduction <maximumf>, %435, %cst_140 [1] : vector<16x64xf32> to vector<16xf32>
    %437 = vector.shape_cast %436 : vector<16xf32> to vector<16x1xf32>
    %438 = vector.broadcast %437 : vector<16x1xf32> to vector<16x64xf32>
    %439 = arith.cmpf oeq, %435, %438 : vector<16x64xf32>
    %c64_i32_141 = arith.constant 64 : i32
    %440 = vector.broadcast %c64_i32_141 : i32 to vector<16x64xi32>
    %441 = arith.select %439, %0, %440 : vector<16x64xi1>, vector<16x64xi32>
    %cst_142 = arith.constant dense<2147483647> : vector<16xi32>
    %442 = vector.multi_reduction <minsi>, %441, %cst_142 [1] : vector<16x64xi32> to vector<16xi32>
    %443 = vector.shape_cast %442 : vector<16xi32> to vector<16x1xi32>
    %444 = tpu.concatenate %434, %443 in 1 : vector<16x1xi32>, vector<16x1xi32> -> vector<16x2xi32>
    %c0_143 = arith.constant 0 : index
    %c0_144 = arith.constant 0 : index
    %445 = vector.load %arg11[%c0_143, %c0_144] : memref<16x2xi32, #tpu.memory_space<vmem>>, vector<16x2xi32>
    tpu.vector_store %arg11[%c0_143, %c0_144], %444 {strides = array<i32>} : memref<16x2xi32, #tpu.memory_space<vmem>>, vector<16x2xi32>,
    return
  }
}

</mosaic_0001>

<llo_original>
// kernel: streaming_transformer_forward.1
$region0: #{streaming_transformer_forward.1}
  #allocation0 [shape = 'u32[]', space=smem, size = 0x4, offset = 0x4, fixed_abs, tag = 'smem constant byte address 0x4 - core index']
  #allocation1 [shape = 'u32[144,128]{1,0:T(1,128)}', space=vmem, size = 0x12000, scoped, tag = 'internal scratch']
  %s0 = inlined_call_operand.vmem [shape: s32[16,1], index: 0, kind: input, shape index: {}]
  %s1 = inlined_call_operand.vmem [shape: f32[8,32], index: 1, kind: input, shape index: {}]
  %s2 = inlined_call_operand.vmem [shape: bf16[64,32], index: 2, kind: input, shape index: {}]
  %s3 = inlined_call_operand.vmem [shape: bf16[2,32,96], index: 3, kind: input, shape index: {}]
  %s4 = inlined_call_operand.vmem [shape: bf16[2,32,32], index: 4, kind: input, shape index: {}]
  %s5 = inlined_call_operand.vmem [shape: bf16[2,32,128], index: 5, kind: input, shape index: {}]
  %s6 = inlined_call_operand.vmem [shape: bf16[2,128,32], index: 6, kind: input, shape index: {}]
  %s7 = inlined_call_operand.vmem [shape: f32[2,1,32], index: 7, kind: input, shape index: {}]
  %s8 = inlined_call_operand.vmem [shape: f32[2,1,32], index: 8, kind: input, shape index: {}]
  %s9 = inlined_call_operand.vmem [shape: f32[1,32], index: 9, kind: input, shape index: {}]
  %s10 = inlined_call_operand.vmem [shape: bf16[32,128], index: 10, kind: input, shape index: {}]
  %s11 = inlined_call_operand.vmem [shape: s32[16,2], index: 11, kind: output, shape index: {0}]
  %s12 = inlined_call_operand.hbm [shape: f32[16,32], index: 12, kind: output, shape index: {1}]
  %13 = xla_tuple %s11, %s12
  %s14 = sld [smem:[#allocation0]]
  $region62: #{streaming_transformer_forward.1} parent=0
    _
  %s16 = ssub.s32 1, %s14
  %s17 = scalar_select 0, %s16, %s14
  $region1: #{streaming_transformer_forward.1} parent=0
    #allocation2 [shape = 'u8[8192]{0}', space=vmem, size = 0x2000, scoped, tag = 'output window, operand 1, single buffered']
    #allocation3 [shape = 's32[1]{0}', space=sflag, size = 0x4, scoped, tag = 'scoped memory for streaming_transformer_forward.1']
    %18 = vsyncpa [#allocation3], 0
    // Predicated region
    $region2: #{streaming_transformer_forward.1} parent=1 // pred_check
      _
    $region3: #{streaming_transformer_forward.1} parent=1 // pred_check_branch
      %20 = sbr.rel (0) target = $region5
    $region4: #{streaming_transformer_forward.1} parent=1 // pred_region
      _
    $region5: #{streaming_transformer_forward.1} parent=1 // pred_fallthru
      _
    // Predicated region
    $region6: #{streaming_transformer_forward.1} parent=1 // pred_check
      _
    $region7: #{streaming_transformer_forward.1} parent=1 // pred_check_branch
      %22 = sbr.rel (0) target = $region9
    $region8: #{streaming_transformer_forward.1} parent=1 // pred_region
      _
    $region9: #{streaming_transformer_forward.1} parent=1 // pred_fallthru
      _
    // Predicated region
    $region10: #{streaming_transformer_forward.1} parent=1 // pred_check
      _
    $region11: #{streaming_transformer_forward.1} parent=1 // pred_check_branch
      %24 = sbr.rel (0) target = $region13
    $region12: #{streaming_transformer_forward.1} parent=1 // pred_region
      _
    $region13: #{streaming_transformer_forward.1} parent=1 // pred_fallthru
      _
    // Predicated region
    $region14: #{streaming_transformer_forward.1} parent=1 // pred_check
      _
    $region15: #{streaming_transformer_forward.1} parent=1 // pred_check_branch
      %26 = sbr.rel (0) target = $region17
    $region16: #{streaming_transformer_forward.1} parent=1 // pred_region
      _
    $region17: #{streaming_transformer_forward.1} parent=1 // pred_fallthru
      _
    // Predicated region
    $region18: #{streaming_transformer_forward.1} parent=1 // pred_check
      _
    $region19: #{streaming_transformer_forward.1} parent=1 // pred_check_branch
      %28 = sbr.rel (0) target = $region21
    $region20: #{streaming_transformer_forward.1} parent=1 // pred_region
      _
    $region21: #{streaming_transformer_forward.1} parent=1 // pred_fallthru
      _
    // Predicated region
    $region22: #{streaming_transformer_forward.1} parent=1 // pred_check
      _
    $region23: #{streaming_transformer_forward.1} parent=1 // pred_check_branch
      %30 = sbr.rel (0) target = $region25
    $region24: #{streaming_transformer_forward.1} parent=1 // pred_region
      _
    $region25: #{streaming_transformer_forward.1} parent=1 // pred_fallthru
      _
    // Predicated region
    $region26: #{streaming_transformer_forward.1} parent=1 // pred_check
      _
    $region27: #{streaming_transformer_forward.1} parent=1 // pred_check_branch
      %32 = sbr.rel (0) target = $region29
    $region28: #{streaming_transformer_forward.1} parent=1 // pred_region
      _
    $region29: #{streaming_transformer_forward.1} parent=1 // pred_fallthru
      _
    // Predicated region
    $region30: #{streaming_transformer_forward.1} parent=1 // pred_check
      _
    $region31: #{streaming_transformer_forward.1} parent=1 // pred_check_branch
      %34 = sbr.rel (0) target = $region33
    $region32: #{streaming_transformer_forward.1} parent=1 // pred_region
      _
    $region33: #{streaming_transformer_forward.1} parent=1 // pred_fallthru
      _
    // Predicated region
    $region34: #{streaming_transformer_forward.1} parent=1 // pred_check
      _
    $region35: #{streaming_transformer_forward.1} parent=1 // pred_check_branch
      %36 = sbr.rel (0) target = $region37
    $region36: #{streaming_transformer_forward.1} parent=1 // pred_region
      _
    $region37: #{streaming_transformer_forward.1} parent=1 // pred_fallthru
      _
    // Predicated region
    $region38: #{streaming_transformer_forward.1} parent=1 // pred_check
      _
    $region39: #{streaming_transformer_forward.1} parent=1 // pred_check_branch
      %38 = sbr.rel (0) target = $region41
    $region40: #{streaming_transformer_forward.1} parent=1 // pred_region
      _
    $region41: #{streaming_transformer_forward.1} parent=1 // pred_fallthru
      _
    // Predicated region
    $region42: #{streaming_transformer_forward.1} parent=1 // pred_check
      _
    $region43: #{streaming_transformer_forward.1} parent=1 // pred_check_branch
      %40 = sbr.rel (0) target = $region45
    $region44: #{streaming_transformer_forward.1} parent=1 // pred_region
      _
    $region45: #{streaming_transformer_forward.1} parent=1 // pred_fallthru
      _
    %v42 = vlaneseq
    %v43 = vand.u32 %v42, 127
    %v44 = vld [vmem:[%s0] sm:$0xff]
    %v45 = vld [vmem:[%s0 + $0x8] sm:$0xff]
    %46 = vset.pattern.permute.xlu0 0
    %47 = vperm.xlu0 %46, %v44
    %v48 = vpop.permute.xlu0 %47
    %49 = vset.pattern.permute.xlu0 0
    %50 = vperm.xlu0 %49, %v45
    %v51 = vpop.permute.xlu0 %50
    %vm52 = vcmp.eq.s32.totalorder %v48, %v43
    %vm53 = vcmp.eq.s32.totalorder %v51, %v43
    %v54 = vsel %vm52, 1.0, 0.0
    %v55 = vsel %vm53, 1.0, 0.0
    %v56 = vpack.c.bf16 %v55, %v54
    %v57 = vld [vmem:[%s2] sm:$0xf]
    %v58 = vld [vmem:[%s2 + $0x4] sm:$0xf]
    %v59 = vld [vmem:[%s2 + $0x8] sm:$0xf]
    %v60 = vld [vmem:[%s2 + $0xc] sm:$0xf]
    %v61 = vld [vmem:[%s2 + $0x10] sm:$0xf]
    %v62 = vld [vmem:[%s2 + $0x14] sm:$0xf]
    %v63 = vld [vmem:[%s2 + $0x18] sm:$0xf]
    %v64 = vld [vmem:[%s2 + $0x1c] sm:$0xf]
    %v65 = vld [vmem:[%s1] sm:$0xff]
    %v74 = vunpack.c.l.b16 %v57
    %v75 = vunpack.c.l.b16 %v58
    %v76 = vunpack.c.l.b16 %v59
    %v77 = vunpack.c.l.b16 %v60
    %v78 = vunpack.c.l.b16 %v61
    %v79 = vunpack.c.l.b16 %v62
    %v80 = vunpack.c.l.b16 %v63
    %v81 = vunpack.c.l.b16 %v64
    %v82 = vpack.c.b16 %v75, %v74
    %v83 = vpack.c.b16 %v77, %v76
    %v84 = vpack.c.b16 %v79, %v78
    %v85 = vpack.c.b16 %v81, %v80
    %vm90 = vcmask 523264
    %v92 = vsel %vm90, %v56, 0
    %94 = vmatprep.subr.bf16.mxu0 0
    %95 = vmatpush1.bf16.msra.mxu0 %v82
    %96 = vmatprep.subr.bf16.mxu0 0
    %97 = vmatpush1.bf16.msra.mxu0 %v83
    %98 = vmatprep.subr.bf16.mxu0 0
    %99 = vmatpush1.bf16.msra.mxu0 %v84
    %100 = vmatprep.subr.bf16.mxu0 0
    %101 = vmatpush1.bf16.msra.mxu0 %v85
    %102 = vmatprep.subr.bf16.mxu0 0
    %103 = vmatpush1.bf16.msra.mxu0 0
    %104 = vmatprep.subr.bf16.mxu0 0
    %105 = vmatpush1.bf16.msra.mxu0 0
    %106 = vmatprep.subr.bf16.mxu0 0
    %107 = vmatpush1.bf16.msra.mxu0 0
    %108 = vmatprep.subr.bf16.mxu0 0
    %109 = vmatpush1.bf16.msra.mxu0 0
    %110 = vmatprep.subr.bf16.mxu0 0
    %111 = vmatpush1.bf16.msra.mxu0 0
    %112 = vmatprep.subr.bf16.mxu0 0
    %113 = vmatpush1.bf16.msra.mxu0 0
    %114 = vmatprep.subr.bf16.mxu0 0
    %115 = vmatpush1.bf16.msra.mxu0 0
    %116 = vmatprep.subr.bf16.mxu0 0
    %117 = vmatpush1.bf16.msra.mxu0 0
    %118 = vmatprep.subr.bf16.mxu0 0
    %119 = vmatpush1.bf16.msra.mxu0 0
    %120 = vmatprep.subr.bf16.mxu0 0
    %121 = vmatpush1.bf16.msra.mxu0 0
    %122 = vmatprep.subr.bf16.mxu0 0
    %123 = vmatpush1.bf16.msra.mxu0 0
    %124 = vmatprep.subr.bf16.mxu0 0
    %125 = vmatpush1.bf16.msra.mxu0 0
    %126 = vmatprep.mubr.bf16.mxu0 0
    %127 = vmatmul.mubr.bf16.gmra.mrb[0].mxu0 %v92
    %v128 = vpop.f32.mrb[0].mxu0
    %v129 = vadd.f32 %v65, %v128
    %v130 = vpop.f32.mrb[0].mxu0
    %v131 = vpop.f32.mrb[0].mxu0
    %v132 = vadd.f32 %v65, %v131
    %v133 = vpop.f32.mrb[0].mxu0
    %134 = vdwg.mxu0
    %v135 = vld [vmem:[%s3] sm:$0xf]
    %v136 = vld [vmem:[%s3 + $0x4] sm:$0xf]
    %v137 = vld [vmem:[%s3 + $0x8] sm:$0xf]
    %v138 = vld [vmem:[%s3 + $0xc] sm:$0xf]
    %v139 = vld [vmem:[%s4] sm:$0xf]
    %v140 = vld [vmem:[%s4 + $0x4] sm:$0xf]
    %v141 = vld [vmem:[%s4 + $0x8] sm:$0xf]
    %v142 = vld [vmem:[%s4 + $0xc] sm:$0xf]
    %v143 = vld [vmem:[%s5] sm:$0xf]
    %v144 = vld [vmem:[%s5 + $0x4] sm:$0xf]
    %v145 = vld [vmem:[%s5 + $0x8] sm:$0xf]
    %v146 = vld [vmem:[%s5 + $0xc] sm:$0xf]
    %v147 = vld [vmem:[%s6] sm:$0xf]
    %v148 = vld [vmem:[%s6 + $0x4] sm:$0xf]
    %v149 = vld [vmem:[%s6 + $0x8] sm:$0xf]
    %v150 = vld [vmem:[%s6 + $0xc] sm:$0xf]
    %v151 = vld [vmem:[%s6 + $0x10] sm:$0xf]
    %v152 = vld [vmem:[%s6 + $0x14] sm:$0xf]
    %v153 = vld [vmem:[%s6 + $0x18] sm:$0xf]
    %v154 = vld [vmem:[%s6 + $0x1c] sm:$0xf]
    %v155 = vld [vmem:[%s6 + $0x20] sm:$0xf]
    %v156 = vld [vmem:[%s6 + $0x24] sm:$0xf]
    %v157 = vld [vmem:[%s6 + $0x28] sm:$0xf]
    %v158 = vld [vmem:[%s6 + $0x2c] sm:$0xf]
    %v159 = vld [vmem:[%s6 + $0x30] sm:$0xf]
    %v160 = vld [vmem:[%s6 + $0x34] sm:$0xf]
    %v161 = vld [vmem:[%s6 + $0x38] sm:$0xf]
    %v162 = vld [vmem:[%s6 + $0x3c] sm:$0xf]
    %v163 = vld [vmem:[%s7] sm:$0x1]
    %v164 = vld [vmem:[%s8] sm:$0x1]
    %v165 = vmul.f32 %v129, %v129
    %v166 = vmul.f32 %v132, %v132
    %vm167 = vcmask 261120
    %v168 = vsel %vm167, %v165, 0.0
    %169 = vadd.xlane.f32.xlu0 %v168
    %v170 = vpop.xlane.xlu0 %169
    %v171 = vsel %vm167, %v166, 0.0
    %172 = vadd.xlane.f32.xlu0 %v171
    %v173 = vpop.xlane.xlu0 %172
    %v174 = vrcp.pop 32.0
    %v175 = vmul.f32 %v170, %v174
    %v176 = vmul.f32 %v173, %v174
    %v177 = vadd.f32 %v175, 1e-06
    %v178 = vadd.f32 %v176, 1e-06
    %v179 = vrsqrt.pop %v177
    %v180 = vrsqrt.pop %v178
    %v181 = vmul.f32 %v129, %v179
    %v182 = vmul.f32 %v132, %v180
    %v184 = vlaneseq
    %v185 = vshrl.u32 %v184, 7
    %v186 = vsub.s32 0, %v185
    %v187 = vrot.slane %v163, %v186
    %v189 = vmul.f32 %v181, %v187
    %v190 = vmul.f32 %v182, %v187
    %v191 = vpack.c.bf16 %v190, %v189
    %v196 = vunpack.c.l.b16 %v135
    %v197 = vunpack.c.l.b16 %v136
    %v198 = vunpack.c.l.b16 %v137
    %v199 = vunpack.c.l.b16 %v138
    %v200 = vpack.c.b16 %v197, %v196
    %v201 = vpack.c.b16 %v199, %v198
    %v205 = vsel %vm167, %v191, 0
    %207 = vmatprep.subr.bf16.mxu0 0
    %208 = vmatpush1.bf16.msra.mxu0 %v200
    %209 = vmatprep.subr.bf16.mxu0 0
    %210 = vmatpush1.bf16.msra.mxu0 %v201
    %211 = vmatprep.subr.bf16.mxu0 0
    %212 = vmatpush1.bf16.msra.mxu0 0
    %213 = vmatprep.subr.bf16.mxu0 0
    %214 = vmatpush1.bf16.msra.mxu0 0
    %215 = vmatprep.subr.bf16.mxu0 0
    %216 = vmatpush1.bf16.msra.mxu0 0
    %217 = vmatprep.subr.bf16.mxu0 0
    %218 = vmatpush1.bf16.msra.mxu0 0
    %219 = vmatprep.subr.bf16.mxu0 0
    %220 = vmatpush1.bf16.msra.mxu0 0
    %221 = vmatprep.subr.bf16.mxu0 0
    %222 = vmatpush1.bf16.msra.mxu0 0
    %223 = vmatprep.subr.bf16.mxu0 0
    %224 = vmatpush1.bf16.msra.mxu0 0
    %225 = vmatprep.subr.bf16.mxu0 0
    %226 = vmatpush1.bf16.msra.mxu0 0
    %227 = vmatprep.subr.bf16.mxu0 0
    %228 = vmatpush1.bf16.msra.mxu0 0
    %229 = vmatprep.subr.bf16.mxu0 0
    %230 = vmatpush1.bf16.msra.mxu0 0
    %231 = vmatprep.subr.bf16.mxu0 0
    %232 = vmatpush1.bf16.msra.mxu0 0
    %233 = vmatprep.subr.bf16.mxu0 0
    %234 = vmatpush1.bf16.msra.mxu0 0
    %235 = vmatprep.subr.bf16.mxu0 0
    %236 = vmatpush1.bf16.msra.mxu0 0
    %237 = vmatprep.subr.bf16.mxu0 0
    %238 = vmatpush1.bf16.msra.mxu0 0
    %239 = vmatprep.mubr.bf16.mxu0 0
    %240 = vmatmul.mubr.bf16.gmra.mrb[0].mxu0 %v205
    %v241 = vpop.f32.mrb[0].mxu0
    %v242 = vadd.f32 0.0, %v241
    %v243 = vpop.f32.mrb[0].mxu0
    %v244 = vpop.f32.mrb[0].mxu0
    %v245 = vadd.f32 0.0, %v244
    %v246 = vpop.f32.mrb[0].mxu0
    %247 = vdwg.mxu0
    %v248 = vpack.c.bf16 %v242, %v242
    %250 = vrot.lane.b32.xlu0 %v248, 96
    %v251 = vpop.permute.xlu0 %250
    %vm252 = vcmask 64512
    %v254 = vsel %vm252, %v248, 0
    %v257 = vsel %vm252, %v251, 0
    %259 = vmatprep.subr.bf16.mxu0 0
    %260 = vmatpush1.bf16.xpose.msra.mxu0 %v257
    %261 = vmatprep.subr.bf16.mxu0 0
    %262 = vmatpush1.bf16.xpose.msra.mxu0 0
    %263 = vmatprep.subr.bf16.mxu0 0
    %264 = vmatpush1.bf16.xpose.msra.mxu0 0
    %265 = vmatprep.subr.bf16.mxu0 0
    %266 = vmatpush1.bf16.xpose.msra.mxu0 0
    %267 = vmatprep.subr.bf16.mxu0 0
    %268 = vmatpush1.bf16.xpose.msra.mxu0 0
    %269 = vmatprep.subr.bf16.mxu0 0
    %270 = vmatpush1.bf16.xpose.msra.mxu0 0
    %271 = vmatprep.subr.bf16.mxu0 0
    %272 = vmatpush1.bf16.xpose.msra.mxu0 0
    %273 = vmatprep.subr.bf16.mxu0 0
    %274 = vmatpush1.bf16.xpose.msra.mxu0 0
    %275 = vmatprep.subr.bf16.mxu0 0
    %276 = vmatpush1.bf16.xpose.msra.mxu0 0
    %277 = vmatprep.subr.bf16.mxu0 0
    %278 = vmatpush1.bf16.xpose.msra.mxu0 0
    %279 = vmatprep.subr.bf16.mxu0 0
    %280 = vmatpush1.bf16.xpose.msra.mxu0 0
    %281 = vmatprep.subr.bf16.mxu0 0
    %282 = vmatpush1.bf16.xpose.msra.mxu0 0
    %283 = vmatprep.subr.bf16.mxu0 0
    %284 = vmatpush1.bf16.xpose.msra.mxu0 0
    %285 = vmatprep.subr.bf16.mxu0 0
    %286 = vmatpush1.bf16.xpose.msra.mxu0 0
    %287 = vmatprep.subr.bf16.mxu0 0
    %288 = vmatpush1.bf16.xpose.msra.mxu0 0
    %289 = vmatprep.subr.bf16.mxu0 0
    %290 = vmatpush1.bf16.xpose.msra.mxu0 0
    %291 = vmatprep.mubr.bf16.mxu0 0
    %292 = vmatmul.mubr.bf16.gmra.mrb[0].mxu0 %v254
    %v293 = vpop.f32.mrb[0].mxu0
    %v294 = vadd.f32 0.0, %v293
    %v295 = vpop.f32.mrb[0].mxu0
    %v296 = vpop.f32.mrb[0].mxu0
    %v297 = vpop.f32.mrb[0].mxu0
    %298 = vdwg.mxu0
    %v299 = vsel %vm252, %v294, -inf
    %300 = vmax.xlane.f32.xlu0 %v299
    %v301 = vpop.xlane.xlu0 %300
    %v302 = vsub.f32 %v294, %v301
    %v303 = vmul.f32 %v302, 1.442695
    %v304 = vpow.pop %v303
    %v305 = vsel %vm252, %v304, 0.0
    %306 = vadd.xlane.f32.xlu0 %v305
    %v307 = vpop.xlane.xlu0 %306
    %v308 = vrcp.pop %v307
    %v309 = vmul.f32 %v304, %v308
    %v310 = vpack.c.bf16 %v309, %v309
    %311 = vrot.lane.b32.xlu0 %v248, 64
    %v312 = vpop.permute.xlu0 %311
    %v314 = vsel %vm252, %v310, 0
    %vm316 = vcmask 1043456
    %v318 = vsel %vm316, %v312, 0
    %320 = vmatprep.subr.bf16.mxu0 0
    %321 = vmatpush1.bf16.msra.mxu0 %v318
    %322 = vmatprep.subr.bf16.mxu0 0
    %323 = vmatpush1.bf16.msra.mxu0 0
    %324 = vmatprep.subr.bf16.mxu0 0
    %325 = vmatpush1.bf16.msra.mxu0 0
    %326 = vmatprep.subr.bf16.mxu0 0
    %327 = vmatpush1.bf16.msra.mxu0 0
    %328 = vmatprep.subr.bf16.mxu0 0
    %329 = vmatpush1.bf16.msra.mxu0 0
    %330 = vmatprep.subr.bf16.mxu0 0
    %331 = vmatpush1.bf16.msra.mxu0 0
    %332 = vmatprep.subr.bf16.mxu0 0
    %333 = vmatpush1.bf16.msra.mxu0 0
    %334 = vmatprep.subr.bf16.mxu0 0
    %335 = vmatpush1.bf16.msra.mxu0 0
    %336 = vmatprep.subr.bf16.mxu0 0
    %337 = vmatpush1.bf16.msra.mxu0 0
    %338 = vmatprep.subr.bf16.mxu0 0
    %339 = vmatpush1.bf16.msra.mxu0 0
    %340 = vmatprep.subr.bf16.mxu0 0
    %341 = vmatpush1.bf16.msra.mxu0 0
    %342 = vmatprep.subr.bf16.mxu0 0
    %343 = vmatpush1.bf16.msra.mxu0 0
    %344 = vmatprep.subr.bf16.mxu0 0
    %345 = vmatpush1.bf16.msra.mxu0 0
    %346 = vmatprep.subr.bf16.mxu0 0
    %347 = vmatpush1.bf16.msra.mxu0 0
    %348 = vmatprep.subr.bf16.mxu0 0
    %349 = vmatpush1.bf16.msra.mxu0 0
    %350 = vmatprep.subr.bf16.mxu0 0
    %351 = vmatpush1.bf16.msra.mxu0 0
    %352 = vmatprep.mubr.bf16.mxu0 0
    %353 = vmatmul.mubr.bf16.gmra.mrb[0].mxu0 %v314
    %v354 = vpop.f32.mrb[0].mxu0
    %v355 = vadd.f32 0.0, %v354
    %v356 = vpop.f32.mrb[0].mxu0
    %v357 = vpop.f32.mrb[0].mxu0
    %v358 = vpop.f32.mrb[0].mxu0
    %359 = vdwg.mxu0
    %360 = vrot.lane.b32.xlu0 %v248, 120
    %v361 = vpop.permute.xlu0 %360
    %362 = vrot.lane.b32.xlu0 %v248, 88
    %v363 = vpop.permute.xlu0 %362
    %v365 = vsel %vm252, %v361, 0
    %v368 = vsel %vm252, %v363, 0
    %370 = vmatprep.subr.bf16.mxu0 0
    %371 = vmatpush1.bf16.xpose.msra.mxu0 %v368
    %372 = vmatprep.subr.bf16.mxu0 0
    %373 = vmatpush1.bf16.xpose.msra.mxu0 0
    %374 = vmatprep.subr.bf16.mxu0 0
    %375 = vmatpush1.bf16.xpose.msra.mxu0 0
    %376 = vmatprep.subr.bf16.mxu0 0
    %377 = vmatpush1.bf16.xpose.msra.mxu0 0
    %378 = vmatprep.subr.bf16.mxu0 0
    %379 = vmatpush1.bf16.xpose.msra.mxu0 0
    %380 = vmatprep.subr.bf16.mxu0 0
    %381 = vmatpush1.bf16.xpose.msra.mxu0 0
    %382 = vmatprep.subr.bf16.mxu0 0
    %383 = vmatpush1.bf16.xpose.msra.mxu0 0
    %384 = vmatprep.subr.bf16.mxu0 0
    %385 = vmatpush1.bf16.xpose.msra.mxu0 0
    %386 = vmatprep.subr.bf16.mxu0 0
    %387 = vmatpush1.bf16.xpose.msra.mxu0 0
    %388 = vmatprep.subr.bf16.mxu0 0
    %389 = vmatpush1.bf16.xpose.msra.mxu0 0
    %390 = vmatprep.subr.bf16.mxu0 0
    %391 = vmatpush1.bf16.xpose.msra.mxu0 0
    %392 = vmatprep.subr.bf16.mxu0 0
    %393 = vmatpush1.bf16.xpose.msra.mxu0 0
    %394 = vmatprep.subr.bf16.mxu0 0
    %395 = vmatpush1.bf16.xpose.msra.mxu0 0
    %396 = vmatprep.subr.bf16.mxu0 0
    %397 = vmatpush1.bf16.xpose.msra.mxu0 0
    %398 = vmatprep.subr.bf16.mxu0 0
    %399 = vmatpush1.bf16.xpose.msra.mxu0 0
    %400 = vmatprep.subr.bf16.mxu0 0
    %401 = vmatpush1.bf16.xpose.msra.mxu0 0
    %402 = vmatprep.mubr.bf16.mxu0 0
    %403 = vmatmul.mubr.bf16.gmra.mrb[0].mxu0 %v365
    %v404 = vpop.f32.mrb[0].mxu0
    %v405 = vadd.f32 0.0, %v404
    %v406 = vpop.f32.mrb[0].mxu0
    %v407 = vpop.f32.mrb[0].mxu0
    %v408 = vpop.f32.mrb[0].mxu0
    %409 = vdwg.mxu0
    %v410 = vsel %vm252, %v405, -inf
    %411 = vmax.xlane.f32.xlu0 %v410
    %v412 = vpop.xlane.xlu0 %411
    %v413 = vsub.f32 %v405, %v412
    %v414 = vmul.f32 %v413, 1.442695
    %v415 = vpow.pop %v414
    %v416 = vsel %vm252, %v415, 0.0
    %417 = vadd.xlane.f32.xlu0 %v416
    %v418 = vpop.xlane.xlu0 %417
    %v419 = vrcp.pop %v418
    %v420 = vmul.f32 %v415, %v419
    %v421 = vpack.c.bf16 %v420, %v420
    %422 = vrot.lane.b32.xlu0 %v248, 56
    %v423 = vpop.permute.xlu0 %422
    %v425 = vsel %vm252, %v421, 0
    %v428 = vsel %vm316, %v423, 0
    %430 = vmatprep.subr.bf16.mxu0 0
    %431 = vmatpush1.bf16.msra.mxu0 %v428
    %432 = vmatprep.subr.bf16.mxu0 0
    %433 = vmatpush1.bf16.msra.mxu0 0
    %434 = vmatprep.subr.bf16.mxu0 0
    %435 = vmatpush1.bf16.msra.mxu0 0
    %436 = vmatprep.subr.bf16.mxu0 0
    %437 = vmatpush1.bf16.msra.mxu0 0
    %438 = vmatprep.subr.bf16.mxu0 0
    %439 = vmatpush1.bf16.msra.mxu0 0
    %440 = vmatprep.subr.bf16.mxu0 0
    %441 = vmatpush1.bf16.msra.mxu0 0
    %442 = vmatprep.subr.bf16.mxu0 0
    %443 = vmatpush1.bf16.msra.mxu0 0
    %444 = vmatprep.subr.bf16.mxu0 0
    %445 = vmatpush1.bf16.msra.mxu0 0
    %446 = vmatprep.subr.bf16.mxu0 0
    %447 = vmatpush1.bf16.msra.mxu0 0
    %448 = vmatprep.subr.bf16.mxu0 0
    %449 = vmatpush1.bf16.msra.mxu0 0
    %450 = vmatprep.subr.bf16.mxu0 0
    %451 = vmatpush1.bf16.msra.mxu0 0
    %452 = vmatprep.subr.bf16.mxu0 0
    %453 = vmatpush1.bf16.msra.mxu0 0
    %454 = vmatprep.subr.bf16.mxu0 0
    %455 = vmatpush1.bf16.msra.mxu0 0
    %456 = vmatprep.subr.bf16.mxu0 0
    %457 = vmatpush1.bf16.msra.mxu0 0
    %458 = vmatprep.subr.bf16.mxu0 0
    %459 = vmatpush1.bf16.msra.mxu0 0
    %460 = vmatprep.subr.bf16.mxu0 0
    %461 = vmatpush1.bf16.msra.mxu0 0
    %462 = vmatprep.mubr.bf16.mxu0 0
    %463 = vmatmul.mubr.bf16.gmra.mrb[0].mxu0 %v425
    %v464 = vpop.f32.mrb[0].mxu0
    %v465 = vadd.f32 0.0, %v464
    %v466 = vpop.f32.mrb[0].mxu0
    %v467 = vpop.f32.mrb[0].mxu0
    %v468 = vpop.f32.mrb[0].mxu0
    %469 = vdwg.mxu0
    %470 = vrot.lane.b32.xlu0 %v248, 112
    %v471 = vpop.permute.xlu0 %470
    %472 = vrot.lane.b32.xlu0 %v248, 80
    %v473 = vpop.permute.xlu0 %472
    %v475 = vsel %vm252, %v471, 0
    %v478 = vsel %vm252, %v473, 0
    %480 = vmatprep.subr.bf16.mxu0 0
    %481 = vmatpush1.bf16.xpose.msra.mxu0 %v478
    %482 = vmatprep.subr.bf16.mxu0 0
    %483 = vmatpush1.bf16.xpose.msra.mxu0 0
    %484 = vmatprep.subr.bf16.mxu0 0
    %485 = vmatpush1.bf16.xpose.msra.mxu0 0
    %486 = vmatprep.subr.bf16.mxu0 0
    %487 = vmatpush1.bf16.xpose.msra.mxu0 0
    %488 = vmatprep.subr.bf16.mxu0 0
    %489 = vmatpush1.bf16.xpose.msra.mxu0 0
    %490 = vmatprep.subr.bf16.mxu0 0
    %491 = vmatpush1.bf16.xpose.msra.mxu0 0
    %492 = vmatprep.subr.bf16.mxu0 0
    %493 = vmatpush1.bf16.xpose.msra.mxu0 0
    %494 = vmatprep.subr.bf16.mxu0 0
    %495 = vmatpush1.bf16.xpose.msra.mxu0 0
    %496 = vmatprep.subr.bf16.mxu0 0
    %497 = vmatpush1.bf16.xpose.msra.mxu0 0
    %498 = vmatprep.subr.bf16.mxu0 0
    %499 = vmatpush1.bf16.xpose.msra.mxu0 0
    %500 = vmatprep.subr.bf16.mxu0 0
    %501 = vmatpush1.bf16.xpose.msra.mxu0 0
    %502 = vmatprep.subr.bf16.mxu0 0
    %503 = vmatpush1.bf16.xpose.msra.mxu0 0
    %504 = vmatprep.subr.bf16.mxu0 0
    %505 = vmatpush1.bf16.xpose.msra.mxu0 0
    %506 = vmatprep.subr.bf16.mxu0 0
    %507 = vmatpush1.bf16.xpose.msra.mxu0 0
    %508 = vmatprep.subr.bf16.mxu0 0
    %509 = vmatpush1.bf16.xpose.msra.mxu0 0
    %510 = vmatprep.subr.bf16.mxu0 0
    %511 = vmatpush1.bf16.xpose.msra.mxu0 0
    %512 = vmatprep.mubr.bf16.mxu0 0
    %513 = vmatmul.mubr.bf16.gmra.mrb[0].mxu0 %v475
    %v514 = vpop.f32.mrb[0].mxu0
    %v515 = vadd.f32 0.0, %v514
    %v516 = vpop.f32.mrb[0].mxu0
    %v517 = vpop.f32.mrb[0].mxu0
    %v518 = vpop.f32.mrb[0].mxu0
    %519 = vdwg.mxu0
    %v520 = vsel %vm252, %v515, -inf
    %521 = vmax.xlane.f32.xlu0 %v520
    %v522 = vpop.xlane.xlu0 %521
    %v523 = vsub.f32 %v515, %v522
    %v524 = vmul.f32 %v523, 1.442695
    %v525 = vpow.pop %v524
    %v526 = vsel %vm252, %v525, 0.0
    %527 = vadd.xlane.f32.xlu0 %v526
    %v528 = vpop.xlane.xlu0 %527
    %v529 = vrcp.pop %v528
    %v530 = vmul.f32 %v525, %v529
    %v531 = vpack.c.bf16 %v530, %v530
    %532 = vrot.lane.b32.xlu0 %v248, 48
    %v533 = vpop.permute.xlu0 %532
    %v535 = vsel %vm252, %v531, 0
    %v538 = vsel %vm316, %v533, 0
    %540 = vmatprep.subr.bf16.mxu0 0
    %541 = vmatpush1.bf16.msra.mxu0 %v538
    %542 = vmatprep.subr.bf16.mxu0 0
    %543 = vmatpush1.bf16.msra.mxu0 0
    %544 = vmatprep.subr.bf16.mxu0 0
    %545 = vmatpush1.bf16.msra.mxu0 0
    %546 = vmatprep.subr.bf16.mxu0 0
    %547 = vmatpush1.bf16.msra.mxu0 0
    %548 = vmatprep.subr.bf16.mxu0 0
    %549 = vmatpush1.bf16.msra.mxu0 0
    %550 = vmatprep.subr.bf16.mxu0 0
    %551 = vmatpush1.bf16.msra.mxu0 0
    %552 = vmatprep.subr.bf16.mxu0 0
    %553 = vmatpush1.bf16.msra.mxu0 0
    %554 = vmatprep.subr.bf16.mxu0 0
    %555 = vmatpush1.bf16.msra.mxu0 0
    %556 = vmatprep.subr.bf16.mxu0 0
    %557 = vmatpush1.bf16.msra.mxu0 0
    %558 = vmatprep.subr.bf16.mxu0 0
    %559 = vmatpush1.bf16.msra.mxu0 0
    %560 = vmatprep.subr.bf16.mxu0 0
    %561 = vmatpush1.bf16.msra.mxu0 0
    %562 = vmatprep.subr.bf16.mxu0 0
    %563 = vmatpush1.bf16.msra.mxu0 0
    %564 = vmatprep.subr.bf16.mxu0 0
    %565 = vmatpush1.bf16.msra.mxu0 0
    %566 = vmatprep.subr.bf16.mxu0 0
    %567 = vmatpush1.bf16.msra.mxu0 0
    %568 = vmatprep.subr.bf16.mxu0 0
    %569 = vmatpush1.bf16.msra.mxu0 0
    %570 = vmatprep.subr.bf16.mxu0 0
    %571 = vmatpush1.bf16.msra.mxu0 0
    %572 = vmatprep.mubr.bf16.mxu0 0
    %573 = vmatmul.mubr.bf16.gmra.mrb[0].mxu0 %v535
    %v574 = vpop.f32.mrb[0].mxu0
    %v575 = vadd.f32 0.0, %v574
    %v576 = vpop.f32.mrb[0].mxu0
    %v577 = vpop.f32.mrb[0].mxu0
    %v578 = vpop.f32.mrb[0].mxu0
    %579 = vdwg.mxu0
    %580 = vrot.lane.b32.xlu0 %v248, 104
    %v581 = vpop.permute.xlu0 %580
    %582 = vrot.lane.b32.xlu0 %v248, 72
    %v583 = vpop.permute.xlu0 %582
    %v585 = vsel %vm252, %v581, 0
    %v588 = vsel %vm252, %v583, 0
    %590 = vmatprep.subr.bf16.mxu0 0
    %591 = vmatpush1.bf16.xpose.msra.mxu0 %v588
    %592 = vmatprep.subr.bf16.mxu0 0
    %593 = vmatpush1.bf16.xpose.msra.mxu0 0
    %594 = vmatprep.subr.bf16.mxu0 0
    %595 = vmatpush1.bf16.xpose.msra.mxu0 0
    %596 = vmatprep.subr.bf16.mxu0 0
    %597 = vmatpush1.bf16.xpose.msra.mxu0 0
    %598 = vmatprep.subr.bf16.mxu0 0
    %599 = vmatpush1.bf16.xpose.msra.mxu0 0
    %600 = vmatprep.subr.bf16.mxu0 0
    %601 = vmatpush1.bf16.xpose.msra.mxu0 0
    %602 = vmatprep.subr.bf16.mxu0 0
    %603 = vmatpush1.bf16.xpose.msra.mxu0 0
    %604 = vmatprep.subr.bf16.mxu0 0
    %605 = vmatpush1.bf16.xpose.msra.mxu0 0
    %606 = vmatprep.subr.bf16.mxu0 0
    %607 = vmatpush1.bf16.xpose.msra.mxu0 0
    %608 = vmatprep.subr.bf16.mxu0 0
    %609 = vmatpush1.bf16.xpose.msra.mxu0 0
    %610 = vmatprep.subr.bf16.mxu0 0
    %611 = vmatpush1.bf16.xpose.msra.mxu0 0
    %612 = vmatprep.subr.bf16.mxu0 0
    %613 = vmatpush1.bf16.xpose.msra.mxu0 0
    %614 = vmatprep.subr.bf16.mxu0 0
    %615 = vmatpush1.bf16.xpose.msra.mxu0 0
    %616 = vmatprep.subr.bf16.mxu0 0
    %617 = vmatpush1.bf16.xpose.msra.mxu0 0
    %618 = vmatprep.subr.bf16.mxu0 0
    %619 = vmatpush1.bf16.xpose.msra.mxu0 0
    %620 = vmatprep.subr.bf16.mxu0 0
    %621 = vmatpush1.bf16.xpose.msra.mxu0 0
    %622 = vmatprep.mubr.bf16.mxu0 0
    %623 = vmatmul.mubr.bf16.gmra.mrb[0].mxu0 %v585
    %v624 = vpop.f32.mrb[0].mxu0
    %v625 = vadd.f32 0.0, %v624
    %v626 = vpop.f32.mrb[0].mxu0
    %v627 = vpop.f32.mrb[0].mxu0
    %v628 = vpop.f32.mrb[0].mxu0
    %629 = vdwg.mxu0
    %v630 = vsel %vm252, %v625, -inf
    %631 = vmax.xlane.f32.xlu0 %v630
    %v632 = vpop.xlane.xlu0 %631
    %v633 = vsub.f32 %v625, %v632
    %v634 = vmul.f32 %v633, 1.442695
    %v635 = vpow.pop %v634
    %v636 = vsel %vm252, %v635, 0.0
    %637 = vadd.xlane.f32.xlu0 %v636
    %v638 = vpop.xlane.xlu0 %637
    %v639 = vrcp.pop %v638
    %v640 = vmul.f32 %v635, %v639
    %v641 = vpack.c.bf16 %v640, %v640
    %642 = vrot.lane.b32.xlu0 %v248, 40
    %v643 = vpop.permute.xlu0 %642
    %v645 = vsel %vm252, %v641, 0
    %v648 = vsel %vm316, %v643, 0
    %650 = vmatprep.subr.bf16.mxu0 0
    %651 = vmatpush1.bf16.msra.mxu0 %v648
    %652 = vmatprep.subr.bf16.mxu0 0
    %653 = vmatpush1.bf16.msra.mxu0 0
    %654 = vmatprep.subr.bf16.mxu0 0
    %655 = vmatpush1.bf16.msra.mxu0 0
    %656 = vmatprep.subr.bf16.mxu0 0
    %657 = vmatpush1.bf16.msra.mxu0 0
    %658 = vmatprep.subr.bf16.mxu0 0
    %659 = vmatpush1.bf16.msra.mxu0 0
    %660 = vmatprep.subr.bf16.mxu0 0
    %661 = vmatpush1.bf16.msra.mxu0 0
    %662 = vmatprep.subr.bf16.mxu0 0
    %663 = vmatpush1.bf16.msra.mxu0 0
    %664 = vmatprep.subr.bf16.mxu0 0
    %665 = vmatpush1.bf16.msra.mxu0 0
    %666 = vmatprep.subr.bf16.mxu0 0
    %667 = vmatpush1.bf16.msra.mxu0 0
    %668 = vmatprep.subr.bf16.mxu0 0
    %669 = vmatpush1.bf16.msra.mxu0 0
    %670 = vmatprep.subr.bf16.mxu0 0
    %671 = vmatpush1.bf16.msra.mxu0 0
    %672 = vmatprep.subr.bf16.mxu0 0
    %673 = vmatpush1.bf16.msra.mxu0 0
    %674 = vmatprep.subr.bf16.mxu0 0
    %675 = vmatpush1.bf16.msra.mxu0 0
    %676 = vmatprep.subr.bf16.mxu0 0
    %677 = vmatpush1.bf16.msra.mxu0 0
    %678 = vmatprep.subr.bf16.mxu0 0
    %679 = vmatpush1.bf16.msra.mxu0 0
    %680 = vmatprep.subr.bf16.mxu0 0
    %681 = vmatpush1.bf16.msra.mxu0 0
    %682 = vmatprep.mubr.bf16.mxu0 0
    %683 = vmatmul.mubr.bf16.gmra.mrb[0].mxu0 %v645
    %v684 = vpop.f32.mrb[0].mxu0
    %v685 = vadd.f32 0.0, %v684
    %v686 = vpop.f32.mrb[0].mxu0
    %v687 = vpop.f32.mrb[0].mxu0
    %v688 = vpop.f32.mrb[0].mxu0
    %689 = vdwg.mxu0
    %691 = vrot.lane.b32.xlu0 %v465, 8
    %v692 = vpop.permute.xlu0 %691
    %695 = vrot.lane.b32.xlu0 %v575, 16
    %v696 = vpop.permute.xlu0 %695
    %699 = vrot.lane.b32.xlu0 %v685, 24
    %v700 = vpop.permute.xlu0 %699
    %v702 = vsel %vm252, %v355, %v692
    %vm703 = vcmask 130048
    %v704 = vsel %vm703, %v702, %v696
    %vm705 = vcmask 195584
    %v706 = vsel %vm705, %v704, %v700
    %v707 = vpack.c.bf16 %v245, %v245
    %709 = vrot.lane.b32.xlu0 %v707, 96
    %v710 = vpop.permute.xlu0 %709
    %v712 = vsel %vm252, %v707, 0
    %v715 = vsel %vm252, %v710, 0
    %717 = vmatprep.subr.bf16.mxu0 0
    %718 = vmatpush1.bf16.xpose.msra.mxu0 %v715
    %719 = vmatprep.subr.bf16.mxu0 0
    %720 = vmatpush1.bf16.xpose.msra.mxu0 0
    %721 = vmatprep.subr.bf16.mxu0 0
    %722 = vmatpush1.bf16.xpose.msra.mxu0 0
    %723 = vmatprep.subr.bf16.mxu0 0
    %724 = vmatpush1.bf16.xpose.msra.mxu0 0
    %725 = vmatprep.subr.bf16.mxu0 0
    %726 = vmatpush1.bf16.xpose.msra.mxu0 0
    %727 = vmatprep.subr.bf16.mxu0 0
    %728 = vmatpush1.bf16.xpose.msra.mxu0 0
    %729 = vmatprep.subr.bf16.mxu0 0
    %730 = vmatpush1.bf16.xpose.msra.mxu0 0
    %731 = vmatprep.subr.bf16.mxu0 0
    %732 = vmatpush1.bf16.xpose.msra.mxu0 0
    %733 = vmatprep.subr.bf16.mxu0 0
    %734 = vmatpush1.bf16.xpose.msra.mxu0 0
    %735 = vmatprep.subr.bf16.mxu0 0
    %736 = vmatpush1.bf16.xpose.msra.mxu0 0
    %737 = vmatprep.subr.bf16.mxu0 0
    %738 = vmatpush1.bf16.xpose.msra.mxu0 0
    %739 = vmatprep.subr.bf16.mxu0 0
    %740 = vmatpush1.bf16.xpose.msra.mxu0 0
    %741 = vmatprep.subr.bf16.mxu0 0
    %742 = vmatpush1.bf16.xpose.msra.mxu0 0
    %743 = vmatprep.subr.bf16.mxu0 0
    %744 = vmatpush1.bf16.xpose.msra.mxu0 0
    %745 = vmatprep.subr.bf16.mxu0 0
    %746 = vmatpush1.bf16.xpose.msra.mxu0 0
    %747 = vmatprep.subr.bf16.mxu0 0
    %748 = vmatpush1.bf16.xpose.msra.mxu0 0
    %749 = vmatprep.mubr.bf16.mxu0 0
    %750 = vmatmul.mubr.bf16.gmra.mrb[0].mxu0 %v712
    %v751 = vpop.f32.mrb[0].mxu0
    %v752 = vadd.f32 0.0, %v751
    %v753 = vpop.f32.mrb[0].mxu0
    %v754 = vpop.f32.mrb[0].mxu0
    %v755 = vpop.f32.mrb[0].mxu0
    %756 = vdwg.mxu0
    %v757 = vsel %vm252, %v752, -inf
    %758 = vmax.xlane.f32.xlu0 %v757
    %v759 = vpop.xlane.xlu0 %758
    %v760 = vsub.f32 %v752, %v759
    %v761 = vmul.f32 %v760, 1.442695
    %v762 = vpow.pop %v761
    %v763 = vsel %vm252, %v762, 0.0
    %764 = vadd.xlane.f32.xlu0 %v763
    %v765 = vpop.xlane.xlu0 %764
    %v766 = vrcp.pop %v765
    %v767 = vmul.f32 %v762, %v766
    %v768 = vpack.c.bf16 %v767, %v767
    %769 = vrot.lane.b32.xlu0 %v707, 64
    %v770 = vpop.permute.xlu0 %769
    %v772 = vsel %vm252, %v768, 0
    %v775 = vsel %vm316, %v770, 0
    %777 = vmatprep.subr.bf16.mxu0 0
    %778 = vmatpush1.bf16.msra.mxu0 %v775
    %779 = vmatprep.subr.bf16.mxu0 0
    %780 = vmatpush1.bf16.msra.mxu0 0
    %781 = vmatprep.subr.bf16.mxu0 0
    %782 = vmatpush1.bf16.msra.mxu0 0
    %783 = vmatprep.subr.bf16.mxu0 0
    %784 = vmatpush1.bf16.msra.mxu0 0
    %785 = vmatprep.subr.bf16.mxu0 0
    %786 = vmatpush1.bf16.msra.mxu0 0
    %787 = vmatprep.subr.bf16.mxu0 0
    %788 = vmatpush1.bf16.msra.mxu0 0
    %789 = vmatprep.subr.bf16.mxu0 0
    %790 = vmatpush1.bf16.msra.mxu0 0
    %791 = vmatprep.subr.bf16.mxu0 0
    %792 = vmatpush1.bf16.msra.mxu0 0
    %793 = vmatprep.subr.bf16.mxu0 0
    %794 = vmatpush1.bf16.msra.mxu0 0
    %795 = vmatprep.subr.bf16.mxu0 0
    %796 = vmatpush1.bf16.msra.mxu0 0
    %797 = vmatprep.subr.bf16.mxu0 0
    %798 = vmatpush1.bf16.msra.mxu0 0
    %799 = vmatprep.subr.bf16.mxu0 0
    %800 = vmatpush1.bf16.msra.mxu0 0
    %801 = vmatprep.subr.bf16.mxu0 0
    %802 = vmatpush1.bf16.msra.mxu0 0
    %803 = vmatprep.subr.bf16.mxu0 0
    %804 = vmatpush1.bf16.msra.mxu0 0
    %805 = vmatprep.subr.bf16.mxu0 0
    %806 = vmatpush1.bf16.msra.mxu0 0
    %807 = vmatprep.subr.bf16.mxu0 0
    %808 = vmatpush1.bf16.msra.mxu0 0
    %809 = vmatprep.mubr.bf16.mxu0 0
    %810 = vmatmul.mubr.bf16.gmra.mrb[0].mxu0 %v772
    %v811 = vpop.f32.mrb[0].mxu0
    %v812 = vadd.f32 0.0, %v811
    %v813 = vpop.f32.mrb[0].mxu0
    %v814 = vpop.f32.mrb[0].mxu0
    %v815 = vpop.f32.mrb[0].mxu0
    %816 = vdwg.mxu0
    %817 = vrot.lane.b32.xlu0 %v707, 120
    %v818 = vpop.permute.xlu0 %817
    %819 = vrot.lane.b32.xlu0 %v707, 88
    %v820 = vpop.permute.xlu0 %819
    %v822 = vsel %vm252, %v818, 0
    %v825 = vsel %vm252, %v820, 0
    %827 = vmatprep.subr.bf16.mxu0 0
    %828 = vmatpush1.bf16.xpose.msra.mxu0 %v825
    %829 = vmatprep.subr.bf16.mxu0 0
    %830 = vmatpush1.bf16.xpose.msra.mxu0 0
    %831 = vmatprep.subr.bf16.mxu0 0
    %832 = vmatpush1.bf16.xpose.msra.mxu0 0
    %833 = vmatprep.subr.bf16.mxu0 0
    %834 = vmatpush1.bf16.xpose.msra.mxu0 0
    %835 = vmatprep.subr.bf16.mxu0 0
    %836 = vmatpush1.bf16.xpose.msra.mxu0 0
    %837 = vmatprep.subr.bf16.mxu0 0
    %838 = vmatpush1.bf16.xpose.msra.mxu0 0
    %839 = vmatprep.subr.bf16.mxu0 0
    %840 = vmatpush1.bf16.xpose.msra.mxu0 0
    %841 = vmatprep.subr.bf16.mxu0 0
    %842 = vmatpush1.bf16.xpose.msra.mxu0 0
    %843 = vmatprep.subr.bf16.mxu0 0
    %844 = vmatpush1.bf16.xpose.msra.mxu0 0
    %845 = vmatprep.subr.bf16.mxu0 0
    %846 = vmatpush1.bf16.xpose.msra.mxu0 0
    %847 = vmatprep.subr.bf16.mxu0 0
    %848 = vmatpush1.bf16.xpose.msra.mxu0 0
    %849 = vmatprep.subr.bf16.mxu0 0
    %850 = vmatpush1.bf16.xpose.msra.mxu0 0
    %851 = vmatprep.subr.bf16.mxu0 0
    %852 = vmatpush1.bf16.xpose.msra.mxu0 0
    %853 = vmatprep.subr.bf16.mxu0 0
    %854 = vmatpush1.bf16.xpose.msra.mxu0 0
    %855 = vmatprep.subr.bf16.mxu0 0
    %856 = vmatpush1.bf16.xpose.msra.mxu0 0
    %857 = vmatprep.subr.bf16.mxu0 0
    %858 = vmatpush1.bf16.xpose.msra.mxu0 0
    %859 = vmatprep.mubr.bf16.mxu0 0
    %860 = vmatmul.mubr.bf16.gmra.mrb[0].mxu0 %v822
    %v861 = vpop.f32.mrb[0].mxu0
    %v862 = vadd.f32 0.0, %v861
    %v863 = vpop.f32.mrb[0].mxu0
    %v864 = vpop.f32.mrb[0].mxu0
    %v865 = vpop.f32.mrb[0].mxu0
    %866 = vdwg.mxu0
    %v867 = vsel %vm252, %v862, -inf
    %868 = vmax.xlane.f32.xlu0 %v867
    %v869 = vpop.xlane.xlu0 %868
    %v870 = vsub.f32 %v862, %v869
    %v871 = vmul.f32 %v870, 1.442695
    %v872 = vpow.pop %v871
    %v873 = vsel %vm252, %v872, 0.0
    %874 = vadd.xlane.f32.xlu0 %v873
    %v875 = vpop.xlane.xlu0 %874
    %v876 = vrcp.pop %v875
    %v877 = vmul.f32 %v872, %v876
    %v878 = vpack.c.bf16 %v877, %v877
    %879 = vrot.lane.b32.xlu0 %v707, 56
    %v880 = vpop.permute.xlu0 %879
    %v882 = vsel %vm252, %v878, 0
    %v885 = vsel %vm316, %v880, 0
    %887 = vmatprep.subr.bf16.mxu0 0
    %888 = vmatpush1.bf16.msra.mxu0 %v885
    %889 = vmatprep.subr.bf16.mxu0 0
    %890 = vmatpush1.bf16.msra.mxu0 0
    %891 = vmatprep.subr.bf16.mxu0 0
    %892 = vmatpush1.bf16.msra.mxu0 0
    %893 = vmatprep.subr.bf16.mxu0 0
    %894 = vmatpush1.bf16.msra.mxu0 0
    %895 = vmatprep.subr.bf16.mxu0 0
    %896 = vmatpush1.bf16.msra.mxu0 0
    %897 = vmatprep.subr.bf16.mxu0 0
    %898 = vmatpush1.bf16.msra.mxu0 0
    %899 = vmatprep.subr.bf16.mxu0 0
    %900 = vmatpush1.bf16.msra.mxu0 0
    %901 = vmatprep.subr.bf16.mxu0 0
    %902 = vmatpush1.bf16.msra.mxu0 0
    %903 = vmatprep.subr.bf16.mxu0 0
    %904 = vmatpush1.bf16.msra.mxu0 0
    %905 = vmatprep.subr.bf16.mxu0 0
    %906 = vmatpush1.bf16.msra.mxu0 0
    %907 = vmatprep.subr.bf16.mxu0 0
    %908 = vmatpush1.bf16.msra.mxu0 0
    %909 = vmatprep.subr.bf16.mxu0 0
    %910 = vmatpush1.bf16.msra.mxu0 0
    %911 = vmatprep.subr.bf16.mxu0 0
    %912 = vmatpush1.bf16.msra.mxu0 0
    %913 = vmatprep.subr.bf16.mxu0 0
    %914 = vmatpush1.bf16.msra.mxu0 0
    %915 = vmatprep.subr.bf16.mxu0 0
    %916 = vmatpush1.bf16.msra.mxu0 0
    %917 = vmatprep.subr.bf16.mxu0 0
    %918 = vmatpush1.bf16.msra.mxu0 0
    %919 = vmatprep.mubr.bf16.mxu0 0
    %920 = vmatmul.mubr.bf16.gmra.mrb[0].mxu0 %v882
    %v921 = vpop.f32.mrb[0].mxu0
    %v922 = vadd.f32 0.0, %v921
    %v923 = vpop.f32.mrb[0].mxu0
    %v924 = vpop.f32.mrb[0].mxu0
    %v925 = vpop.f32.mrb[0].mxu0
    %926 = vdwg.mxu0
    %927 = vrot.lane.b32.xlu0 %v707, 112
    %v928 = vpop.permute.xlu0 %927
    %929 = vrot.lane.b32.xlu0 %v707, 80
    %v930 = vpop.permute.xlu0 %929
    %v932 = vsel %vm252, %v928, 0
    %v935 = vsel %vm252, %v930, 0
    %937 = vmatprep.subr.bf16.mxu0 0
    %938 = vmatpush1.bf16.xpose.msra.mxu0 %v935
    %939 = vmatprep.subr.bf16.mxu0 0
    %940 = vmatpush1.bf16.xpose.msra.mxu0 0
    %941 = vmatprep.subr.bf16.mxu0 0
    %942 = vmatpush1.bf16.xpose.msra.mxu0 0
    %943 = vmatprep.subr.bf16.mxu0 0
    %944 = vmatpush1.bf16.xpose.msra.mxu0 0
    %945 = vmatprep.subr.bf16.mxu0 0
    %946 = vmatpush1.bf16.xpose.msra.mxu0 0
    %947 = vmatprep.subr.bf16.mxu0 0
    %948 = vmatpush1.bf16.xpose.msra.mxu0 0
    %949 = vmatprep.subr.bf16.mxu0 0
    %950 = vmatpush1.bf16.xpose.msra.mxu0 0
    %951 = vmatprep.subr.bf16.mxu0 0
    %952 = vmatpush1.bf16.xpose.msra.mxu0 0
    %953 = vmatprep.subr.bf16.mxu0 0
    %954 = vmatpush1.bf16.xpose.msra.mxu0 0
    %955 = vmatprep.subr.bf16.mxu0 0
    %956 = vmatpush1.bf16.xpose.msra.mxu0 0
    %957 = vmatprep.subr.bf16.mxu0 0
    %958 = vmatpush1.bf16.xpose.msra.mxu0 0
    %959 = vmatprep.subr.bf16.mxu0 0
    %960 = vmatpush1.bf16.xpose.msra.mxu0 0
    %961 = vmatprep.subr.bf16.mxu0 0
    %962 = vmatpush1.bf16.xpose.msra.mxu0 0
    %963 = vmatprep.subr.bf16.mxu0 0
    %964 = vmatpush1.bf16.xpose.msra.mxu0 0
    %965 = vmatprep.subr.bf16.mxu0 0
    %966 = vmatpush1.bf16.xpose.msra.mxu0 0
    %967 = vmatprep.subr.bf16.mxu0 0
    %968 = vmatpush1.bf16.xpose.msra.mxu0 0
    %969 = vmatprep.mubr.bf16.mxu0 0
    %970 = vmatmul.mubr.bf16.gmra.mrb[0].mxu0 %v932
    %v971 = vpop.f32.mrb[0].mxu0
    %v972 = vadd.f32 0.0, %v971
    %v973 = vpop.f32.mrb[0].mxu0
    %v974 = vpop.f32.mrb[0].mxu0
    %v975 = vpop.f32.mrb[0].mxu0
    %976 = vdwg.mxu0
    %v977 = vsel %vm252, %v972, -inf
    %978 = vmax.xlane.f32.xlu0 %v977
    %v979 = vpop.xlane.xlu0 %978
    %v980 = vsub.f32 %v972, %v979
    %v981 = vmul.f32 %v980, 1.442695
    %v982 = vpow.pop %v981
    %v983 = vsel %vm252, %v982, 0.0
    %984 = vadd.xlane.f32.xlu0 %v983
    %v985 = vpop.xlane.xlu0 %984
    %v986 = vrcp.pop %v985
    %v987 = vmul.f32 %v982, %v986
    %v988 = vpack.c.bf16 %v987, %v987
    %989 = vrot.lane.b32.xlu0 %v707, 48
    %v990 = vpop.permute.xlu0 %989
    %v992 = vsel %vm252, %v988, 0
    %v995 = vsel %vm316, %v990, 0
    %997 = vmatprep.subr.bf16.mxu0 0
    %998 = vmatpush1.bf16.msra.mxu0 %v995
    %999 = vmatprep.subr.bf16.mxu0 0
    %1000 = vmatpush1.bf16.msra.mxu0 0
    %1001 = vmatprep.subr.bf16.mxu0 0
    %1002 = vmatpush1.bf16.msra.mxu0 0
    %1003 = vmatprep.subr.bf16.mxu0 0
    %1004 = vmatpush1.bf16.msra.mxu0 0
    %1005 = vmatprep.subr.bf16.mxu0 0
    %1006 = vmatpush1.bf16.msra.mxu0 0
    %1007 = vmatprep.subr.bf16.mxu0 0
    %1008 = vmatpush1.bf16.msra.mxu0 0
    %1009 = vmatprep.subr.bf16.mxu0 0
    %1010 = vmatpush1.bf16.msra.mxu0 0
    %1011 = vmatprep.subr.bf16.mxu0 0
    %1012 = vmatpush1.bf16.msra.mxu0 0
    %1013 = vmatprep.subr.bf16.mxu0 0
    %1014 = vmatpush1.bf16.msra.mxu0 0
    %1015 = vmatprep.subr.bf16.mxu0 0
    %1016 = vmatpush1.bf16.msra.mxu0 0
    %1017 = vmatprep.subr.bf16.mxu0 0
    %1018 = vmatpush1.bf16.msra.mxu0 0
    %1019 = vmatprep.subr.bf16.mxu0 0
    %1020 = vmatpush1.bf16.msra.mxu0 0
    %1021 = vmatprep.subr.bf16.mxu0 0
    %1022 = vmatpush1.bf16.msra.mxu0 0
    %1023 = vmatprep.subr.bf16.mxu0 0
    %1024 = vmatpush1.bf16.msra.mxu0 0
    %1025 = vmatprep.subr.bf16.mxu0 0
    %1026 = vmatpush1.bf16.msra.mxu0 0
    %1027 = vmatprep.subr.bf16.mxu0 0
    %1028 = vmatpush1.bf16.msra.mxu0 0
    %1029 = vmatprep.mubr.bf16.mxu0 0
    %1030 = vmatmul.mubr.bf16.gmra.mrb[0].mxu0 %v992
    %v1031 = vpop.f32.mrb[0].mxu0
    %v1032 = vadd.f32 0.0, %v1031
    %v1033 = vpop.f32.mrb[0].mxu0
    %v1034 = vpop.f32.mrb[0].mxu0
    %v1035 = vpop.f32.mrb[0].mxu0
    %1036 = vdwg.mxu0
    %1037 = vrot.lane.b32.xlu0 %v707, 104
    %v1038 = vpop.permute.xlu0 %1037
    %1039 = vrot.lane.b32.xlu0 %v707, 72
    %v1040 = vpop.permute.xlu0 %1039
    %v1042 = vsel %vm252, %v1038, 0
    %v1045 = vsel %vm252, %v1040, 0
    %1047 = vmatprep.subr.bf16.mxu0 0
    %1048 = vmatpush1.bf16.xpose.msra.mxu0 %v1045
    %1049 = vmatprep.subr.bf16.mxu0 0
    %1050 = vmatpush1.bf16.xpose.msra.mxu0 0
    %1051 = vmatprep.subr.bf16.mxu0 0
    %1052 = vmatpush1.bf16.xpose.msra.mxu0 0
    %1053 = vmatprep.subr.bf16.mxu0 0
    %1054 = vmatpush1.bf16.xpose.msra.mxu0 0
    %1055 = vmatprep.subr.bf16.mxu0 0
    %1056 = vmatpush1.bf16.xpose.msra.mxu0 0
    %1057 = vmatprep.subr.bf16.mxu0 0
    %1058 = vmatpush1.bf16.xpose.msra.mxu0 0
    %1059 = vmatprep.subr.bf16.mxu0 0
    %1060 = vmatpush1.bf16.xpose.msra.mxu0 0
    %1061 = vmatprep.subr.bf16.mxu0 0
    %1062 = vmatpush1.bf16.xpose.msra.mxu0 0
    %1063 = vmatprep.subr.bf16.mxu0 0
    %1064 = vmatpush1.bf16.xpose.msra.mxu0 0
    %1065 = vmatprep.subr.bf16.mxu0 0
    %1066 = vmatpush1.bf16.xpose.msra.mxu0 0
    %1067 = vmatprep.subr.bf16.mxu0 0
    %1068 = vmatpush1.bf16.xpose.msra.mxu0 0
    %1069 = vmatprep.subr.bf16.mxu0 0
    %1070 = vmatpush1.bf16.xpose.msra.mxu0 0
    %1071 = vmatprep.subr.bf16.mxu0 0
    %1072 = vmatpush1.bf16.xpose.msra.mxu0 0
    %1073 = vmatprep.subr.bf16.mxu0 0
    %1074 = vmatpush1.bf16.xpose.msra.mxu0 0
    %1075 = vmatprep.subr.bf16.mxu0 0
    %1076 = vmatpush1.bf16.xpose.msra.mxu0 0
    %1077 = vmatprep.subr.bf16.mxu0 0
    %1078 = vmatpush1.bf16.xpose.msra.mxu0 0
    %1079 = vmatprep.mubr.bf16.mxu0 0
    %1080 = vmatmul.mubr.bf16.gmra.mrb[0].mxu0 %v1042
    %v1081 = vpop.f32.mrb[0].mxu0
    %v1082 = vadd.f32 0.0, %v1081
    %v1083 = vpop.f32.mrb[0].mxu0
    %v1084 = vpop.f32.mrb[0].mxu0
    %v1085 = vpop.f32.mrb[0].mxu0
    %1086 = vdwg.mxu0
    %v1087 = vsel %vm252, %v1082, -inf
    %1088 = vmax.xlane.f32.xlu0 %v1087
    %v1089 = vpop.xlane.xlu0 %1088
    %v1090 = vsub.f32 %v1082, %v1089
    %v1091 = vmul.f32 %v1090, 1.442695
    %v1092 = vpow.pop %v1091
    %v1093 = vsel %vm252, %v1092, 0.0
    %1094 = vadd.xlane.f32.xlu0 %v1093
    %v1095 = vpop.xlane.xlu0 %1094
    %v1096 = vrcp.pop %v1095
    %v1097 = vmul.f32 %v1092, %v1096
    %v1098 = vpack.c.bf16 %v1097, %v1097
    %1099 = vrot.lane.b32.xlu0 %v707, 40
    %v1100 = vpop.permute.xlu0 %1099
    %v1102 = vsel %vm252, %v1098, 0
    %v1105 = vsel %vm316, %v1100, 0
    %1107 = vmatprep.subr.bf16.mxu0 0
    %1108 = vmatpush1.bf16.msra.mxu0 %v1105
    %1109 = vmatprep.subr.bf16.mxu0 0
    %1110 = vmatpush1.bf16.msra.mxu0 0
    %1111 = vmatprep.subr.bf16.mxu0 0
    %1112 = vmatpush1.bf16.msra.mxu0 0
    %1113 = vmatprep.subr.bf16.mxu0 0
    %1114 = vmatpush1.bf16.msra.mxu0 0
    %1115 = vmatprep.subr.bf16.mxu0 0
    %1116 = vmatpush1.bf16.msra.mxu0 0
    %1117 = vmatprep.subr.bf16.mxu0 0
    %1118 = vmatpush1.bf16.msra.mxu0 0
    %1119 = vmatprep.subr.bf16.mxu0 0
    %1120 = vmatpush1.bf16.msra.mxu0 0
    %1121 = vmatprep.subr.bf16.mxu0 0
    %1122 = vmatpush1.bf16.msra.mxu0 0
    %1123 = vmatprep.subr.bf16.mxu0 0
    %1124 = vmatpush1.bf16.msra.mxu0 0
    %1125 = vmatprep.subr.bf16.mxu0 0
    %1126 = vmatpush1.bf16.msra.mxu0 0
    %1127 = vmatprep.subr.bf16.mxu0 0
    %1128 = vmatpush1.bf16.msra.mxu0 0
    %1129 = vmatprep.subr.bf16.mxu0 0
    %1130 = vmatpush1.bf16.msra.mxu0 0
    %1131 = vmatprep.subr.bf16.mxu0 0
    %1132 = vmatpush1.bf16.msra.mxu0 0
    %1133 = vmatprep.subr.bf16.mxu0 0
    %1134 = vmatpush1.bf16.msra.mxu0 0
    %1135 = vmatprep.subr.bf16.mxu0 0
    %1136 = vmatpush1.bf16.msra.mxu0 0
    %1137 = vmatprep.subr.bf16.mxu0 0
    %1138 = vmatpush1.bf16.msra.mxu0 0
    %1139 = vmatprep.mubr.bf16.mxu0 0
    %1140 = vmatmul.mubr.bf16.gmra.mrb[0].mxu0 %v1102
    %v1141 = vpop.f32.mrb[0].mxu0
    %v1142 = vadd.f32 0.0, %v1141
    %v1143 = vpop.f32.mrb[0].mxu0
    %v1144 = vpop.f32.mrb[0].mxu0
    %v1145 = vpop.f32.mrb[0].mxu0
    %1146 = vdwg.mxu0
    %1148 = vrot.lane.b32.xlu0 %v922, 8
    %v1149 = vpop.permute.xlu0 %1148
    %1152 = vrot.lane.b32.xlu0 %v1032, 16
    %v1153 = vpop.permute.xlu0 %1152
    %1156 = vrot.lane.b32.xlu0 %v1142, 24
    %v1157 = vpop.permute.xlu0 %1156
    %v1159 = vsel %vm252, %v812, %v1149
    %v1160 = vsel %vm703, %v1159, %v1153
    %v1161 = vsel %vm705, %v1160, %v1157
    %v1162 = vpack.c.bf16 %v1161, %v706
    %v1167 = vunpack.c.l.b16 %v139
    %v1168 = vunpack.c.l.b16 %v140
    %v1169 = vunpack.c.l.b16 %v141
    %v1170 = vunpack.c.l.b16 %v142
    %v1171 = vpack.c.b16 %v1168, %v1167
    %v1172 = vpack.c.b16 %v1170, %v1169
    %v1176 = vsel %vm167, %v1162, 0
    %1178 = vmatprep.subr.bf16.mxu0 0
    %1179 = vmatpush1.bf16.msra.mxu0 %v1171
    %1180 = vmatprep.subr.bf16.mxu0 0
    %1181 = vmatpush1.bf16.msra.mxu0 %v1172
    %1182 = vmatprep.subr.bf16.mxu0 0
    %1183 = vmatpush1.bf16.msra.mxu0 0
    %1184 = vmatprep.subr.bf16.mxu0 0
    %1185 = vmatpush1.bf16.msra.mxu0 0
    %1186 = vmatprep.subr.bf16.mxu0 0
    %1187 = vmatpush1.bf16.msra.mxu0 0
    %1188 = vmatprep.subr.bf16.mxu0 0
    %1189 = vmatpush1.bf16.msra.mxu0 0
    %1190 = vmatprep.subr.bf16.mxu0 0
    %1191 = vmatpush1.bf16.msra.mxu0 0
    %1192 = vmatprep.subr.bf16.mxu0 0
    %1193 = vmatpush1.bf16.msra.mxu0 0
    %1194 = vmatprep.subr.bf16.mxu0 0
    %1195 = vmatpush1.bf16.msra.mxu0 0
    %1196 = vmatprep.subr.bf16.mxu0 0
    %1197 = vmatpush1.bf16.msra.mxu0 0
    %1198 = vmatprep.subr.bf16.mxu0 0
    %1199 = vmatpush1.bf16.msra.mxu0 0
    %1200 = vmatprep.subr.bf16.mxu0 0
    %1201 = vmatpush1.bf16.msra.mxu0 0
    %1202 = vmatprep.subr.bf16.mxu0 0
    %1203 = vmatpush1.bf16.msra.mxu0 0
    %1204 = vmatprep.subr.bf16.mxu0 0
    %1205 = vmatpush1.bf16.msra.mxu0 0
    %1206 = vmatprep.subr.bf16.mxu0 0
    %1207 = vmatpush1.bf16.msra.mxu0 0
    %1208 = vmatprep.subr.bf16.mxu0 0
    %1209 = vmatpush1.bf16.msra.mxu0 0
    %1210 = vmatprep.mubr.bf16.mxu0 0
    %1211 = vmatmul.mubr.bf16.gmra.mrb[0].mxu0 %v1176
    %v1212 = vpop.f32.mrb[0].mxu0
    %v1213 = vadd.f32 0.0, %v1212
    %v1214 = vpop.f32.mrb[0].mxu0
    %v1215 = vpop.f32.mrb[0].mxu0
    %v1216 = vadd.f32 0.0, %v1215
    %v1217 = vpop.f32.mrb[0].mxu0
    %1218 = vdwg.mxu0
    %v1219 = vadd.f32 %v129, %v1213
    %v1220 = vadd.f32 %v132, %v1216
    %v1221 = vmul.f32 %v1219, %v1219
    %v1222 = vmul.f32 %v1220, %v1220
    %v1223 = vsel %vm167, %v1221, 0.0
    %1224 = vadd.xlane.f32.xlu0 %v1223
    %v1225 = vpop.xlane.xlu0 %1224
    %v1226 = vsel %vm167, %v1222, 0.0
    %1227 = vadd.xlane.f32.xlu0 %v1226
    %v1228 = vpop.xlane.xlu0 %1227
    %v1229 = vmul.f32 %v1225, %v174
    %v1230 = vmul.f32 %v1228, %v174
    %v1231 = vadd.f32 %v1229, 1e-06
    %v1232 = vadd.f32 %v1230, 1e-06
    %v1233 = vrsqrt.pop %v1231
    %v1234 = vrsqrt.pop %v1232
    %v1235 = vmul.f32 %v1219, %v1233
    %v1236 = vmul.f32 %v1220, %v1234
    %v1238 = vlaneseq
    %v1239 = vshrl.u32 %v1238, 7
    %v1240 = vsub.s32 0, %v1239
    %v1241 = vrot.slane %v164, %v1240
    %v1243 = vmul.f32 %v1235, %v1241
    %v1244 = vmul.f32 %v1236, %v1241
    %v1245 = vpack.c.bf16 %v1244, %v1243
    %v1250 = vunpack.c.l.b16 %v143
    %v1251 = vunpack.c.l.b16 %v144
    %v1252 = vunpack.c.l.b16 %v145
    %v1253 = vunpack.c.l.b16 %v146
    %v1254 = vpack.c.b16 %v1251, %v1250
    %v1255 = vpack.c.b16 %v1253, %v1252
    %v1259 = vsel %vm167, %v1245, 0
    %1261 = vmatprep.subr.bf16.mxu0 0
    %1262 = vmatpush1.bf16.msra.mxu0 %v1254
    %1263 = vmatprep.subr.bf16.mxu0 0
    %1264 = vmatpush1.bf16.msra.mxu0 %v1255
    %1265 = vmatprep.subr.bf16.mxu0 0
    %1266 = vmatpush1.bf16.msra.mxu0 0
    %1267 = vmatprep.subr.bf16.mxu0 0
    %1268 = vmatpush1.bf16.msra.mxu0 0
    %1269 = vmatprep.subr.bf16.mxu0 0
    %1270 = vmatpush1.bf16.msra.mxu0 0
    %1271 = vmatprep.subr.bf16.mxu0 0
    %1272 = vmatpush1.bf16.msra.mxu0 0
    %1273 = vmatprep.subr.bf16.mxu0 0
    %1274 = vmatpush1.bf16.msra.mxu0 0
    %1275 = vmatprep.subr.bf16.mxu0 0
    %1276 = vmatpush1.bf16.msra.mxu0 0
    %1277 = vmatprep.subr.bf16.mxu0 0
    %1278 = vmatpush1.bf16.msra.mxu0 0
    %1279 = vmatprep.subr.bf16.mxu0 0
    %1280 = vmatpush1.bf16.msra.mxu0 0
    %1281 = vmatprep.subr.bf16.mxu0 0
    %1282 = vmatpush1.bf16.msra.mxu0 0
    %1283 = vmatprep.subr.bf16.mxu0 0
    %1284 = vmatpush1.bf16.msra.mxu0 0
    %1285 = vmatprep.subr.bf16.mxu0 0
    %1286 = vmatpush1.bf16.msra.mxu0 0
    %1287 = vmatprep.subr.bf16.mxu0 0
    %1288 = vmatpush1.bf16.msra.mxu0 0
    %1289 = vmatprep.subr.bf16.mxu0 0
    %1290 = vmatpush1.bf16.msra.mxu0 0
    %1291 = vmatprep.subr.bf16.mxu0 0
    %1292 = vmatpush1.bf16.msra.mxu0 0
    %1293 = vmatprep.mubr.bf16.mxu0 0
    %1294 = vmatmul.mubr.bf16.gmra.mrb[0].mxu0 %v1259
    %v1295 = vpop.f32.mrb[0].mxu0
    %v1296 = vadd.f32 0.0, %v1295
    %v1297 = vpop.f32.mrb[0].mxu0
    %v1298 = vpop.f32.mrb[0].mxu0
    %v1299 = vadd.f32 0.0, %v1298
    %v1300 = vpop.f32.mrb[0].mxu0
    %1301 = vdwg.mxu0
    %v1302 = vxor.u32 %v1296, 2147483648
    %v1303 = vxor.u32 %v1299, 2147483648
    %v1304 = vmul.f32 %v1302, 1.442695
    %v1305 = vpow.pop %v1304
    %v1306 = vmul.f32 %v1303, 1.442695
    %v1307 = vpow.pop %v1306
    %v1308 = vadd.f32 %v1305, 1.0
    %v1309 = vadd.f32 %v1307, 1.0
    %v1310 = vrcp.pop %v1308
    %v1311 = vmul.f32 1.0, %v1310
    %v1312 = vrcp.pop %v1309
    %v1313 = vmul.f32 1.0, %v1312
    %v1314 = vmul.f32 %v1296, %v1311
    %v1315 = vmul.f32 %v1299, %v1313
    %v1316 = vpack.c.bf16 %v1315, %v1314
    %v1333 = vunpack.c.l.b16 %v147
    %v1334 = vunpack.c.l.b16 %v148
    %v1335 = vunpack.c.l.b16 %v149
    %v1336 = vunpack.c.l.b16 %v150
    %v1337 = vunpack.c.l.b16 %v151
    %v1338 = vunpack.c.l.b16 %v152
    %v1339 = vunpack.c.l.b16 %v153
    %v1340 = vunpack.c.l.b16 %v154
    %v1341 = vunpack.c.l.b16 %v155
    %v1342 = vunpack.c.l.b16 %v156
    %v1343 = vunpack.c.l.b16 %v157
    %v1344 = vunpack.c.l.b16 %v158
    %v1345 = vunpack.c.l.b16 %v159
    %v1346 = vunpack.c.l.b16 %v160
    %v1347 = vunpack.c.l.b16 %v161
    %v1348 = vunpack.c.l.b16 %v162
    %v1349 = vpack.c.b16 %v1334, %v1333
    %v1350 = vpack.c.b16 %v1336, %v1335
    %v1351 = vpack.c.b16 %v1338, %v1337
    %v1352 = vpack.c.b16 %v1340, %v1339
    %v1353 = vpack.c.b16 %v1342, %v1341
    %v1354 = vpack.c.b16 %v1344, %v1343
    %v1355 = vpack.c.b16 %v1346, %v1345
    %v1356 = vpack.c.b16 %v1348, %v1347
    %1365 = vmatprep.subr.bf16.mxu0 0
    %1366 = vmatpush1.bf16.msra.mxu0 %v1349
    %1367 = vmatprep.subr.bf16.mxu0 0
    %1368 = vmatpush1.bf16.msra.mxu0 %v1350
    %1369 = vmatprep.subr.bf16.mxu0 0
    %1370 = vmatpush1.bf16.msra.mxu0 %v1351
    %1371 = vmatprep.subr.bf16.mxu0 0
    %1372 = vmatpush1.bf16.msra.mxu0 %v1352
    %1373 = vmatprep.subr.bf16.mxu0 0
    %1374 = vmatpush1.bf16.msra.mxu0 %v1353
    %1375 = vmatprep.subr.bf16.mxu0 0
    %1376 = vmatpush1.bf16.msra.mxu0 %v1354
    %1377 = vmatprep.subr.bf16.mxu0 0
    %1378 = vmatpush1.bf16.msra.mxu0 %v1355
    %1379 = vmatprep.subr.bf16.mxu0 0
    %1380 = vmatpush1.bf16.msra.mxu0 %v1356
    %1381 = vmatprep.subr.bf16.mxu0 0
    %1382 = vmatpush1.bf16.msra.mxu0 0
    %1383 = vmatprep.subr.bf16.mxu0 0
    %1384 = vmatpush1.bf16.msra.mxu0 0
    %1385 = vmatprep.subr.bf16.mxu0 0
    %1386 = vmatpush1.bf16.msra.mxu0 0
    %1387 = vmatprep.subr.bf16.mxu0 0
    %1388 = vmatpush1.bf16.msra.mxu0 0
    %1389 = vmatprep.subr.bf16.mxu0 0
    %1390 = vmatpush1.bf16.msra.mxu0 0
    %1391 = vmatprep.subr.bf16.mxu0 0
    %1392 = vmatpush1.bf16.msra.mxu0 0
    %1393 = vmatprep.subr.bf16.mxu0 0
    %1394 = vmatpush1.bf16.msra.mxu0 0
    %1395 = vmatprep.subr.bf16.mxu0 0
    %1396 = vmatpush1.bf16.msra.mxu0 0
    %1397 = vmatprep.mubr.bf16.mxu0 0
    %1398 = vmatmul.mubr.bf16.gmra.mrb[0].mxu0 %v1316
    %v1399 = vpop.f32.mrb[0].mxu0
    %v1400 = vadd.f32 0.0, %v1399
    %v1401 = vpop.f32.mrb[0].mxu0
    %v1402 = vpop.f32.mrb[0].mxu0
    %v1403 = vadd.f32 0.0, %v1402
    %v1404 = vpop.f32.mrb[0].mxu0
    %1405 = vdwg.mxu0
    %v1406 = vadd.f32 %v1219, %v1400
    %v1407 = vadd.f32 %v1220, %v1403
    %s1408 = scalar_lea.vmem %s3, 16
    %v1409 = vld [vmem:[%s1408] sm:$0xf]
    %v1410 = vld [vmem:[%s1408 + $0x4] sm:$0xf]
    %v1411 = vld [vmem:[%s1408 + $0x8] sm:$0xf]
    %v1412 = vld [vmem:[%s1408 + $0xc] sm:$0xf]
    %s1413 = scalar_lea.vmem %s4, 16
    %v1414 = vld [vmem:[%s1413] sm:$0xf]
    %v1415 = vld [vmem:[%s1413 + $0x4] sm:$0xf]
    %v1416 = vld [vmem:[%s1413 + $0x8] sm:$0xf]
    %v1417 = vld [vmem:[%s1413 + $0xc] sm:$0xf]
    %s1418 = scalar_lea.vmem %s5, 16
    %v1419 = vld [vmem:[%s1418] sm:$0xf]
    %v1420 = vld [vmem:[%s1418 + $0x4] sm:$0xf]
    %v1421 = vld [vmem:[%s1418 + $0x8] sm:$0xf]
    %v1422 = vld [vmem:[%s1418 + $0xc] sm:$0xf]
    %s1423 = scalar_lea.vmem %s6, 64
    %v1424 = vld [vmem:[%s1423] sm:$0xf]
    %v1425 = vld [vmem:[%s1423 + $0x4] sm:$0xf]
    %v1426 = vld [vmem:[%s1423 + $0x8] sm:$0xf]
    %v1427 = vld [vmem:[%s1423 + $0xc] sm:$0xf]
    %v1428 = vld [vmem:[%s1423 + $0x10] sm:$0xf]
    %v1429 = vld [vmem:[%s1423 + $0x14] sm:$0xf]
    %v1430 = vld [vmem:[%s1423 + $0x18] sm:$0xf]
    %v1431 = vld [vmem:[%s1423 + $0x1c] sm:$0xf]
    %v1432 = vld [vmem:[%s1423 + $0x20] sm:$0xf]
    %v1433 = vld [vmem:[%s1423 + $0x24] sm:$0xf]
    %v1434 = vld [vmem:[%s1423 + $0x28] sm:$0xf]
    %v1435 = vld [vmem:[%s1423 + $0x2c] sm:$0xf]
    %v1436 = vld [vmem:[%s1423 + $0x30] sm:$0xf]
    %v1437 = vld [vmem:[%s1423 + $0x34] sm:$0xf]
    %v1438 = vld [vmem:[%s1423 + $0x38] sm:$0xf]
    %v1439 = vld [vmem:[%s1423 + $0x3c] sm:$0xf]
    %s1440 = scalar_lea.vmem %s7, 1
    %v1441 = vld [vmem:[%s1440] sm:$0x1]
    %s1442 = scalar_lea.vmem %s8, 1
    %v1443 = vld [vmem:[%s1442] sm:$0x1]
    %v1444 = vmul.f32 %v1406, %v1406
    %v1445 = vmul.f32 %v1407, %v1407
    %v1446 = vsel %vm167, %v1444, 0.0
    %1447 = vadd.xlane.f32.xlu0 %v1446
    %v1448 = vpop.xlane.xlu0 %1447
    %v1449 = vsel %vm167, %v1445, 0.0
    %1450 = vadd.xlane.f32.xlu0 %v1449
    %v1451 = vpop.xlane.xlu0 %1450
    %v1452 = vmul.f32 %v1448, %v174
    %v1453 = vmul.f32 %v1451, %v174
    %v1454 = vadd.f32 %v1452, 1e-06
    %v1455 = vadd.f32 %v1453, 1e-06
    %v1456 = vrsqrt.pop %v1454
    %v1457 = vrsqrt.pop %v1455
    %v1458 = vmul.f32 %v1406, %v1456
    %v1459 = vmul.f32 %v1407, %v1457
    %v1461 = vlaneseq
    %v1462 = vshrl.u32 %v1461, 7
    %v1463 = vsub.s32 0, %v1462
    %v1464 = vrot.slane %v1441, %v1463
    %v1466 = vmul.f32 %v1458, %v1464
    %v1467 = vmul.f32 %v1459, %v1464
    %v1468 = vpack.c.bf16 %v1467, %v1466
    %v1473 = vunpack.c.l.b16 %v1409
    %v1474 = vunpack.c.l.b16 %v1410
    %v1475 = vunpack.c.l.b16 %v1411
    %v1476 = vunpack.c.l.b16 %v1412
    %v1477 = vpack.c.b16 %v1474, %v1473
    %v1478 = vpack.c.b16 %v1476, %v1475
    %v1482 = vsel %vm167, %v1468, 0
    %1484 = vmatprep.subr.bf16.mxu0 0
    %1485 = vmatpush1.bf16.msra.mxu0 %v1477
    %1486 = vmatprep.subr.bf16.mxu0 0
    %1487 = vmatpush1.bf16.msra.mxu0 %v1478
    %1488 = vmatprep.subr.bf16.mxu0 0
    %1489 = vmatpush1.bf16.msra.mxu0 0
    %1490 = vmatprep.subr.bf16.mxu0 0
    %1491 = vmatpush1.bf16.msra.mxu0 0
    %1492 = vmatprep.subr.bf16.mxu0 0
    %1493 = vmatpush1.bf16.msra.mxu0 0
    %1494 = vmatprep.subr.bf16.mxu0 0
    %1495 = vmatpush1.bf16.msra.mxu0 0
    %1496 = vmatprep.subr.bf16.mxu0 0
    %1497 = vmatpush1.bf16.msra.mxu0 0
    %1498 = vmatprep.subr.bf16.mxu0 0
    %1499 = vmatpush1.bf16.msra.mxu0 0
    %1500 = vmatprep.subr.bf16.mxu0 0
    %1501 = vmatpush1.bf16.msra.mxu0 0
    %1502 = vmatprep.subr.bf16.mxu0 0
    %1503 = vmatpush1.bf16.msra.mxu0 0
    %1504 = vmatprep.subr.bf16.mxu0 0
    %1505 = vmatpush1.bf16.msra.mxu0 0
    %1506 = vmatprep.subr.bf16.mxu0 0
    %1507 = vmatpush1.bf16.msra.mxu0 0
    %1508 = vmatprep.subr.bf16.mxu0 0
    %1509 = vmatpush1.bf16.msra.mxu0 0
    %1510 = vmatprep.subr.bf16.mxu0 0
    %1511 = vmatpush1.bf16.msra.mxu0 0
    %1512 = vmatprep.subr.bf16.mxu0 0
    %1513 = vmatpush1.bf16.msra.mxu0 0
    %1514 = vmatprep.subr.bf16.mxu0 0
    %1515 = vmatpush1.bf16.msra.mxu0 0
    %1516 = vmatprep.mubr.bf16.mxu0 0
    %1517 = vmatmul.mubr.bf16.gmra.mrb[0].mxu0 %v1482
    %v1518 = vpop.f32.mrb[0].mxu0
    %v1519 = vadd.f32 0.0, %v1518
    %v1520 = vpop.f32.mrb[0].mxu0
    %v1521 = vpop.f32.mrb[0].mxu0
    %v1522 = vadd.f32 0.0, %v1521
    %v1523 = vpop.f32.mrb[0].mxu0
    %1524 = vdwg.mxu0
    %v1525 = vpack.c.bf16 %v1519, %v1519
    %1527 = vrot.lane.b32.xlu0 %v1525, 96
    %v1528 = vpop.permute.xlu0 %1527
    %v1530 = vsel %vm252, %v1525, 0
    %v1533 = vsel %vm252, %v1528, 0
    %1535 = vmatprep.subr.bf16.mxu0 0
    %1536 = vmatpush1.bf16.xpose.msra.mxu0 %v1533
    %1537 = vmatprep.subr.bf16.mxu0 0
    %1538 = vmatpush1.bf16.xpose.msra.mxu0 0
    %1539 = vmatprep.subr.bf16.mxu0 0
    %1540 = vmatpush1.bf16.xpose.msra.mxu0 0
    %1541 = vmatprep.subr.bf16.mxu0 0
    %1542 = vmatpush1.bf16.xpose.msra.mxu0 0
    %1543 = vmatprep.subr.bf16.mxu0 0
    %1544 = vmatpush1.bf16.xpose.msra.mxu0 0
    %1545 = vmatprep.subr.bf16.mxu0 0
    %1546 = vmatpush1.bf16.xpose.msra.mxu0 0
    %1547 = vmatprep.subr.bf16.mxu0 0
    %1548 = vmatpush1.bf16.xpose.msra.mxu0 0
    %1549 = vmatprep.subr.bf16.mxu0 0
    %1550 = vmatpush1.bf16.xpose.msra.mxu0 0
    %1551 = vmatprep.subr.bf16.mxu0 0
    %1552 = vmatpush1.bf16.xpose.msra.mxu0 0
    %1553 = vmatprep.subr.bf16.mxu0 0
    %1554 = vmatpush1.bf16.xpose.msra.mxu0 0
    %1555 = vmatprep.subr.bf16.mxu0 0
    %1556 = vmatpush1.bf16.xpose.msra.mxu0 0
    %1557 = vmatprep.subr.bf16.mxu0 0
    %1558 = vmatpush1.bf16.xpose.msra.mxu0 0
    %1559 = vmatprep.subr.bf16.mxu0 0
    %1560 = vmatpush1.bf16.xpose.msra.mxu0 0
    %1561 = vmatprep.subr.bf16.mxu0 0
    %1562 = vmatpush1.bf16.xpose.msra.mxu0 0
    %1563 = vmatprep.subr.bf16.mxu0 0
    %1564 = vmatpush1.bf16.xpose.msra.mxu0 0
    %1565 = vmatprep.subr.bf16.mxu0 0
    %1566 = vmatpush1.bf16.xpose.msra.mxu0 0
    %1567 = vmatprep.mubr.bf16.mxu0 0
    %1568 = vmatmul.mubr.bf16.gmra.mrb[0].mxu0 %v1530
    %v1569 = vpop.f32.mrb[0].mxu0
    %v1570 = vadd.f32 0.0, %v1569
    %v1571 = vpop.f32.mrb[0].mxu0
    %v1572 = vpop.f32.mrb[0].mxu0
    %v1573 = vpop.f32.mrb[0].mxu0
    %1574 = vdwg.mxu0
    %v1575 = vsel %vm252, %v1570, -inf
    %1576 = vmax.xlane.f32.xlu0 %v1575
    %v1577 = vpop.xlane.xlu0 %1576
    %v1578 = vsub.f32 %v1570, %v1577
    %v1579 = vmul.f32 %v1578, 1.442695
    %v1580 = vpow.pop %v1579
    %v1581 = vsel %vm252, %v1580, 0.0
    %1582 = vadd.xlane.f32.xlu0 %v1581
    %v1583 = vpop.xlane.xlu0 %1582
    %v1584 = vrcp.pop %v1583
    %v1585 = vmul.f32 %v1580, %v1584
    %v1586 = vpack.c.bf16 %v1585, %v1585
    %1587 = vrot.lane.b32.xlu0 %v1525, 64
    %v1588 = vpop.permute.xlu0 %1587
    %v1590 = vsel %vm252, %v1586, 0
    %v1593 = vsel %vm316, %v1588, 0
    %1595 = vmatprep.subr.bf16.mxu0 0
    %1596 = vmatpush1.bf16.msra.mxu0 %v1593
    %1597 = vmatprep.subr.bf16.mxu0 0
    %1598 = vmatpush1.bf16.msra.mxu0 0
    %1599 = vmatprep.subr.bf16.mxu0 0
    %1600 = vmatpush1.bf16.msra.mxu0 0
    %1601 = vmatprep.subr.bf16.mxu0 0
    %1602 = vmatpush1.bf16.msra.mxu0 0
    %1603 = vmatprep.subr.bf16.mxu0 0
    %1604 = vmatpush1.bf16.msra.mxu0 0
    %1605 = vmatprep.subr.bf16.mxu0 0
    %1606 = vmatpush1.bf16.msra.mxu0 0
    %1607 = vmatprep.subr.bf16.mxu0 0
    %1608 = vmatpush1.bf16.msra.mxu0 0
    %1609 = vmatprep.subr.bf16.mxu0 0
    %1610 = vmatpush1.bf16.msra.mxu0 0
    %1611 = vmatprep.subr.bf16.mxu0 0
    %1612 = vmatpush1.bf16.msra.mxu0 0
    %1613 = vmatprep.subr.bf16.mxu0 0
    %1614 = vmatpush1.bf16.msra.mxu0 0
    %1615 = vmatprep.subr.bf16.mxu0 0
    %1616 = vmatpush1.bf16.msra.mxu0 0
    %1617 = vmatprep.subr.bf16.mxu0 0
    %1618 = vmatpush1.bf16.msra.mxu0 0
    %1619 = vmatprep.subr.bf16.mxu0 0
    %1620 = vmatpush1.bf16.msra.mxu0 0
    %1621 = vmatprep.subr.bf16.mxu0 0
    %1622 = vmatpush1.bf16.msra.mxu0 0
    %1623 = vmatprep.subr.bf16.mxu0 0
    %1624 = vmatpush1.bf16.msra.mxu0 0
    %1625 = vmatprep.subr.bf16.mxu0 0
    %1626 = vmatpush1.bf16.msra.mxu0 0
    %1627 = vmatprep.mubr.bf16.mxu0 0
    %1628 = vmatmul.mubr.bf16.gmra.mrb[0].mxu0 %v1590
    %v1629 = vpop.f32.mrb[0].mxu0
    %v1630 = vadd.f32 0.0, %v1629
    %v1631 = vpop.f32.mrb[0].mxu0
    %v1632 = vpop.f32.mrb[0].mxu0
    %v1633 = vpop.f32.mrb[0].mxu0
    %1634 = vdwg.mxu0
    %1635 = vrot.lane.b32.xlu0 %v1525, 120
    %v1636 = vpop.permute.xlu0 %1635
    %1637 = vrot.lane.b32.xlu0 %v1525, 88
    %v1638 = vpop.permute.xlu0 %1637
    %v1640 = vsel %vm252, %v1636, 0
    %v1643 = vsel %vm252, %v1638, 0
    %1645 = vmatprep.subr.bf16.mxu0 0
    %1646 = vmatpush1.bf16.xpose.msra.mxu0 %v1643
    %1647 = vmatprep.subr.bf16.mxu0 0
    %1648 = vmatpush1.bf16.xpose.msra.mxu0 0
    %1649 = vmatprep.subr.bf16.mxu0 0
    %1650 = vmatpush1.bf16.xpose.msra.mxu0 0
    %1651 = vmatprep.subr.bf16.mxu0 0
    %1652 = vmatpush1.bf16.xpose.msra.mxu0 0
    %1653 = vmatprep.subr.bf16.mxu0 0
    %1654 = vmatpush1.bf16.xpose.msra.mxu0 0
    %1655 = vmatprep.subr.bf16.mxu0 0
    %1656 = vmatpush1.bf16.xpose.msra.mxu0 0
    %1657 = vmatprep.subr.bf16.mxu0 0
    %1658 = vmatpush1.bf16.xpose.msra.mxu0 0
    %1659 = vmatprep.subr.bf16.mxu0 0
    %1660 = vmatpush1.bf16.xpose.msra.mxu0 0
    %1661 = vmatprep.subr.bf16.mxu0 0
    %1662 = vmatpush1.bf16.xpose.msra.mxu0 0
    %1663 = vmatprep.subr.bf16.mxu0 0
    %1664 = vmatpush1.bf16.xpose.msra.mxu0 0
    %1665 = vmatprep.subr.bf16.mxu0 0
    %1666 = vmatpush1.bf16.xpose.msra.mxu0 0
    %1667 = vmatprep.subr.bf16.mxu0 0
    %1668 = vmatpush1.bf16.xpose.msra.mxu0 0
    %1669 = vmatprep.subr.bf16.mxu0 0
    %1670 = vmatpush1.bf16.xpose.msra.mxu0 0
    %1671 = vmatprep.subr.bf16.mxu0 0
    %1672 = vmatpush1.bf16.xpose.msra.mxu0 0
    %1673 = vmatprep.subr.bf16.mxu0 0
    %1674 = vmatpush1.bf16.xpose.msra.mxu0 0
    %1675 = vmatprep.subr.bf16.mxu0 0
    %1676 = vmatpush1.bf16.xpose.msra.mxu0 0
    %1677 = vmatprep.mubr.bf16.mxu0 0
    %1678 = vmatmul.mubr.bf16.gmra.mrb[0].mxu0 %v1640
    %v1679 = vpop.f32.mrb[0].mxu0
    %v1680 = vadd.f32 0.0, %v1679
    %v1681 = vpop.f32.mrb[0].mxu0
    %v1682 = vpop.f32.mrb[0].mxu0
    %v1683 = vpop.f32.mrb[0].mxu0
    %1684 = vdwg.mxu0
    %v1685 = vsel %vm252, %v1680, -inf
    %1686 = vmax.xlane.f32.xlu0 %v1685
    %v1687 = vpop.xlane.xlu0 %1686
    %v1688 = vsub.f32 %v1680, %v1687
    %v1689 = vmul.f32 %v1688, 1.442695
    %v1690 = vpow.pop %v1689
    %v1691 = vsel %vm252, %v1690, 0.0
    %1692 = vadd.xlane.f32.xlu0 %v1691
    %v1693 = vpop.xlane.xlu0 %1692
    %v1694 = vrcp.pop %v1693
    %v1695 = vmul.f32 %v1690, %v1694
    %v1696 = vpack.c.bf16 %v1695, %v1695
    %1697 = vrot.lane.b32.xlu0 %v1525, 56
    %v1698 = vpop.permute.xlu0 %1697
    %v1700 = vsel %vm252, %v1696, 0
    %v1703 = vsel %vm316, %v1698, 0
    %1705 = vmatprep.subr.bf16.mxu0 0
    %1706 = vmatpush1.bf16.msra.mxu0 %v1703
    %1707 = vmatprep.subr.bf16.mxu0 0
    %1708 = vmatpush1.bf16.msra.mxu0 0
    %1709 = vmatprep.subr.bf16.mxu0 0
    %1710 = vmatpush1.bf16.msra.mxu0 0
    %1711 = vmatprep.subr.bf16.mxu0 0
    %1712 = vmatpush1.bf16.msra.mxu0 0
    %1713 = vmatprep.subr.bf16.mxu0 0
    %1714 = vmatpush1.bf16.msra.mxu0 0
    %1715 = vmatprep.subr.bf16.mxu0 0
    %1716 = vmatpush1.bf16.msra.mxu0 0
    %1717 = vmatprep.subr.bf16.mxu0 0
    %1718 = vmatpush1.bf16.msra.mxu0 0
    %1719 = vmatprep.subr.bf16.mxu0 0
    %1720 = vmatpush1.bf16.msra.mxu0 0
    %1721 = vmatprep.subr.bf16.mxu0 0
    %1722 = vmatpush1.bf16.msra.mxu0 0
    %1723 = vmatprep.subr.bf16.mxu0 0
    %1724 = vmatpush1.bf16.msra.mxu0 0
    %1725 = vmatprep.subr.bf16.mxu0 0
    %1726 = vmatpush1.bf16.msra.mxu0 0
    %1727 = vmatprep.subr.bf16.mxu0 0
    %1728 = vmatpush1.bf16.msra.mxu0 0
    %1729 = vmatprep.subr.bf16.mxu0 0
    %1730 = vmatpush1.bf16.msra.mxu0 0
    %1731 = vmatprep.subr.bf16.mxu0 0
    %1732 = vmatpush1.bf16.msra.mxu0 0
    %1733 = vmatprep.subr.bf16.mxu0 0
    %1734 = vmatpush1.bf16.msra.mxu0 0
    %1735 = vmatprep.subr.bf16.mxu0 0
    %1736 = vmatpush1.bf16.msra.mxu0 0
    %1737 = vmatprep.mubr.bf16.mxu0 0
    %1738 = vmatmul.mubr.bf16.gmra.mrb[0].mxu0 %v1700
    %v1739 = vpop.f32.mrb[0].mxu0
    %v1740 = vadd.f32 0.0, %v1739
    %v1741 = vpop.f32.mrb[0].mxu0
    %v1742 = vpop.f32.mrb[0].mxu0
    %v1743 = vpop.f32.mrb[0].mxu0
    %1744 = vdwg.mxu0
    %1745 = vrot.lane.b32.xlu0 %v1525, 112
    %v1746 = vpop.permute.xlu0 %1745
    %1747 = vrot.lane.b32.xlu0 %v1525, 80
    %v1748 = vpop.permute.xlu0 %1747
    %v1750 = vsel %vm252, %v1746, 0
    %v1753 = vsel %vm252, %v1748, 0
    %1755 = vmatprep.subr.bf16.mxu0 0
    %1756 = vmatpush1.bf16.xpose.msra.mxu0 %v1753
    %1757 = vmatprep.subr.bf16.mxu0 0
    %1758 = vmatpush1.bf16.xpose.msra.mxu0 0
    %1759 = vmatprep.subr.bf16.mxu0 0
    %1760 = vmatpush1.bf16.xpose.msra.mxu0 0
    %1761 = vmatprep.subr.bf16.mxu0 0
    %1762 = vmatpush1.bf16.xpose.msra.mxu0 0
    %1763 = vmatprep.subr.bf16.mxu0 0
    %1764 = vmatpush1.bf16.xpose.msra.mxu0 0
    %1765 = vmatprep.subr.bf16.mxu0 0
    %1766 = vmatpush1.bf16.xpose.msra.mxu0 0
    %1767 = vmatprep.subr.bf16.mxu0 0
    %1768 = vmatpush1.bf16.xpose.msra.mxu0 0
    %1769 = vmatprep.subr.bf16.mxu0 0
    %1770 = vmatpush1.bf16.xpose.msra.mxu0 0
    %1771 = vmatprep.subr.bf16.mxu0 0
    %1772 = vmatpush1.bf16.xpose.msra.mxu0 0
    %1773 = vmatprep.subr.bf16.mxu0 0
    %1774 = vmatpush1.bf16.xpose.msra.mxu0 0
    %1775 = vmatprep.subr.bf16.mxu0 0
    %1776 = vmatpush1.bf16.xpose.msra.mxu0 0
    %1777 = vmatprep.subr.bf16.mxu0 0
    %1778 = vmatpush1.bf16.xpose.msra.mxu0 0
    %1779 = vmatprep.subr.bf16.mxu0 0
    %1780 = vmatpush1.bf16.xpose.msra.mxu0 0
    %1781 = vmatprep.subr.bf16.mxu0 0
    %1782 = vmatpush1.bf16.xpose.msra.mxu0 0
    %1783 = vmatprep.subr.bf16.mxu0 0
    %1784 = vmatpush1.bf16.xpose.msra.mxu0 0
    %1785 = vmatprep.subr.bf16.mxu0 0
    %1786 = vmatpush1.bf16.xpose.msra.mxu0 0
    %1787 = vmatprep.mubr.bf16.mxu0 0
    %1788 = vmatmul.mubr.bf16.gmra.mrb[0].mxu0 %v1750
    %v1789 = vpop.f32.mrb[0].mxu0
    %v1790 = vadd.f32 0.0, %v1789
    %v1791 = vpop.f32.mrb[0].mxu0
    %v1792 = vpop.f32.mrb[0].mxu0
    %v1793 = vpop.f32.mrb[0].mxu0
    %1794 = vdwg.mxu0
    %v1795 = vsel %vm252, %v1790, -inf
    %1796 = vmax.xlane.f32.xlu0 %v1795
    %v1797 = vpop.xlane.xlu0 %1796
    %v1798 = vsub.f32 %v1790, %v1797
    %v1799 = vmul.f32 %v1798, 1.442695
    %v1800 = vpow.pop %v1799
    %v1801 = vsel %vm252, %v1800, 0.0
    %1802 = vadd.xlane.f32.xlu0 %v1801
    %v1803 = vpop.xlane.xlu0 %1802
    %v1804 = vrcp.pop %v1803
    %v1805 = vmul.f32 %v1800, %v1804
    %v1806 = vpack.c.bf16 %v1805, %v1805
    %1807 = vrot.lane.b32.xlu0 %v1525, 48
    %v1808 = vpop.permute.xlu0 %1807
    %v1810 = vsel %vm252, %v1806, 0
    %v1813 = vsel %vm316, %v1808, 0
    %1815 = vmatprep.subr.bf16.mxu0 0
    %1816 = vmatpush1.bf16.msra.mxu0 %v1813
    %1817 = vmatprep.subr.bf16.mxu0 0
    %1818 = vmatpush1.bf16.msra.mxu0 0
    %1819 = vmatprep.subr.bf16.mxu0 0
    %1820 = vmatpush1.bf16.msra.mxu0 0
    %1821 = vmatprep.subr.bf16.mxu0 0
    %1822 = vmatpush1.bf16.msra.mxu0 0
    %1823 = vmatprep.subr.bf16.mxu0 0
    %1824 = vmatpush1.bf16.msra.mxu0 0
    %1825 = vmatprep.subr.bf16.mxu0 0
    %1826 = vmatpush1.bf16.msra.mxu0 0
    %1827 = vmatprep.subr.bf16.mxu0 0
    %1828 = vmatpush1.bf16.msra.mxu0 0
    %1829 = vmatprep.subr.bf16.mxu0 0
    %1830 = vmatpush1.bf16.msra.mxu0 0
    %1831 = vmatprep.subr.bf16.mxu0 0
    %1832 = vmatpush1.bf16.msra.mxu0 0
    %1833 = vmatprep.subr.bf16.mxu0 0
    %1834 = vmatpush1.bf16.msra.mxu0 0
    %1835 = vmatprep.subr.bf16.mxu0 0
    %1836 = vmatpush1.bf16.msra.mxu0 0
    %1837 = vmatprep.subr.bf16.mxu0 0
    %1838 = vmatpush1.bf16.msra.mxu0 0
    %1839 = vmatprep.subr.bf16.mxu0 0
    %1840 = vmatpush1.bf16.msra.mxu0 0
    %1841 = vmatprep.subr.bf16.mxu0 0
    %1842 = vmatpush1.bf16.msra.mxu0 0
    %1843 = vmatprep.subr.bf16.mxu0 0
    %1844 = vmatpush1.bf16.msra.mxu0 0
    %1845 = vmatprep.subr.bf16.mxu0 0
    %1846 = vmatpush1.bf16.msra.mxu0 0
    %1847 = vmatprep.mubr.bf16.mxu0 0
    %1848 = vmatmul.mubr.bf16.gmra.mrb[0].mxu0 %v1810
    %v1849 = vpop.f32.mrb[0].mxu0
    %v1850 = vadd.f32 0.0, %v1849
    %v1851 = vpop.f32.mrb[0].mxu0
    %v1852 = vpop.f32.mrb[0].mxu0
    %v1853 = vpop.f32.mrb[0].mxu0
    %1854 = vdwg.mxu0
    %1855 = vrot.lane.b32.xlu0 %v1525, 104
    %v1856 = vpop.permute.xlu0 %1855
    %1857 = vrot.lane.b32.xlu0 %v1525, 72
    %v1858 = vpop.permute.xlu0 %1857
    %v1860 = vsel %vm252, %v1856, 0
    %v1863 = vsel %vm252, %v1858, 0
    %1865 = vmatprep.subr.bf16.mxu0 0
    %1866 = vmatpush1.bf16.xpose.msra.mxu0 %v1863
    %1867 = vmatprep.subr.bf16.mxu0 0
    %1868 = vmatpush1.bf16.xpose.msra.mxu0 0
    %1869 = vmatprep.subr.bf16.mxu0 0
    %1870 = vmatpush1.bf16.xpose.msra.mxu0 0
    %1871 = vmatprep.subr.bf16.mxu0 0
    %1872 = vmatpush1.bf16.xpose.msra.mxu0 0
    %1873 = vmatprep.subr.bf16.mxu0 0
    %1874 = vmatpush1.bf16.xpose.msra.mxu0 0
    %1875 = vmatprep.subr.bf16.mxu0 0
    %1876 = vmatpush1.bf16.xpose.msra.mxu0 0
    %1877 = vmatprep.subr.bf16.mxu0 0
    %1878 = vmatpush1.bf16.xpose.msra.mxu0 0
    %1879 = vmatprep.subr.bf16.mxu0 0
    %1880 = vmatpush1.bf16.xpose.msra.mxu0 0
    %1881 = vmatprep.subr.bf16.mxu0 0
    %1882 = vmatpush1.bf16.xpose.msra.mxu0 0
    %1883 = vmatprep.subr.bf16.mxu0 0
    %1884 = vmatpush1.bf16.xpose.msra.mxu0 0
    %1885 = vmatprep.subr.bf16.mxu0 0
    %1886 = vmatpush1.bf16.xpose.msra.mxu0 0
    %1887 = vmatprep.subr.bf16.mxu0 0
    %1888 = vmatpush1.bf16.xpose.msra.mxu0 0
    %1889 = vmatprep.subr.bf16.mxu0 0
    %1890 = vmatpush1.bf16.xpose.msra.mxu0 0
    %1891 = vmatprep.subr.bf16.mxu0 0
    %1892 = vmatpush1.bf16.xpose.msra.mxu0 0
    %1893 = vmatprep.subr.bf16.mxu0 0
    %1894 = vmatpush1.bf16.xpose.msra.mxu0 0
    %1895 = vmatprep.subr.bf16.mxu0 0
    %1896 = vmatpush1.bf16.xpose.msra.mxu0 0
    %1897 = vmatprep.mubr.bf16.mxu0 0
    %1898 = vmatmul.mubr.bf16.gmra.mrb[0].mxu0 %v1860
    %v1899 = vpop.f32.mrb[0].mxu0
    %v1900 = vadd.f32 0.0, %v1899
    %v1901 = vpop.f32.mrb[0].mxu0
    %v1902 = vpop.f32.mrb[0].mxu0
    %v1903 = vpop.f32.mrb[0].mxu0
    %1904 = vdwg.mxu0
    %v1905 = vsel %vm252, %v1900, -inf
    %1906 = vmax.xlane.f32.xlu0 %v1905
    %v1907 = vpop.xlane.xlu0 %1906
    %v1908 = vsub.f32 %v1900, %v1907
    %v1909 = vmul.f32 %v1908, 1.442695
    %v1910 = vpow.pop %v1909
    %v1911 = vsel %vm252, %v1910, 0.0
    %1912 = vadd.xlane.f32.xlu0 %v1911
    %v1913 = vpop.xlane.xlu0 %1912
    %v1914 = vrcp.pop %v1913
    %v1915 = vmul.f32 %v1910, %v1914
    %v1916 = vpack.c.bf16 %v1915, %v1915
    %1917 = vrot.lane.b32.xlu0 %v1525, 40
    %v1918 = vpop.permute.xlu0 %1917
    %v1920 = vsel %vm252, %v1916, 0
    %v1923 = vsel %vm316, %v1918, 0
    %1925 = vmatprep.subr.bf16.mxu0 0
    %1926 = vmatpush1.bf16.msra.mxu0 %v1923
    %1927 = vmatprep.subr.bf16.mxu0 0
    %1928 = vmatpush1.bf16.msra.mxu0 0
    %1929 = vmatprep.subr.bf16.mxu0 0
    %1930 = vmatpush1.bf16.msra.mxu0 0
    %1931 = vmatprep.subr.bf16.mxu0 0
    %1932 = vmatpush1.bf16.msra.mxu0 0
    %1933 = vmatprep.subr.bf16.mxu0 0
    %1934 = vmatpush1.bf16.msra.mxu0 0
    %1935 = vmatprep.subr.bf16.mxu0 0
    %1936 = vmatpush1.bf16.msra.mxu0 0
    %1937 = vmatprep.subr.bf16.mxu0 0
    %1938 = vmatpush1.bf16.msra.mxu0 0
    %1939 = vmatprep.subr.bf16.mxu0 0
    %1940 = vmatpush1.bf16.msra.mxu0 0
    %1941 = vmatprep.subr.bf16.mxu0 0
    %1942 = vmatpush1.bf16.msra.mxu0 0
    %1943 = vmatprep.subr.bf16.mxu0 0
    %1944 = vmatpush1.bf16.msra.mxu0 0
    %1945 = vmatprep.subr.bf16.mxu0 0
    %1946 = vmatpush1.bf16.msra.mxu0 0
    %1947 = vmatprep.subr.bf16.mxu0 0
    %1948 = vmatpush1.bf16.msra.mxu0 0
    %1949 = vmatprep.subr.bf16.mxu0 0
    %1950 = vmatpush1.bf16.msra.mxu0 0
    %1951 = vmatprep.subr.bf16.mxu0 0
    %1952 = vmatpush1.bf16.msra.mxu0 0
    %1953 = vmatprep.subr.bf16.mxu0 0
    %1954 = vmatpush1.bf16.msra.mxu0 0
    %1955 = vmatprep.subr.bf16.mxu0 0
    %1956 = vmatpush1.bf16.msra.mxu0 0
    %1957 = vmatprep.mubr.bf16.mxu0 0
    %1958 = vmatmul.mubr.bf16.gmra.mrb[0].mxu0 %v1920
    %v1959 = vpop.f32.mrb[0].mxu0
    %v1960 = vadd.f32 0.0, %v1959
    %v1961 = vpop.f32.mrb[0].mxu0
    %v1962 = vpop.f32.mrb[0].mxu0
    %v1963 = vpop.f32.mrb[0].mxu0
    %1964 = vdwg.mxu0
    %1966 = vrot.lane.b32.xlu0 %v1740, 8
    %v1967 = vpop.permute.xlu0 %1966
    %1970 = vrot.lane.b32.xlu0 %v1850, 16
    %v1971 = vpop.permute.xlu0 %1970
    %1974 = vrot.lane.b32.xlu0 %v1960, 24
    %v1975 = vpop.permute.xlu0 %1974
    %v1977 = vsel %vm252, %v1630, %v1967
    %v1978 = vsel %vm703, %v1977, %v1971
    %v1979 = vsel %vm705, %v1978, %v1975
    %v1980 = vpack.c.bf16 %v1522, %v1522
    %1982 = vrot.lane.b32.xlu0 %v1980, 96
    %v1983 = vpop.permute.xlu0 %1982
    %v1985 = vsel %vm252, %v1980, 0
    %v1988 = vsel %vm252, %v1983, 0
    %1990 = vmatprep.subr.bf16.mxu0 0
    %1991 = vmatpush1.bf16.xpose.msra.mxu0 %v1988
    %1992 = vmatprep.subr.bf16.mxu0 0
    %1993 = vmatpush1.bf16.xpose.msra.mxu0 0
    %1994 = vmatprep.subr.bf16.mxu0 0
    %1995 = vmatpush1.bf16.xpose.msra.mxu0 0
    %1996 = vmatprep.subr.bf16.mxu0 0
    %1997 = vmatpush1.bf16.xpose.msra.mxu0 0
    %1998 = vmatprep.subr.bf16.mxu0 0
    %1999 = vmatpush1.bf16.xpose.msra.mxu0 0
    %2000 = vmatprep.subr.bf16.mxu0 0
    %2001 = vmatpush1.bf16.xpose.msra.mxu0 0
    %2002 = vmatprep.subr.bf16.mxu0 0
    %2003 = vmatpush1.bf16.xpose.msra.mxu0 0
    %2004 = vmatprep.subr.bf16.mxu0 0
    %2005 = vmatpush1.bf16.xpose.msra.mxu0 0
    %2006 = vmatprep.subr.bf16.mxu0 0
    %2007 = vmatpush1.bf16.xpose.msra.mxu0 0
    %2008 = vmatprep.subr.bf16.mxu0 0
    %2009 = vmatpush1.bf16.xpose.msra.mxu0 0
    %2010 = vmatprep.subr.bf16.mxu0 0
    %2011 = vmatpush1.bf16.xpose.msra.mxu0 0
    %2012 = vmatprep.subr.bf16.mxu0 0
    %2013 = vmatpush1.bf16.xpose.msra.mxu0 0
    %2014 = vmatprep.subr.bf16.mxu0 0
    %2015 = vmatpush1.bf16.xpose.msra.mxu0 0
    %2016 = vmatprep.subr.bf16.mxu0 0
    %2017 = vmatpush1.bf16.xpose.msra.mxu0 0
    %2018 = vmatprep.subr.bf16.mxu0 0
    %2019 = vmatpush1.bf16.xpose.msra.mxu0 0
    %2020 = vmatprep.subr.bf16.mxu0 0
    %2021 = vmatpush1.bf16.xpose.msra.mxu0 0
    %2022 = vmatprep.mubr.bf16.mxu0 0
    %2023 = vmatmul.mubr.bf16.gmra.mrb[0].mxu0 %v1985
    %v2024 = vpop.f32.mrb[0].mxu0
    %v2025 = vadd.f32 0.0, %v2024
    %v2026 = vpop.f32.mrb[0].mxu0
    %v2027 = vpop.f32.mrb[0].mxu0
    %v2028 = vpop.f32.mrb[0].mxu0
    %2029 = vdwg.mxu0
    %v2030 = vsel %vm252, %v2025, -inf
    %2031 = vmax.xlane.f32.xlu0 %v2030
    %v2032 = vpop.xlane.xlu0 %2031
    %v2033 = vsub.f32 %v2025, %v2032
    %v2034 = vmul.f32 %v2033, 1.442695
    %v2035 = vpow.pop %v2034
    %v2036 = vsel %vm252, %v2035, 0.0
    %2037 = vadd.xlane.f32.xlu0 %v2036
    %v2038 = vpop.xlane.xlu0 %2037
    %v2039 = vrcp.pop %v2038
    %v2040 = vmul.f32 %v2035, %v2039
    %v2041 = vpack.c.bf16 %v2040, %v2040
    %2042 = vrot.lane.b32.xlu0 %v1980, 64
    %v2043 = vpop.permute.xlu0 %2042
    %v2045 = vsel %vm252, %v2041, 0
    %v2048 = vsel %vm316, %v2043, 0
    %2050 = vmatprep.subr.bf16.mxu0 0
    %2051 = vmatpush1.bf16.msra.mxu0 %v2048
    %2052 = vmatprep.subr.bf16.mxu0 0
    %2053 = vmatpush1.bf16.msra.mxu0 0
    %2054 = vmatprep.subr.bf16.mxu0 0
    %2055 = vmatpush1.bf16.msra.mxu0 0
    %2056 = vmatprep.subr.bf16.mxu0 0
    %2057 = vmatpush1.bf16.msra.mxu0 0
    %2058 = vmatprep.subr.bf16.mxu0 0
    %2059 = vmatpush1.bf16.msra.mxu0 0
    %2060 = vmatprep.subr.bf16.mxu0 0
    %2061 = vmatpush1.bf16.msra.mxu0 0
    %2062 = vmatprep.subr.bf16.mxu0 0
    %2063 = vmatpush1.bf16.msra.mxu0 0
    %2064 = vmatprep.subr.bf16.mxu0 0
    %2065 = vmatpush1.bf16.msra.mxu0 0
    %2066 = vmatprep.subr.bf16.mxu0 0
    %2067 = vmatpush1.bf16.msra.mxu0 0
    %2068 = vmatprep.subr.bf16.mxu0 0
    %2069 = vmatpush1.bf16.msra.mxu0 0
    %2070 = vmatprep.subr.bf16.mxu0 0
    %2071 = vmatpush1.bf16.msra.mxu0 0
    %2072 = vmatprep.subr.bf16.mxu0 0
    %2073 = vmatpush1.bf16.msra.mxu0 0
    %2074 = vmatprep.subr.bf16.mxu0 0
    %2075 = vmatpush1.bf16.msra.mxu0 0
    %2076 = vmatprep.subr.bf16.mxu0 0
    %2077 = vmatpush1.bf16.msra.mxu0 0
    %2078 = vmatprep.subr.bf16.mxu0 0
    %2079 = vmatpush1.bf16.msra.mxu0 0
    %2080 = vmatprep.subr.bf16.mxu0 0
    %2081 = vmatpush1.bf16.msra.mxu0 0
    %2082 = vmatprep.mubr.bf16.mxu0 0
    %2083 = vmatmul.mubr.bf16.gmra.mrb[0].mxu0 %v2045
    %v2084 = vpop.f32.mrb[0].mxu0
    %v2085 = vadd.f32 0.0, %v2084
    %v2086 = vpop.f32.mrb[0].mxu0
    %v2087 = vpop.f32.mrb[0].mxu0
    %v2088 = vpop.f32.mrb[0].mxu0
    %2089 = vdwg.mxu0
    %2090 = vrot.lane.b32.xlu0 %v1980, 120
    %v2091 = vpop.permute.xlu0 %2090
    %2092 = vrot.lane.b32.xlu0 %v1980, 88
    %v2093 = vpop.permute.xlu0 %2092
    %v2095 = vsel %vm252, %v2091, 0
    %v2098 = vsel %vm252, %v2093, 0
    %2100 = vmatprep.subr.bf16.mxu0 0
    %2101 = vmatpush1.bf16.xpose.msra.mxu0 %v2098
    %2102 = vmatprep.subr.bf16.mxu0 0
    %2103 = vmatpush1.bf16.xpose.msra.mxu0 0
    %2104 = vmatprep.subr.bf16.mxu0 0
    %2105 = vmatpush1.bf16.xpose.msra.mxu0 0
    %2106 = vmatprep.subr.bf16.mxu0 0
    %2107 = vmatpush1.bf16.xpose.msra.mxu0 0
    %2108 = vmatprep.subr.bf16.mxu0 0
    %2109 = vmatpush1.bf16.xpose.msra.mxu0 0
    %2110 = vmatprep.subr.bf16.mxu0 0
    %2111 = vmatpush1.bf16.xpose.msra.mxu0 0
    %2112 = vmatprep.subr.bf16.mxu0 0
    %2113 = vmatpush1.bf16.xpose.msra.mxu0 0
    %2114 = vmatprep.subr.bf16.mxu0 0
    %2115 = vmatpush1.bf16.xpose.msra.mxu0 0
    %2116 = vmatprep.subr.bf16.mxu0 0
    %2117 = vmatpush1.bf16.xpose.msra.mxu0 0
    %2118 = vmatprep.subr.bf16.mxu0 0
    %2119 = vmatpush1.bf16.xpose.msra.mxu0 0
    %2120 = vmatprep.subr.bf16.mxu0 0
    %2121 = vmatpush1.bf16.xpose.msra.mxu0 0
    %2122 = vmatprep.subr.bf16.mxu0 0
    %2123 = vmatpush1.bf16.xpose.msra.mxu0 0
    %2124 = vmatprep.subr.bf16.mxu0 0
    %2125 = vmatpush1.bf16.xpose.msra.mxu0 0
    %2126 = vmatprep.subr.bf16.mxu0 0
    %2127 = vmatpush1.bf16.xpose.msra.mxu0 0
    %2128 = vmatprep.subr.bf16.mxu0 0
    %2129 = vmatpush1.bf16.xpose.msra.mxu0 0
    %2130 = vmatprep.subr.bf16.mxu0 0
    %2131 = vmatpush1.bf16.xpose.msra.mxu0 0
    %2132 = vmatprep.mubr.bf16.mxu0 0
    %2133 = vmatmul.mubr.bf16.gmra.mrb[0].mxu0 %v2095
    %v2134 = vpop.f32.mrb[0].mxu0
    %v2135 = vadd.f32 0.0, %v2134
    %v2136 = vpop.f32.mrb[0].mxu0
    %v2137 = vpop.f32.mrb[0].mxu0
    %v2138 = vpop.f32.mrb[0].mxu0
    %2139 = vdwg.mxu0
    %v2140 = vsel %vm252, %v2135, -inf
    %2141 = vmax.xlane.f32.xlu0 %v2140
    %v2142 = vpop.xlane.xlu0 %2141
    %v2143 = vsub.f32 %v2135, %v2142
    %v2144 = vmul.f32 %v2143, 1.442695
    %v2145 = vpow.pop %v2144
    %v2146 = vsel %vm252, %v2145, 0.0
    %2147 = vadd.xlane.f32.xlu0 %v2146
    %v2148 = vpop.xlane.xlu0 %2147
    %v2149 = vrcp.pop %v2148
    %v2150 = vmul.f32 %v2145, %v2149
    %v2151 = vpack.c.bf16 %v2150, %v2150
    %2152 = vrot.lane.b32.xlu0 %v1980, 56
    %v2153 = vpop.permute.xlu0 %2152
    %v2155 = vsel %vm252, %v2151, 0
    %v2158 = vsel %vm316, %v2153, 0
    %2160 = vmatprep.subr.bf16.mxu0 0
    %2161 = vmatpush1.bf16.msra.mxu0 %v2158
    %2162 = vmatprep.subr.bf16.mxu0 0
    %2163 = vmatpush1.bf16.msra.mxu0 0
    %2164 = vmatprep.subr.bf16.mxu0 0
    %2165 = vmatpush1.bf16.msra.mxu0 0
    %2166 = vmatprep.subr.bf16.mxu0 0
    %2167 = vmatpush1.bf16.msra.mxu0 0
    %2168 = vmatprep.subr.bf16.mxu0 0
    %2169 = vmatpush1.bf16.msra.mxu0 0
    %2170 = vmatprep.subr.bf16.mxu0 0
    %2171 = vmatpush1.bf16.msra.mxu0 0
    %2172 = vmatprep.subr.bf16.mxu0 0
    %2173 = vmatpush1.bf16.msra.mxu0 0
    %2174 = vmatprep.subr.bf16.mxu0 0
    %2175 = vmatpush1.bf16.msra.mxu0 0
    %2176 = vmatprep.subr.bf16.mxu0 0
    %2177 = vmatpush1.bf16.msra.mxu0 0
    %2178 = vmatprep.subr.bf16.mxu0 0
    %2179 = vmatpush1.bf16.msra.mxu0 0
    %2180 = vmatprep.subr.bf16.mxu0 0
    %2181 = vmatpush1.bf16.msra.mxu0 0
    %2182 = vmatprep.subr.bf16.mxu0 0
    %2183 = vmatpush1.bf16.msra.mxu0 0
    %2184 = vmatprep.subr.bf16.mxu0 0
    %2185 = vmatpush1.bf16.msra.mxu0 0
    %2186 = vmatprep.subr.bf16.mxu0 0
    %2187 = vmatpush1.bf16.msra.mxu0 0
    %2188 = vmatprep.subr.bf16.mxu0 0
    %2189 = vmatpush1.bf16.msra.mxu0 0
    %2190 = vmatprep.subr.bf16.mxu0 0
    %2191 = vmatpush1.bf16.msra.mxu0 0
    %2192 = vmatprep.mubr.bf16.mxu0 0
    %2193 = vmatmul.mubr.bf16.gmra.mrb[0].mxu0 %v2155
    %v2194 = vpop.f32.mrb[0].mxu0
    %v2195 = vadd.f32 0.0, %v2194
    %v2196 = vpop.f32.mrb[0].mxu0
    %v2197 = vpop.f32.mrb[0].mxu0
    %v2198 = vpop.f32.mrb[0].mxu0
    %2199 = vdwg.mxu0
    %2200 = vrot.lane.b32.xlu0 %v1980, 112
    %v2201 = vpop.permute.xlu0 %2200
    %2202 = vrot.lane.b32.xlu0 %v1980, 80
    %v2203 = vpop.permute.xlu0 %2202
    %v2205 = vsel %vm252, %v2201, 0
    %v2208 = vsel %vm252, %v2203, 0
    %2210 = vmatprep.subr.bf16.mxu0 0
    %2211 = vmatpush1.bf16.xpose.msra.mxu0 %v2208
    %2212 = vmatprep.subr.bf16.mxu0 0
    %2213 = vmatpush1.bf16.xpose.msra.mxu0 0
    %2214 = vmatprep.subr.bf16.mxu0 0
    %2215 = vmatpush1.bf16.xpose.msra.mxu0 0
    %2216 = vmatprep.subr.bf16.mxu0 0
    %2217 = vmatpush1.bf16.xpose.msra.mxu0 0
    %2218 = vmatprep.subr.bf16.mxu0 0
    %2219 = vmatpush1.bf16.xpose.msra.mxu0 0
    %2220 = vmatprep.subr.bf16.mxu0 0
    %2221 = vmatpush1.bf16.xpose.msra.mxu0 0
    %2222 = vmatprep.subr.bf16.mxu0 0
    %2223 = vmatpush1.bf16.xpose.msra.mxu0 0
    %2224 = vmatprep.subr.bf16.mxu0 0
    %2225 = vmatpush1.bf16.xpose.msra.mxu0 0
    %2226 = vmatprep.subr.bf16.mxu0 0
    %2227 = vmatpush1.bf16.xpose.msra.mxu0 0
    %2228 = vmatprep.subr.bf16.mxu0 0
    %2229 = vmatpush1.bf16.xpose.msra.mxu0 0
    %2230 = vmatprep.subr.bf16.mxu0 0
    %2231 = vmatpush1.bf16.xpose.msra.mxu0 0
    %2232 = vmatprep.subr.bf16.mxu0 0
    %2233 = vmatpush1.bf16.xpose.msra.mxu0 0
    %2234 = vmatprep.subr.bf16.mxu0 0
    %2235 = vmatpush1.bf16.xpose.msra.mxu0 0
    %2236 = vmatprep.subr.bf16.mxu0 0
    %2237 = vmatpush1.bf16.xpose.msra.mxu0 0
    %2238 = vmatprep.subr.bf16.mxu0 0
    %2239 = vmatpush1.bf16.xpose.msra.mxu0 0
    %2240 = vmatprep.subr.bf16.mxu0 0
    %2241 = vmatpush1.bf16.xpose.msra.mxu0 0
    %2242 = vmatprep.mubr.bf16.mxu0 0
    %2243 = vmatmul.mubr.bf16.gmra.mrb[0].mxu0 %v2205
    %v2244 = vpop.f32.mrb[0].mxu0
    %v2245 = vadd.f32 0.0, %v2244
    %v2246 = vpop.f32.mrb[0].mxu0
    %v2247 = vpop.f32.mrb[0].mxu0
    %v2248 = vpop.f32.mrb[0].mxu0
    %2249 = vdwg.mxu0
    %v2250 = vsel %vm252, %v2245, -inf
    %2251 = vmax.xlane.f32.xlu0 %v2250
    %v2252 = vpop.xlane.xlu0 %2251
    %v2253 = vsub.f32 %v2245, %v2252
    %v2254 = vmul.f32 %v2253, 1.442695
    %v2255 = vpow.pop %v2254
    %v2256 = vsel %vm252, %v2255, 0.0
    %2257 = vadd.xlane.f32.xlu0 %v2256
    %v2258 = vpop.xlane.xlu0 %2257
    %v2259 = vrcp.pop %v2258
    %v2260 = vmul.f32 %v2255, %v2259
    %v2261 = vpack.c.bf16 %v2260, %v2260
    %2262 = vrot.lane.b32.xlu0 %v1980, 48
    %v2263 = vpop.permute.xlu0 %2262
    %v2265 = vsel %vm252, %v2261, 0
    %v2268 = vsel %vm316, %v2263, 0
    %2270 = vmatprep.subr.bf16.mxu0 0
    %2271 = vmatpush1.bf16.msra.mxu0 %v2268
    %2272 = vmatprep.subr.bf16.mxu0 0
    %2273 = vmatpush1.bf16.msra.mxu0 0
    %2274 = vmatprep.subr.bf16.mxu0 0
    %2275 = vmatpush1.bf16.msra.mxu0 0
    %2276 = vmatprep.subr.bf16.mxu0 0
    %2277 = vmatpush1.bf16.msra.mxu0 0
    %2278 = vmatprep.subr.bf16.mxu0 0
    %2279 = vmatpush1.bf16.msra.mxu0 0
    %2280 = vmatprep.subr.bf16.mxu0 0
    %2281 = vmatpush1.bf16.msra.mxu0 0
    %2282 = vmatprep.subr.bf16.mxu0 0
    %2283 = vmatpush1.bf16.msra.mxu0 0
    %2284 = vmatprep.subr.bf16.mxu0 0
    %2285 = vmatpush1.bf16.msra.mxu0 0
    %2286 = vmatprep.subr.bf16.mxu0 0
    %2287 = vmatpush1.bf16.msra.mxu0 0
    %2288 = vmatprep.subr.bf16.mxu0 0
    %2289 = vmatpush1.bf16.msra.mxu0 0
    %2290 = vmatprep.subr.bf16.mxu0 0
    %2291 = vmatpush1.bf16.msra.mxu0 0
    %2292 = vmatprep.subr.bf16.mxu0 0
    %2293 = vmatpush1.bf16.msra.mxu0 0
    %2294 = vmatprep.subr.bf16.mxu0 0
    %2295 = vmatpush1.bf16.msra.mxu0 0
    %2296 = vmatprep.subr.bf16.mxu0 0
    %2297 = vmatpush1.bf16.msra.mxu0 0
    %2298 = vmatprep.subr.bf16.mxu0 0
    %2299 = vmatpush1.bf16.msra.mxu0 0
    %2300 = vmatprep.subr.bf16.mxu0 0
    %2301 = vmatpush1.bf16.msra.mxu0 0
    %2302 = vmatprep.mubr.bf16.mxu0 0
    %2303 = vmatmul.mubr.bf16.gmra.mrb[0].mxu0 %v2265
    %v2304 = vpop.f32.mrb[0].mxu0
    %v2305 = vadd.f32 0.0, %v2304
    %v2306 = vpop.f32.mrb[0].mxu0
    %v2307 = vpop.f32.mrb[0].mxu0
    %v2308 = vpop.f32.mrb[0].mxu0
    %2309 = vdwg.mxu0
    %2310 = vrot.lane.b32.xlu0 %v1980, 104
    %v2311 = vpop.permute.xlu0 %2310
    %2312 = vrot.lane.b32.xlu0 %v1980, 72
    %v2313 = vpop.permute.xlu0 %2312
    %v2315 = vsel %vm252, %v2311, 0
    %v2318 = vsel %vm252, %v2313, 0
    %2320 = vmatprep.subr.bf16.mxu0 0
    %2321 = vmatpush1.bf16.xpose.msra.mxu0 %v2318
    %2322 = vmatprep.subr.bf16.mxu0 0
    %2323 = vmatpush1.bf16.xpose.msra.mxu0 0
    %2324 = vmatprep.subr.bf16.mxu0 0
    %2325 = vmatpush1.bf16.xpose.msra.mxu0 0
    %2326 = vmatprep.subr.bf16.mxu0 0
    %2327 = vmatpush1.bf16.xpose.msra.mxu0 0
    %2328 = vmatprep.subr.bf16.mxu0 0
    %2329 = vmatpush1.bf16.xpose.msra.mxu0 0
    %2330 = vmatprep.subr.bf16.mxu0 0
    %2331 = vmatpush1.bf16.xpose.msra.mxu0 0
    %2332 = vmatprep.subr.bf16.mxu0 0
    %2333 = vmatpush1.bf16.xpose.msra.mxu0 0
    %2334 = vmatprep.subr.bf16.mxu0 0
    %2335 = vmatpush1.bf16.xpose.msra.mxu0 0
    %2336 = vmatprep.subr.bf16.mxu0 0
    %2337 = vmatpush1.bf16.xpose.msra.mxu0 0
    %2338 = vmatprep.subr.bf16.mxu0 0
    %2339 = vmatpush1.bf16.xpose.msra.mxu0 0
    %2340 = vmatprep.subr.bf16.mxu0 0
    %2341 = vmatpush1.bf16.xpose.msra.mxu0 0
    %2342 = vmatprep.subr.bf16.mxu0 0
    %2343 = vmatpush1.bf16.xpose.msra.mxu0 0
    %2344 = vmatprep.subr.bf16.mxu0 0
    %2345 = vmatpush1.bf16.xpose.msra.mxu0 0
    %2346 = vmatprep.subr.bf16.mxu0 0
    %2347 = vmatpush1.bf16.xpose.msra.mxu0 0
    %2348 = vmatprep.subr.bf16.mxu0 0
    %2349 = vmatpush1.bf16.xpose.msra.mxu0 0
    %2350 = vmatprep.subr.bf16.mxu0 0
    %2351 = vmatpush1.bf16.xpose.msra.mxu0 0
    %2352 = vmatprep.mubr.bf16.mxu0 0
    %2353 = vmatmul.mubr.bf16.gmra.mrb[0].mxu0 %v2315
    %v2354 = vpop.f32.mrb[0].mxu0
    %v2355 = vadd.f32 0.0, %v2354
    %v2356 = vpop.f32.mrb[0].mxu0
    %v2357 = vpop.f32.mrb[0].mxu0
    %v2358 = vpop.f32.mrb[0].mxu0
    %2359 = vdwg.mxu0
    %v2360 = vsel %vm252, %v2355, -inf
    %2361 = vmax.xlane.f32.xlu0 %v2360
    %v2362 = vpop.xlane.xlu0 %2361
    %v2363 = vsub.f32 %v2355, %v2362
    %v2364 = vmul.f32 %v2363, 1.442695
    %v2365 = vpow.pop %v2364
    %v2366 = vsel %vm252, %v2365, 0.0
    %2367 = vadd.xlane.f32.xlu0 %v2366
    %v2368 = vpop.xlane.xlu0 %2367
    %v2369 = vrcp.pop %v2368
    %v2370 = vmul.f32 %v2365, %v2369
    %v2371 = vpack.c.bf16 %v2370, %v2370
    %2372 = vrot.lane.b32.xlu0 %v1980, 40
    %v2373 = vpop.permute.xlu0 %2372
    %v2375 = vsel %vm252, %v2371, 0
    %v2378 = vsel %vm316, %v2373, 0
    %2380 = vmatprep.subr.bf16.mxu0 0
    %2381 = vmatpush1.bf16.msra.mxu0 %v2378
    %2382 = vmatprep.subr.bf16.mxu0 0
    %2383 = vmatpush1.bf16.msra.mxu0 0
    %2384 = vmatprep.subr.bf16.mxu0 0
    %2385 = vmatpush1.bf16.msra.mxu0 0
    %2386 = vmatprep.subr.bf16.mxu0 0
    %2387 = vmatpush1.bf16.msra.mxu0 0
    %2388 = vmatprep.subr.bf16.mxu0 0
    %2389 = vmatpush1.bf16.msra.mxu0 0
    %2390 = vmatprep.subr.bf16.mxu0 0
    %2391 = vmatpush1.bf16.msra.mxu0 0
    %2392 = vmatprep.subr.bf16.mxu0 0
    %2393 = vmatpush1.bf16.msra.mxu0 0
    %2394 = vmatprep.subr.bf16.mxu0 0
    %2395 = vmatpush1.bf16.msra.mxu0 0
    %2396 = vmatprep.subr.bf16.mxu0 0
    %2397 = vmatpush1.bf16.msra.mxu0 0
    %2398 = vmatprep.subr.bf16.mxu0 0
    %2399 = vmatpush1.bf16.msra.mxu0 0
    %2400 = vmatprep.subr.bf16.mxu0 0
    %2401 = vmatpush1.bf16.msra.mxu0 0
    %2402 = vmatprep.subr.bf16.mxu0 0
    %2403 = vmatpush1.bf16.msra.mxu0 0
    %2404 = vmatprep.subr.bf16.mxu0 0
    %2405 = vmatpush1.bf16.msra.mxu0 0
    %2406 = vmatprep.subr.bf16.mxu0 0
    %2407 = vmatpush1.bf16.msra.mxu0 0
    %2408 = vmatprep.subr.bf16.mxu0 0
    %2409 = vmatpush1.bf16.msra.mxu0 0
    %2410 = vmatprep.subr.bf16.mxu0 0
    %2411 = vmatpush1.bf16.msra.mxu0 0
    %2412 = vmatprep.mubr.bf16.mxu0 0
    %2413 = vmatmul.mubr.bf16.gmra.mrb[0].mxu0 %v2375
    %v2414 = vpop.f32.mrb[0].mxu0
    %v2415 = vadd.f32 0.0, %v2414
    %v2416 = vpop.f32.mrb[0].mxu0
    %v2417 = vpop.f32.mrb[0].mxu0
    %v2418 = vpop.f32.mrb[0].mxu0
    %2419 = vdwg.mxu0
    %2421 = vrot.lane.b32.xlu0 %v2195, 8
    %v2422 = vpop.permute.xlu0 %2421
    %2425 = vrot.lane.b32.xlu0 %v2305, 16
    %v2426 = vpop.permute.xlu0 %2425
    %2429 = vrot.lane.b32.xlu0 %v2415, 24
    %v2430 = vpop.permute.xlu0 %2429
    %v2432 = vsel %vm252, %v2085, %v2422
    %v2433 = vsel %vm703, %v2432, %v2426
    %v2434 = vsel %vm705, %v2433, %v2430
    %v2435 = vpack.c.bf16 %v2434, %v1979
    %v2440 = vunpack.c.l.b16 %v1414
    %v2441 = vunpack.c.l.b16 %v1415
    %v2442 = vunpack.c.l.b16 %v1416
    %v2443 = vunpack.c.l.b16 %v1417
    %v2444 = vpack.c.b16 %v2441, %v2440
    %v2445 = vpack.c.b16 %v2443, %v2442
    %v2449 = vsel %vm167, %v2435, 0
    %2451 = vmatprep.subr.bf16.mxu0 0
    %2452 = vmatpush1.bf16.msra.mxu0 %v2444
    %2453 = vmatprep.subr.bf16.mxu0 0
    %2454 = vmatpush1.bf16.msra.mxu0 %v2445
    %2455 = vmatprep.subr.bf16.mxu0 0
    %2456 = vmatpush1.bf16.msra.mxu0 0
    %2457 = vmatprep.subr.bf16.mxu0 0
    %2458 = vmatpush1.bf16.msra.mxu0 0
    %2459 = vmatprep.subr.bf16.mxu0 0
    %2460 = vmatpush1.bf16.msra.mxu0 0
    %2461 = vmatprep.subr.bf16.mxu0 0
    %2462 = vmatpush1.bf16.msra.mxu0 0
    %2463 = vmatprep.subr.bf16.mxu0 0
    %2464 = vmatpush1.bf16.msra.mxu0 0
    %2465 = vmatprep.subr.bf16.mxu0 0
    %2466 = vmatpush1.bf16.msra.mxu0 0
    %2467 = vmatprep.subr.bf16.mxu0 0
    %2468 = vmatpush1.bf16.msra.mxu0 0
    %2469 = vmatprep.subr.bf16.mxu0 0
    %2470 = vmatpush1.bf16.msra.mxu0 0
    %2471 = vmatprep.subr.bf16.mxu0 0
    %2472 = vmatpush1.bf16.msra.mxu0 0
    %2473 = vmatprep.subr.bf16.mxu0 0
    %2474 = vmatpush1.bf16.msra.mxu0 0
    %2475 = vmatprep.subr.bf16.mxu0 0
    %2476 = vmatpush1.bf16.msra.mxu0 0
    %2477 = vmatprep.subr.bf16.mxu0 0
    %2478 = vmatpush1.bf16.msra.mxu0 0
    %2479 = vmatprep.subr.bf16.mxu0 0
    %2480 = vmatpush1.bf16.msra.mxu0 0
    %2481 = vmatprep.subr.bf16.mxu0 0
    %2482 = vmatpush1.bf16.msra.mxu0 0
    %2483 = vmatprep.mubr.bf16.mxu0 0
    %2484 = vmatmul.mubr.bf16.gmra.mrb[0].mxu0 %v2449
    %v2485 = vpop.f32.mrb[0].mxu0
    %v2486 = vadd.f32 0.0, %v2485
    %v2487 = vpop.f32.mrb[0].mxu0
    %v2488 = vpop.f32.mrb[0].mxu0
    %v2489 = vadd.f32 0.0, %v2488
    %v2490 = vpop.f32.mrb[0].mxu0
    %2491 = vdwg.mxu0
    %v2492 = vadd.f32 %v1406, %v2486
    %v2493 = vadd.f32 %v1407, %v2489
    %v2494 = vmul.f32 %v2492, %v2492
    %v2495 = vmul.f32 %v2493, %v2493
    %v2496 = vsel %vm167, %v2494, 0.0
    %2497 = vadd.xlane.f32.xlu0 %v2496
    %v2498 = vpop.xlane.xlu0 %2497
    %v2499 = vsel %vm167, %v2495, 0.0
    %2500 = vadd.xlane.f32.xlu0 %v2499
    %v2501 = vpop.xlane.xlu0 %2500
    %v2502 = vmul.f32 %v2498, %v174
    %v2503 = vmul.f32 %v2501, %v174
    %v2504 = vadd.f32 %v2502, 1e-06
    %v2505 = vadd.f32 %v2503, 1e-06
    %v2506 = vrsqrt.pop %v2504
    %v2507 = vrsqrt.pop %v2505
    %v2508 = vmul.f32 %v2492, %v2506
    %v2509 = vmul.f32 %v2493, %v2507
    %v2511 = vlaneseq
    %v2512 = vshrl.u32 %v2511, 7
    %v2513 = vsub.s32 0, %v2512
    %v2514 = vrot.slane %v1443, %v2513
    %v2516 = vmul.f32 %v2508, %v2514
    %v2517 = vmul.f32 %v2509, %v2514
    %v2518 = vpack.c.bf16 %v2517, %v2516
    %v2523 = vunpack.c.l.b16 %v1419
    %v2524 = vunpack.c.l.b16 %v1420
    %v2525 = vunpack.c.l.b16 %v1421
    %v2526 = vunpack.c.l.b16 %v1422
    %v2527 = vpack.c.b16 %v2524, %v2523
    %v2528 = vpack.c.b16 %v2526, %v2525
    %v2532 = vsel %vm167, %v2518, 0
    %2534 = vmatprep.subr.bf16.mxu0 0
    %2535 = vmatpush1.bf16.msra.mxu0 %v2527
    %2536 = vmatprep.subr.bf16.mxu0 0
    %2537 = vmatpush1.bf16.msra.mxu0 %v2528
    %2538 = vmatprep.subr.bf16.mxu0 0
    %2539 = vmatpush1.bf16.msra.mxu0 0
    %2540 = vmatprep.subr.bf16.mxu0 0
    %2541 = vmatpush1.bf16.msra.mxu0 0
    %2542 = vmatprep.subr.bf16.mxu0 0
    %2543 = vmatpush1.bf16.msra.mxu0 0
    %2544 = vmatprep.subr.bf16.mxu0 0
    %2545 = vmatpush1.bf16.msra.mxu0 0
    %2546 = vmatprep.subr.bf16.mxu0 0
    %2547 = vmatpush1.bf16.msra.mxu0 0
    %2548 = vmatprep.subr.bf16.mxu0 0
    %2549 = vmatpush1.bf16.msra.mxu0 0
    %2550 = vmatprep.subr.bf16.mxu0 0
    %2551 = vmatpush1.bf16.msra.mxu0 0
    %2552 = vmatprep.subr.bf16.mxu0 0
    %2553 = vmatpush1.bf16.msra.mxu0 0
    %2554 = vmatprep.subr.bf16.mxu0 0
    %2555 = vmatpush1.bf16.msra.mxu0 0
    %2556 = vmatprep.subr.bf16.mxu0 0
    %2557 = vmatpush1.bf16.msra.mxu0 0
    %2558 = vmatprep.subr.bf16.mxu0 0
    %2559 = vmatpush1.bf16.msra.mxu0 0
    %2560 = vmatprep.subr.bf16.mxu0 0
    %2561 = vmatpush1.bf16.msra.mxu0 0
    %2562 = vmatprep.subr.bf16.mxu0 0
    %2563 = vmatpush1.bf16.msra.mxu0 0
    %2564 = vmatprep.subr.bf16.mxu0 0
    %2565 = vmatpush1.bf16.msra.mxu0 0
    %2566 = vmatprep.mubr.bf16.mxu0 0
    %2567 = vmatmul.mubr.bf16.gmra.mrb[0].mxu0 %v2532
    %v2568 = vpop.f32.mrb[0].mxu0
    %v2569 = vadd.f32 0.0, %v2568
    %v2570 = vpop.f32.mrb[0].mxu0
    %v2571 = vpop.f32.mrb[0].mxu0
    %v2572 = vadd.f32 0.0, %v2571
    %v2573 = vpop.f32.mrb[0].mxu0
    %2574 = vdwg.mxu0
    %v2575 = vxor.u32 %v2569, 2147483648
    %v2576 = vxor.u32 %v2572, 2147483648
    %v2577 = vmul.f32 %v2575, 1.442695
    %v2578 = vpow.pop %v2577
    %v2579 = vmul.f32 %v2576, 1.442695
    %v2580 = vpow.pop %v2579
    %v2581 = vadd.f32 %v2578, 1.0
    %v2582 = vadd.f32 %v2580, 1.0
    %v2583 = vrcp.pop %v2581
    %v2584 = vmul.f32 1.0, %v2583
    %v2585 = vrcp.pop %v2582
    %v2586 = vmul.f32 1.0, %v2585
    %v2587 = vmul.f32 %v2569, %v2584
    %v2588 = vmul.f32 %v2572, %v2586
    %v2589 = vpack.c.bf16 %v2588, %v2587
    %v2606 = vunpack.c.l.b16 %v1424
    %v2607 = vunpack.c.l.b16 %v1425
    %v2608 = vunpack.c.l.b16 %v1426
    %v2609 = vunpack.c.l.b16 %v1427
    %v2610 = vunpack.c.l.b16 %v1428
    %v2611 = vunpack.c.l.b16 %v1429
    %v2612 = vunpack.c.l.b16 %v1430
    %v2613 = vunpack.c.l.b16 %v1431
    %v2614 = vunpack.c.l.b16 %v1432
    %v2615 = vunpack.c.l.b16 %v1433
    %v2616 = vunpack.c.l.b16 %v1434
    %v2617 = vunpack.c.l.b16 %v1435
    %v2618 = vunpack.c.l.b16 %v1436
    %v2619 = vunpack.c.l.b16 %v1437
    %v2620 = vunpack.c.l.b16 %v1438
    %v2621 = vunpack.c.l.b16 %v1439
    %v2622 = vpack.c.b16 %v2607, %v2606
    %v2623 = vpack.c.b16 %v2609, %v2608
    %v2624 = vpack.c.b16 %v2611, %v2610
    %v2625 = vpack.c.b16 %v2613, %v2612
    %v2626 = vpack.c.b16 %v2615, %v2614
    %v2627 = vpack.c.b16 %v2617, %v2616
    %v2628 = vpack.c.b16 %v2619, %v2618
    %v2629 = vpack.c.b16 %v2621, %v2620
    %2638 = vmatprep.subr.bf16.mxu0 0
    %2639 = vmatpush1.bf16.msra.mxu0 %v2622
    %2640 = vmatprep.subr.bf16.mxu0 0
    %2641 = vmatpush1.bf16.msra.mxu0 %v2623
    %2642 = vmatprep.subr.bf16.mxu0 0
    %2643 = vmatpush1.bf16.msra.mxu0 %v2624
    %2644 = vmatprep.subr.bf16.mxu0 0
    %2645 = vmatpush1.bf16.msra.mxu0 %v2625
    %2646 = vmatprep.subr.bf16.mxu0 0
    %2647 = vmatpush1.bf16.msra.mxu0 %v2626
    %2648 = vmatprep.subr.bf16.mxu0 0
    %2649 = vmatpush1.bf16.msra.mxu0 %v2627
    %2650 = vmatprep.subr.bf16.mxu0 0
    %2651 = vmatpush1.bf16.msra.mxu0 %v2628
    %2652 = vmatprep.subr.bf16.mxu0 0
    %2653 = vmatpush1.bf16.msra.mxu0 %v2629
    %2654 = vmatprep.subr.bf16.mxu0 0
    %2655 = vmatpush1.bf16.msra.mxu0 0
    %2656 = vmatprep.subr.bf16.mxu0 0
    %2657 = vmatpush1.bf16.msra.mxu0 0
    %2658 = vmatprep.subr.bf16.mxu0 0
    %2659 = vmatpush1.bf16.msra.mxu0 0
    %2660 = vmatprep.subr.bf16.mxu0 0
    %2661 = vmatpush1.bf16.msra.mxu0 0
    %2662 = vmatprep.subr.bf16.mxu0 0
    %2663 = vmatpush1.bf16.msra.mxu0 0
    %2664 = vmatprep.subr.bf16.mxu0 0
    %2665 = vmatpush1.bf16.msra.mxu0 0
    %2666 = vmatprep.subr.bf16.mxu0 0
    %2667 = vmatpush1.bf16.msra.mxu0 0
    %2668 = vmatprep.subr.bf16.mxu0 0
    %2669 = vmatpush1.bf16.msra.mxu0 0
    %2670 = vmatprep.mubr.bf16.mxu0 0
    %2671 = vmatmul.mubr.bf16.gmra.mrb[0].mxu0 %v2589
    %v2672 = vpop.f32.mrb[0].mxu0
    %v2673 = vadd.f32 0.0, %v2672
    %v2674 = vpop.f32.mrb[0].mxu0
    %v2675 = vpop.f32.mrb[0].mxu0
    %v2676 = vadd.f32 0.0, %v2675
    %v2677 = vpop.f32.mrb[0].mxu0
    %2678 = vdwg.mxu0
    %v2679 = vadd.f32 %v2492, %v2673
    %v2680 = vadd.f32 %v2493, %v2676
    %v2681 = vld [vmem:[%s9] sm:$0x1]
    %v2682 = vmul.f32 %v2679, %v2679
    %v2683 = vmul.f32 %v2680, %v2680
    %v2684 = vsel %vm167, %v2682, 0.0
    %2685 = vadd.xlane.f32.xlu0 %v2684
    %v2686 = vpop.xlane.xlu0 %2685
    %v2687 = vsel %vm167, %v2683, 0.0
    %2688 = vadd.xlane.f32.xlu0 %v2687
    %v2689 = vpop.xlane.xlu0 %2688
    %v2690 = vmul.f32 %v2686, %v174
    %v2691 = vmul.f32 %v2689, %v174
    %v2692 = vadd.f32 %v2690, 1e-06
    %v2693 = vadd.f32 %v2691, 1e-06
    %v2694 = vrsqrt.pop %v2692
    %v2695 = vrsqrt.pop %v2693
    %v2696 = vmul.f32 %v2679, %v2694
    %v2697 = vmul.f32 %v2680, %v2695
    %v2699 = vlaneseq
    %v2700 = vshrl.u32 %v2699, 7
    %v2701 = vsub.s32 0, %v2700
    %v2702 = vrot.slane %v2681, %v2701
    %v2704 = vmul.f32 %v2696, %v2702
    %v2705 = vmul.f32 %v2697, %v2702
    %2706 = vst.msk [vmem:[#allocation2] sm:$0xff] %vm167, %v2704
    %2707 = vst.msk [vmem:[#allocation2 + $0x8] sm:$0xff] %vm167, %v2705
    %v2708 = vld [vmem:[%s10] sm:$0xf]
    %v2709 = vld [vmem:[%s10 + $0x4] sm:$0xf]
    %v2710 = vld [vmem:[%s10 + $0x8] sm:$0xf]
    %v2711 = vld [vmem:[%s10 + $0xc] sm:$0xf]
    %v2712 = vpack.c.bf16 %v2705, %v2704
    %v2717 = vunpack.c.l.b16 %v2708
    %v2718 = vunpack.c.l.b16 %v2709
    %v2719 = vunpack.c.l.b16 %v2710
    %v2720 = vunpack.c.l.b16 %v2711
    %v2721 = vpack.c.b16 %v2718, %v2717
    %v2722 = vpack.c.b16 %v2720, %v2719
    %v2726 = vsel %vm167, %v2712, 0
    %2728 = vmatprep.subr.bf16.mxu0 0
    %2729 = vmatpush1.bf16.msra.mxu0 %v2721
    %2730 = vmatprep.subr.bf16.mxu0 0
    %2731 = vmatpush1.bf16.msra.mxu0 %v2722
    %2732 = vmatprep.subr.bf16.mxu0 0
    %2733 = vmatpush1.bf16.msra.mxu0 0
    %2734 = vmatprep.subr.bf16.mxu0 0
    %2735 = vmatpush1.bf16.msra.mxu0 0
    %2736 = vmatprep.subr.bf16.mxu0 0
    %2737 = vmatpush1.bf16.msra.mxu0 0
    %2738 = vmatprep.subr.bf16.mxu0 0
    %2739 = vmatpush1.bf16.msra.mxu0 0
    %2740 = vmatprep.subr.bf16.mxu0 0
    %2741 = vmatpush1.bf16.msra.mxu0 0
    %2742 = vmatprep.subr.bf16.mxu0 0
    %2743 = vmatpush1.bf16.msra.mxu0 0
    %2744 = vmatprep.subr.bf16.mxu0 0
    %2745 = vmatpush1.bf16.msra.mxu0 0
    %2746 = vmatprep.subr.bf16.mxu0 0
    %2747 = vmatpush1.bf16.msra.mxu0 0
    %2748 = vmatprep.subr.bf16.mxu0 0
    %2749 = vmatpush1.bf16.msra.mxu0 0
    %2750 = vmatprep.subr.bf16.mxu0 0
    %2751 = vmatpush1.bf16.msra.mxu0 0
    %2752 = vmatprep.subr.bf16.mxu0 0
    %2753 = vmatpush1.bf16.msra.mxu0 0
    %2754 = vmatprep.subr.bf16.mxu0 0
    %2755 = vmatpush1.bf16.msra.mxu0 0
    %2756 = vmatprep.subr.bf16.mxu0 0
    %2757 = vmatpush1.bf16.msra.mxu0 0
    %2758 = vmatprep.subr.bf16.mxu0 0
    %2759 = vmatpush1.bf16.msra.mxu0 0
    %2760 = vmatprep.mubr.bf16.mxu0 0
    %2761 = vmatmul.mubr.bf16.gmra.mrb[0].mxu0 %v2726
    %v2762 = vpop.f32.mrb[0].mxu0
    %v2763 = vadd.f32 0.0, %v2762
    %v2764 = vpop.f32.mrb[0].mxu0
    %v2765 = vpop.f32.mrb[0].mxu0
    %v2766 = vadd.f32 0.0, %v2765
    %v2767 = vpop.f32.mrb[0].mxu0
    %2768 = vdwg.mxu0
    %v2769 = vsel %vm90, %v2763, -inf
    %2770 = vmax.xlane.f32.xlu0 %v2769
    %v2771 = vpop.xlane.xlu0 %2770
    %v2772 = vsel %vm90, %v2766, -inf
    %2773 = vmax.xlane.f32.xlu0 %v2772
    %v2774 = vpop.xlane.xlu0 %2773
    %vm2775 = vcmp.eq.f32.partialorder %v2763, %v2771
    %vm2776 = vcmp.eq.f32.partialorder %v2766, %v2774
    %v2777 = vsel %vm2775, %v43, 64
    %v2778 = vsel %vm2776, %v43, 64
    %v2779 = vsel %vm90, %v2777, 2147483647
    %v2780 = vand.u32 %v2779, 65535
    %v2781 = vshra.s32 %v2779, 16
    %v2782 = vcvt.s32.f32 %v2780
    %v2783 = vcvt.s32.f32 %v2781
    %2784 = vmin.xlane.f32.xlu0 %v2783
    %v2785 = vpop.xlane.xlu0 %2784
    %vm2786 = vcmp.eq.f32.partialorder %v2783, %v2785
    %v2787 = vsel %vm2786, %v2782, inf
    %2788 = vmin.xlane.f32.xlu0 %v2787
    %v2789 = vpop.xlane.xlu0 %2788
    %v2790 = vcvt.f32.s32 %v2789
    %v2791 = vcvt.f32.s32 %v2785
    %v2792 = vshll.u32 %v2791, 16
    %v2793 = vadd.s32 %v2792, %v2790
    %v2794 = vsel %vm90, %v2778, 2147483647
    %v2795 = vand.u32 %v2794, 65535
    %v2796 = vshra.s32 %v2794, 16
    %v2797 = vcvt.s32.f32 %v2795
    %v2798 = vcvt.s32.f32 %v2796
    %2799 = vmin.xlane.f32.xlu0 %v2798
    %v2800 = vpop.xlane.xlu0 %2799
    %vm2801 = vcmp.eq.f32.partialorder %v2798, %v2800
    %v2802 = vsel %vm2801, %v2797, inf
    %2803 = vmin.xlane.f32.xlu0 %v2802
    %v2804 = vpop.xlane.xlu0 %2803
    %v2805 = vcvt.f32.s32 %v2804
    %v2806 = vcvt.f32.s32 %v2800
    %v2807 = vshll.u32 %v2806, 16
    %v2808 = vadd.s32 %v2807, %v2805
    %vm2809 = vcmask 1048064
    %v2810 = vsel %vm2809, %v2763, -inf
    %2811 = vmax.xlane.f32.xlu0 %v2810
    %v2812 = vpop.xlane.xlu0 %2811
    %v2813 = vsel %vm2809, %v2766, -inf
    %2814 = vmax.xlane.f32.xlu0 %v2813
    %v2815 = vpop.xlane.xlu0 %2814
    %vm2816 = vcmp.eq.f32.partialorder %v2763, %v2812
    %vm2817 = vcmp.eq.f32.partialorder %v2766, %v2815
    %2818 = vrot.lane.b32.xlu0 %v43, 64
    %v2819 = vpop.permute.xlu0 %2818
    %v2820 = vsel %vm2816, %v2819, 64
    %v2821 = vsel %vm2817, %v2819, 64
    %v2822 = vsel %vm2809, %v2820, 2147483647
    %v2823 = vand.u32 %v2822, 65535
    %v2824 = vshra.s32 %v2822, 16
    %v2825 = vcvt.s32.f32 %v2823
    %v2826 = vcvt.s32.f32 %v2824
    %2827 = vmin.xlane.f32.xlu0 %v2826
    %v2828 = vpop.xlane.xlu0 %2827
    %vm2829 = vcmp.eq.f32.partialorder %v2826, %v2828
    %v2830 = vsel %vm2829, %v2825, inf
    %2831 = vmin.xlane.f32.xlu0 %v2830
    %v2832 = vpop.xlane.xlu0 %2831
    %v2833 = vcvt.f32.s32 %v2832
    %v2834 = vcvt.f32.s32 %v2828
    %v2835 = vshll.u32 %v2834, 16
    %v2836 = vadd.s32 %v2835, %v2833
    %v2837 = vsel %vm2809, %v2821, 2147483647
    %v2838 = vand.u32 %v2837, 65535
    %v2839 = vshra.s32 %v2837, 16
    %v2840 = vcvt.s32.f32 %v2838
    %v2841 = vcvt.s32.f32 %v2839
    %2842 = vmin.xlane.f32.xlu0 %v2841
    %v2843 = vpop.xlane.xlu0 %2842
    %vm2844 = vcmp.eq.f32.partialorder %v2841, %v2843
    %v2845 = vsel %vm2844, %v2840, inf
    %2846 = vmin.xlane.f32.xlu0 %v2845
    %v2847 = vpop.xlane.xlu0 %2846
    %v2848 = vcvt.f32.s32 %v2847
    %v2849 = vcvt.f32.s32 %v2843
    %v2850 = vshll.u32 %v2849, 16
    %v2851 = vadd.s32 %v2850, %v2848
    %vm2852 = vcmask 7168
    %v2853 = vsel %vm2852, %v2793, %v2836
    %v2854 = vsel %vm2852, %v2808, %v2851
    %vm2855 = vcmask 15360
    %2856 = vst.msk [vmem:[%s11] sm:$0xff] %vm2855, %v2853
    %2857 = vst.msk [vmem:[%s11 + $0x8] sm:$0xff] %vm2855, %v2854
    // Predicated region
    $region46: #{streaming_transformer_forward.1} parent=1 // pred_check
      _
    $region47: #{streaming_transformer_forward.1} parent=1 // pred_check_branch
      %2859 = sbr.rel (0) target = $region49
    $region48: #{streaming_transformer_forward.1} parent=1 // pred_region
      _
    $region49: #{streaming_transformer_forward.1} parent=1 // pred_fallthru
      _
    // Predicated region
    $region50: #{streaming_transformer_forward.1} parent=1 // pred_check
      _
    $region51: #{streaming_transformer_forward.1} parent=1 // pred_check_branch
      %2861 = sbr.rel (0) target = $region53
    $region52: #{streaming_transformer_forward.1} parent=1 // pred_region
      %s2863 = ssub.s32 256, 256
      %2864 = vsyncadd [#allocation3], %s2863
      %s2865 = sshll.u32 [#allocation2], 4
      %s2866 = int_to_ptr.vmem [resolvable:$true] %s2865
      %2871 = dma.vmem_to_hbm [thread:$0]  %s2866, 256, %s12, [#allocation3], 128, 128, 8
    $region53: #{streaming_transformer_forward.1} parent=1 // pred_fallthru
      _
    // Predicated region
    $region54: #{streaming_transformer_forward.1} parent=1 // pred_check
      _
    $region55: #{streaming_transformer_forward.1} parent=1 // pred_check_branch
      %2873 = sbr.rel (0) target = $region57
    $region56: #{streaming_transformer_forward.1} parent=1 // pred_region
      _
    $region57: #{streaming_transformer_forward.1} parent=1 // pred_fallthru
      _
    // Predicated region
    $region58: #{streaming_transformer_forward.1} parent=1 // pred_check
      _
    $region59: #{streaming_transformer_forward.1} parent=1 // pred_check_branch
      %2875 = sbr.rel (0) target = $region61
    $region60: #{streaming_transformer_forward.1} parent=1 // pred_region
      %2876 = dma.done [#allocation3], 256
    $region61: #{streaming_transformer_forward.1} parent=1 // pred_fallthru
      _
    %2877 = vsyncpa [#allocation3], 1

</llo_original>
